<compile_context>
chip_gen: v5e
topology: v5e:2x2
jax: 0.10.0
libtpu: 0.0.40
codegen_flags: <defaults>
</compile_context>

<pallas_src>
import numpy as np
import jax
import jax.numpy as jnp
from jax import lax
from jax.experimental import pallas as pl
from jax.experimental.pallas import tpu as pltpu


def _make_csam_kernel(C, T, H, W, K, RP, SLEN):
    """SLEN = flattened spatial length padded to a multiple of 128.
    RP = packed-row count = 2*K rounded up to a multiple of 8."""
    HW = H * W
    P = (K - 1) // 2
    inv_C = 1.0 / C

    def shifted(v, k):
        """r[..., p] = v[..., (p + k) % SLEN], k static (XLU lane rotation)."""
        k = k % SLEN
        if k == 0:
            return v
        # jnp.roll semantics: roll(v, s)[p] = v[(p - s) % SLEN]  =>  s = -k.
        return pltpu.roll(v, shift=(SLEN - k) % SLEN, axis=v.ndim - 1)

    def kernel(x_ref, mask_ref, w_ref, cb_ref, out_ref, pk_ref):
        # x_ref/out_ref : (1, C, SLEN) VMEM, lane-dense
        # mask_ref      : (3K, SLEN)  [rows 0..K-1: t, K..2K-1: h, 2K..3K-1: w]
        # w_ref         : (RP, K*K),  w_ref[2*kw + c, kt*K + kh] = w[c,kt,kh,kw]
        # cb_ref        : (1,) SMEM conv bias
        # pk_ref        : (RP, SLEN) VMEM scratch (packed w-shifted pooled maps)
        xv = x_ref[0]                                               # (C, SLEN)
        cmax = jnp.max(xv, axis=0, keepdims=True)                   # (1, SLEN)
        cmean = jnp.sum(xv, axis=0, keepdims=True) * inv_C          # (1, SLEN)
        maps2 = jnp.concatenate([cmax, cmean], axis=0)              # (2, SLEN)

        # Pack the 2K w-shifted + w-masked maps into sublanes of pk_ref.
        # Later rolls are multiples of W / H*W, so they preserve each position's
        # w / h coordinate; out-of-range taps are zeroed at the destination.
        # (0/1 float masks are fine for finite x; use jnp.where if +-inf/NaN
        #  inputs are possible.)
        for kw in range(K):
            mw = mask_ref[2 * K + kw:2 * K + kw + 1, :]             # (1, SLEN)
            pk_ref[pl.ds(2 * kw, 2), :] = mw * shifted(maps2, kw - P)
        if RP > 2 * K:   # zero the sublane padding rows (scratch is uninit)
            pk_ref[pl.ds(2 * K, RP - 2 * K), :] = jnp.zeros(
                (RP - 2 * K, SLEN), jnp.float32)

        # 343-tap "same" conv, hierarchically: w taps packed in sublanes, one
        # roll per (kt,kh) for h, one per kt for t.  Bias-first accumulation.
        acc = jnp.full((1, SLEN), cb_ref[0], dtype=jnp.float32)
        for kt in range(K):
            bt = jnp.zeros((1, SLEN), jnp.float32)
            for kh in range(K):
                r = kt * K + kh
                wcol = w_ref[:, r:r + 1]                            # (RP, 1)
                # (RP,SLEN) multiply (VALU) + cross-sublane sum (XLU)
                s1 = jnp.sum(wcol * pk_ref[...], axis=0, keepdims=True)
                mh = mask_ref[K + kh:K + kh + 1, :]
                bt = bt + mh * shifted(s1, (kh - P) * W)
            mt = mask_ref[kt:kt + 1, :]
            acc = acc + mt * shifted(bt, (kt - P) * HW)

        # Exact sigmoid on the EUP (approx=False for parity with PyTorch).
        gate = pl.reciprocal(1.0 + jnp.exp(-acc))                   # (1, SLEN)
        out_ref[0] = x_ref[0] * (1.0 + gate)                        # x*(1+sig(y))

    return kernel


def csam_spatial_module(x, conv_w, conv_b):
    """CSAMSpatialModule forward.  x: (B, C, T, H, W) f32.
    conv_w: (2, K, K, K) (= torch Conv3d(2, 1, K).weight[0]);  conv_b: (1,)."""
    B, C, T, H, W = x.shape
    K = conv_w.shape[-1]
    P = (K - 1) // 2
    S = T * H * W
    SLEN = ((S + 127) // 128) * 128       # lane-dense (no masked partial stores)
    RP = ((2 * K + 7) // 8) * 8           # packed rows, sublane-padded

    x3 = x.reshape(B, C, S)               # contiguous reshape, no data movement
    if SLEN != S:
        x3 = jnp.pad(x3, ((0, 0), (0, 0), (0, SLEN - S)))

    # Per-offset boundary masks reproducing "same" zero padding on the flattened
    # (t, h, w) axis; single (3K, SLEN) constant built at trace time.
    p = np.arange(SLEN)
    valid = p < S
    w_i, h_i, t_i = p % W, (p // W) % H, p // (H * W)
    off = (np.arange(K) - P)[:, None]
    mask_t = (t_i + off >= 0) & (t_i + off < T) & valid
    mask_h = (h_i + off >= 0) & (h_i + off < H) & valid
    mask_w = (w_i + off >= 0) & (w_i + off < W) & valid
    masks = np.concatenate([mask_t, mask_h, mask_w], 0).astype(np.float32)

    # Conv weights as one VMEM matrix: row = 2*kw + c, col = kt*K + kh.
    w_rows = jnp.transpose(conv_w.astype(jnp.float32), (3, 0, 1, 2))
    w_rows = w_rows.reshape(2 * K, K * K)
    if RP > 2 * K:
        w_rows = jnp.concatenate(
            [w_rows, jnp.zeros((RP - 2 * K, K * K), jnp.float32)], axis=0)

    out3 = pl.pallas_call(
        _make_csam_kernel(C, T, H, W, K, RP, SLEN),
        out_shape=jax.ShapeDtypeStruct((B, C, SLEN), jnp.float32),
        grid_spec=pltpu.PrefetchScalarGridSpec(
            num_scalar_prefetch=0,
            grid=(B,),
            in_specs=[
                pl.BlockSpec((1, C, SLEN), lambda b: (b, 0, 0)),     # x
                pl.BlockSpec((3 * K, SLEN), lambda b: (0, 0)),       # masks (const)
                pl.BlockSpec((RP, K * K), lambda b: (0, 0)),         # conv weights
                pl.BlockSpec(memory_space=pltpu.MemorySpace.SMEM),   # conv bias
            ],
            out_specs=pl.BlockSpec((1, C, SLEN), lambda b: (b, 0, 0)),
            scratch_shapes=[pltpu.VMEM((RP, SLEN), jnp.float32)],
        ),
        compiler_params=pltpu.CompilerParams(
            dimension_semantics=("parallel",),
            # <= physical VMEM on all of v5e/v6e/v7x; raise toward ~96-112 MiB
            # on v6e (128 MiB physical) before C tiling at production shapes.
            vmem_limit_bytes=64 * 1024 * 1024),
    )(x3, jnp.asarray(masks), w_rows, conv_b.astype(jnp.float32))

    if SLEN != S:
        out3 = out3[:, :, :S]
    return out3.reshape(B, C, T, H, W)


# ------------------------------ pure-JAX reference ------------------------------
def ref_forward(x, conv_w, conv_b):
    K = conv_w.shape[-1]
    P = (K - 1) // 2
    cmax = jnp.max(x, axis=1, keepdims=True)
    cmean = jnp.mean(x, axis=1, keepdims=True)
    xc = jnp.concatenate([cmax, cmean], axis=1)                    # (B,2,T,H,W)
    y = lax.conv_general_dilated(
        xc, conv_w.reshape(1, 2, K, K, K),
        window_strides=(1, 1, 1),
        padding=((P, P), (P, P), (P, P)),
        dimension_numbers=("NCDHW", "OIDHW", "NCDHW"),
        precision=lax.Precision.HIGHEST) + conv_b.reshape(1, 1, 1, 1, 1)
    y = jax.nn.sigmoid(y)
    return x + x * y


if __name__ == "__main__":
    B, C, T, H, W = 2, 16, 4, 8, 8
    K = 7

    key = jax.random.PRNGKey(0)
    k1, k2, k3 = jax.random.split(key, 3)
    bound = 1.0 / ((2 * K * K * K) ** 0.5)
    conv_w = jax.random.uniform(k1, (2, K, K, K), jnp.float32, -bound, bound)
    conv_b = jax.random.uniform(k2, (1,), jnp.float32, -bound, bound)
    x = jax.random.normal(k3, (B, C, T, H, W), jnp.float32)

    fwd = jax.jit(csam_spatial_module)
    out = jax.block_until_ready(fwd(x, conv_w, conv_b))

    ref = ref_forward(x, conv_w, conv_b)
    assert out.shape == x.shape, (out.shape, x.shape)
    if not bool(jnp.allclose(out, ref, atol=2e-3, rtol=2e-3)):
        max_err = float(jnp.max(jnp.abs(out - ref)))
        raise AssertionError(f"Pallas output mismatch vs reference, max abs err={max_err}")
    print("KERNEL_OK")
</pallas_src>

<mosaic_0001>
module attributes {stable_mosaic.version = 11 : i64} {
  func.func @kernel(%arg0: i32, %arg1: memref<1x16x256xf32, #tpu.memory_space<vmem>>, %arg2: memref<21x256xf32, #tpu.memory_space<vmem>>, %arg3: memref<16x49xf32, #tpu.memory_space<vmem>>, %arg4: memref<1xf32, #tpu.memory_space<smem>>, %arg5: memref<1x16x256xf32, #tpu.memory_space<vmem>>, %arg6: memref<16x256xf32, #tpu.memory_space<vmem>>) attributes {dimension_semantics = [#tpu.dimension_semantics<parallel>], iteration_bounds = array<i64: 2>, scalar_prefetch = 0 : i64, scratch_operands = 1 : i64, tpu.core_type = #tpu.core_type<tc>, window_params = [{transform_indices = @transform_0, window_bounds = array<i64: 1, 16, 256>}, {pipeline_mode = #tpu.pipeline_mode<synchronous>, transform_indices = @transform_1, window_bounds = array<i64: 21, 256>}, {pipeline_mode = #tpu.pipeline_mode<synchronous>, transform_indices = @transform_2, window_bounds = array<i64: 16, 49>}, {transform_indices = @transform_3, window_bounds = array<i64: 1>}, {transform_indices = @transform_4, window_bounds = array<i64: 1, 16, 256>}]} {
    %c0 = arith.constant 0 : index
    %c0_0 = arith.constant 0 : index
    %c0_1 = arith.constant 0 : index
    %0 = vector.load %arg1[%c0, %c0_0, %c0_1] : memref<1x16x256xf32, #tpu.memory_space<vmem>>, vector<1x16x256xf32>
    %1 = vector.shape_cast %0 : vector<1x16x256xf32> to vector<16x256xf32>
    %cst = arith.constant dense<0xFF800000> : vector<256xf32>
    %2 = vector.multi_reduction <maximumf>, %1, %cst [0] : vector<16x256xf32> to vector<256xf32>
    %3 = vector.shape_cast %2 : vector<256xf32> to vector<1x256xf32>
    %cst_2 = arith.constant dense<0.000000e+00> : vector<256xf32>
    %4 = vector.multi_reduction <add>, %1, %cst_2 [0] : vector<16x256xf32> to vector<256xf32>
    %5 = vector.shape_cast %4 : vector<256xf32> to vector<1x256xf32>
    %cst_3 = arith.constant 6.250000e-02 : f32
    %6 = vector.broadcast %cst_3 : f32 to vector<1x256xf32>
    %7 = arith.mulf %5, %6 : vector<1x256xf32>
    %8 = tpu.concatenate %3, %7 in 0 : vector<1x256xf32>, vector<1x256xf32> -> vector<2x256xf32>
    %c14 = arith.constant 14 : index
    %c0_4 = arith.constant 0 : index
    %9 = vector.load %arg2[%c14, %c0_4] : memref<21x256xf32, #tpu.memory_space<vmem>>, vector<1x256xf32>
    %c3_i32 = arith.constant 3 : i32
    %10 = tpu.dynamic_rotate %8 by %c3_i32 dim 1 : vector<2x256xf32>, i32 -> vector<2x256xf32>
    %11 = vector.broadcast %9 : vector<1x256xf32> to vector<2x256xf32>
    %12 = arith.mulf %11, %10 : vector<2x256xf32>
    %c0_5 = arith.constant 0 : index
    %c0_6 = arith.constant 0 : index
    %13 = vector.load %arg6[%c0_5, %c0_6] : memref<16x256xf32, #tpu.memory_space<vmem>>, vector<2x256xf32>
    tpu.vector_store %arg6[%c0_5, %c0_6], %12 {strides = array<i32>} : memref<16x256xf32, #tpu.memory_space<vmem>>, vector<2x256xf32>,
    %c15 = arith.constant 15 : index
    %c0_7 = arith.constant 0 : index
    %14 = vector.load %arg2[%c15, %c0_7] : memref<21x256xf32, #tpu.memory_space<vmem>>, vector<1x256xf32>
    %c2_i32 = arith.constant 2 : i32
    %15 = tpu.dynamic_rotate %8 by %c2_i32 dim 1 : vector<2x256xf32>, i32 -> vector<2x256xf32>
    %16 = vector.broadcast %14 : vector<1x256xf32> to vector<2x256xf32>
    %17 = arith.mulf %16, %15 : vector<2x256xf32>
    %c2 = arith.constant 2 : index
    %c0_8 = arith.constant 0 : index
    %18 = vector.load %arg6[%c2, %c0_8] : memref<16x256xf32, #tpu.memory_space<vmem>>, vector<2x256xf32>
    tpu.vector_store %arg6[%c2, %c0_8], %17 {strides = array<i32>} : memref<16x256xf32, #tpu.memory_space<vmem>>, vector<2x256xf32>,
    %c16 = arith.constant 16 : index
    %c0_9 = arith.constant 0 : index
    %19 = vector.load %arg2[%c16, %c0_9] : memref<21x256xf32, #tpu.memory_space<vmem>>, vector<1x256xf32>
    %c1_i32 = arith.constant 1 : i32
    %20 = tpu.dynamic_rotate %8 by %c1_i32 dim 1 : vector<2x256xf32>, i32 -> vector<2x256xf32>
    %21 = vector.broadcast %19 : vector<1x256xf32> to vector<2x256xf32>
    %22 = arith.mulf %21, %20 : vector<2x256xf32>
    %c4 = arith.constant 4 : index
    %c0_10 = arith.constant 0 : index
    %23 = vector.load %arg6[%c4, %c0_10] : memref<16x256xf32, #tpu.memory_space<vmem>>, vector<2x256xf32>
    tpu.vector_store %arg6[%c4, %c0_10], %22 {strides = array<i32>} : memref<16x256xf32, #tpu.memory_space<vmem>>, vector<2x256xf32>,
    %c17 = arith.constant 17 : index
    %c0_11 = arith.constant 0 : index
    %24 = vector.load %arg2[%c17, %c0_11] : memref<21x256xf32, #tpu.memory_space<vmem>>, vector<1x256xf32>
    %25 = vector.broadcast %24 : vector<1x256xf32> to vector<2x256xf32>
    %26 = arith.mulf %25, %8 : vector<2x256xf32>
    %c6 = arith.constant 6 : index
    %c0_12 = arith.constant 0 : index
    %27 = vector.load %arg6[%c6, %c0_12] : memref<16x256xf32, #tpu.memory_space<vmem>>, vector<2x256xf32>
    tpu.vector_store %arg6[%c6, %c0_12], %26 {strides = array<i32>} : memref<16x256xf32, #tpu.memory_space<vmem>>, vector<2x256xf32>,
    %c18 = arith.constant 18 : index
    %c0_13 = arith.constant 0 : index
    %28 = vector.load %arg2[%c18, %c0_13] : memref<21x256xf32, #tpu.memory_space<vmem>>, vector<1x256xf32>
    %c255_i32 = arith.constant 255 : i32
    %29 = tpu.dynamic_rotate %8 by %c255_i32 dim 1 : vector<2x256xf32>, i32 -> vector<2x256xf32>
    %30 = vector.broadcast %28 : vector<1x256xf32> to vector<2x256xf32>
    %31 = arith.mulf %30, %29 : vector<2x256xf32>
    %c8 = arith.constant 8 : index
    %c0_14 = arith.constant 0 : index
    %32 = vector.load %arg6[%c8, %c0_14] : memref<16x256xf32, #tpu.memory_space<vmem>>, vector<2x256xf32>
    tpu.vector_store %arg6[%c8, %c0_14], %31 {strides = array<i32>} : memref<16x256xf32, #tpu.memory_space<vmem>>, vector<2x256xf32>,
    %c19 = arith.constant 19 : index
    %c0_15 = arith.constant 0 : index
    %33 = vector.load %arg2[%c19, %c0_15] : memref<21x256xf32, #tpu.memory_space<vmem>>, vector<1x256xf32>
    %c254_i32 = arith.constant 254 : i32
    %34 = tpu.dynamic_rotate %8 by %c254_i32 dim 1 : vector<2x256xf32>, i32 -> vector<2x256xf32>
    %35 = vector.broadcast %33 : vector<1x256xf32> to vector<2x256xf32>
    %36 = arith.mulf %35, %34 : vector<2x256xf32>
    %c10 = arith.constant 10 : index
    %c0_16 = arith.constant 0 : index
    %37 = vector.load %arg6[%c10, %c0_16] : memref<16x256xf32, #tpu.memory_space<vmem>>, vector<2x256xf32>
    tpu.vector_store %arg6[%c10, %c0_16], %36 {strides = array<i32>} : memref<16x256xf32, #tpu.memory_space<vmem>>, vector<2x256xf32>,
    %c20 = arith.constant 20 : index
    %c0_17 = arith.constant 0 : index
    %38 = vector.load %arg2[%c20, %c0_17] : memref<21x256xf32, #tpu.memory_space<vmem>>, vector<1x256xf32>
    %c253_i32 = arith.constant 253 : i32
    %39 = tpu.dynamic_rotate %8 by %c253_i32 dim 1 : vector<2x256xf32>, i32 -> vector<2x256xf32>
    %40 = vector.broadcast %38 : vector<1x256xf32> to vector<2x256xf32>
    %41 = arith.mulf %40, %39 : vector<2x256xf32>
    %c12 = arith.constant 12 : index
    %c0_18 = arith.constant 0 : index
    %42 = vector.load %arg6[%c12, %c0_18] : memref<16x256xf32, #tpu.memory_space<vmem>>, vector<2x256xf32>
    tpu.vector_store %arg6[%c12, %c0_18], %41 {strides = array<i32>} : memref<16x256xf32, #tpu.memory_space<vmem>>, vector<2x256xf32>,
    %cst_19 = arith.constant 0.000000e+00 : f32
    %43 = vector.broadcast %cst_19 : f32 to vector<2x256xf32>
    %c14_20 = arith.constant 14 : index
    %c0_21 = arith.constant 0 : index
    %44 = vector.load %arg6[%c14_20, %c0_21] : memref<16x256xf32, #tpu.memory_space<vmem>>, vector<2x256xf32>
    tpu.vector_store %arg6[%c14_20, %c0_21], %43 {strides = array<i32>} : memref<16x256xf32, #tpu.memory_space<vmem>>, vector<2x256xf32>,
    %c0_22 = arith.constant 0 : index
    %45 = memref.load %arg4[%c0_22] : memref<1xf32, #tpu.memory_space<smem>>
    %46 = vector.broadcast %45 : f32 to vector<1x256xf32>
    %cst_23 = arith.constant 0.000000e+00 : f32
    %47 = vector.broadcast %cst_23 : f32 to vector<1x256xf32>
    %c0_24 = arith.constant 0 : index
    %c0_25 = arith.constant 0 : index
    %48 = vector.load %arg3[%c0_24, %c0_25] : memref<16x49xf32, #tpu.memory_space<vmem>>, vector<16x1xf32>
    %c0_26 = arith.constant 0 : index
    %c0_27 = arith.constant 0 : index
    %49 = vector.load %arg6[%c0_26, %c0_27] : memref<16x256xf32, #tpu.memory_space<vmem>>, vector<16x256xf32>
    %50 = vector.broadcast %48 : vector<16x1xf32> to vector<16x256xf32>
    %51 = arith.mulf %50, %49 : vector<16x256xf32>
    %cst_28 = arith.constant dense<0.000000e+00> : vector<256xf32>
    %52 = vector.multi_reduction <add>, %51, %cst_28 [0] : vector<16x256xf32> to vector<256xf32>
    %53 = vector.shape_cast %52 : vector<256xf32> to vector<1x256xf32>
    %c7 = arith.constant 7 : index
    %c0_29 = arith.constant 0 : index
    %54 = vector.load %arg2[%c7, %c0_29] : memref<21x256xf32, #tpu.memory_space<vmem>>, vector<1x256xf32>
    %c24_i32 = arith.constant 24 : i32
    %55 = tpu.dynamic_rotate %53 by %c24_i32 dim 1 : vector<1x256xf32>, i32 -> vector<1x256xf32>
    %56 = arith.mulf %54, %55 : vector<1x256xf32>
    %57 = arith.addf %47, %56 : vector<1x256xf32>
    %c0_30 = arith.constant 0 : index
    %c1 = arith.constant 1 : index
    %58 = vector.load %arg3[%c0_30, %c1] : memref<16x49xf32, #tpu.memory_space<vmem>>, vector<16x1xf32>
    %c0_31 = arith.constant 0 : index
    %c0_32 = arith.constant 0 : index
    %59 = vector.load %arg6[%c0_31, %c0_32] : memref<16x256xf32, #tpu.memory_space<vmem>>, vector<16x256xf32>
    %60 = vector.broadcast %58 : vector<16x1xf32> to vector<16x256xf32>
    %61 = arith.mulf %60, %59 : vector<16x256xf32>
    %cst_33 = arith.constant dense<0.000000e+00> : vector<256xf32>
    %62 = vector.multi_reduction <add>, %61, %cst_33 [0] : vector<16x256xf32> to vector<256xf32>
    %63 = vector.shape_cast %62 : vector<256xf32> to vector<1x256xf32>
    %c8_34 = arith.constant 8 : index
    %c0_35 = arith.constant 0 : index
    %64 = vector.load %arg2[%c8_34, %c0_35] : memref<21x256xf32, #tpu.memory_space<vmem>>, vector<1x256xf32>
    %c16_i32 = arith.constant 16 : i32
    %65 = tpu.dynamic_rotate %63 by %c16_i32 dim 1 : vector<1x256xf32>, i32 -> vector<1x256xf32>
    %66 = arith.mulf %64, %65 : vector<1x256xf32>
    %67 = arith.addf %57, %66 : vector<1x256xf32>
    %c0_36 = arith.constant 0 : index
    %c2_37 = arith.constant 2 : index
    %68 = vector.load %arg3[%c0_36, %c2_37] : memref<16x49xf32, #tpu.memory_space<vmem>>, vector<16x1xf32>
    %c0_38 = arith.constant 0 : index
    %c0_39 = arith.constant 0 : index
    %69 = vector.load %arg6[%c0_38, %c0_39] : memref<16x256xf32, #tpu.memory_space<vmem>>, vector<16x256xf32>
    %70 = vector.broadcast %68 : vector<16x1xf32> to vector<16x256xf32>
    %71 = arith.mulf %70, %69 : vector<16x256xf32>
    %cst_40 = arith.constant dense<0.000000e+00> : vector<256xf32>
    %72 = vector.multi_reduction <add>, %71, %cst_40 [0] : vector<16x256xf32> to vector<256xf32>
    %73 = vector.shape_cast %72 : vector<256xf32> to vector<1x256xf32>
    %c9 = arith.constant 9 : index
    %c0_41 = arith.constant 0 : index
    %74 = vector.load %arg2[%c9, %c0_41] : memref<21x256xf32, #tpu.memory_space<vmem>>, vector<1x256xf32>
    %c8_i32 = arith.constant 8 : i32
    %75 = tpu.dynamic_rotate %73 by %c8_i32 dim 1 : vector<1x256xf32>, i32 -> vector<1x256xf32>
    %76 = arith.mulf %74, %75 : vector<1x256xf32>
    %77 = arith.addf %67, %76 : vector<1x256xf32>
    %c0_42 = arith.constant 0 : index
    %c3 = arith.constant 3 : index
    %78 = vector.load %arg3[%c0_42, %c3] : memref<16x49xf32, #tpu.memory_space<vmem>>, vector<16x1xf32>
    %c0_43 = arith.constant 0 : index
    %c0_44 = arith.constant 0 : index
    %79 = vector.load %arg6[%c0_43, %c0_44] : memref<16x256xf32, #tpu.memory_space<vmem>>, vector<16x256xf32>
    %80 = vector.broadcast %78 : vector<16x1xf32> to vector<16x256xf32>
    %81 = arith.mulf %80, %79 : vector<16x256xf32>
    %cst_45 = arith.constant dense<0.000000e+00> : vector<256xf32>
    %82 = vector.multi_reduction <add>, %81, %cst_45 [0] : vector<16x256xf32> to vector<256xf32>
    %83 = vector.shape_cast %82 : vector<256xf32> to vector<1x256xf32>
    %c10_46 = arith.constant 10 : index
    %c0_47 = arith.constant 0 : index
    %84 = vector.load %arg2[%c10_46, %c0_47] : memref<21x256xf32, #tpu.memory_space<vmem>>, vector<1x256xf32>
    %85 = arith.mulf %84, %83 : vector<1x256xf32>
    %86 = arith.addf %77, %85 : vector<1x256xf32>
    %c0_48 = arith.constant 0 : index
    %c4_49 = arith.constant 4 : index
    %87 = vector.load %arg3[%c0_48, %c4_49] : memref<16x49xf32, #tpu.memory_space<vmem>>, vector<16x1xf32>
    %c0_50 = arith.constant 0 : index
    %c0_51 = arith.constant 0 : index
    %88 = vector.load %arg6[%c0_50, %c0_51] : memref<16x256xf32, #tpu.memory_space<vmem>>, vector<16x256xf32>
    %89 = vector.broadcast %87 : vector<16x1xf32> to vector<16x256xf32>
    %90 = arith.mulf %89, %88 : vector<16x256xf32>
    %cst_52 = arith.constant dense<0.000000e+00> : vector<256xf32>
    %91 = vector.multi_reduction <add>, %90, %cst_52 [0] : vector<16x256xf32> to vector<256xf32>
    %92 = vector.shape_cast %91 : vector<256xf32> to vector<1x256xf32>
    %c11 = arith.constant 11 : index
    %c0_53 = arith.constant 0 : index
    %93 = vector.load %arg2[%c11, %c0_53] : memref<21x256xf32, #tpu.memory_space<vmem>>, vector<1x256xf32>
    %c248_i32 = arith.constant 248 : i32
    %94 = tpu.dynamic_rotate %92 by %c248_i32 dim 1 : vector<1x256xf32>, i32 -> vector<1x256xf32>
    %95 = arith.mulf %93, %94 : vector<1x256xf32>
    %96 = arith.addf %86, %95 : vector<1x256xf32>
    %c0_54 = arith.constant 0 : index
    %c5 = arith.constant 5 : index
    %97 = vector.load %arg3[%c0_54, %c5] : memref<16x49xf32, #tpu.memory_space<vmem>>, vector<16x1xf32>
    %c0_55 = arith.constant 0 : index
    %c0_56 = arith.constant 0 : index
    %98 = vector.load %arg6[%c0_55, %c0_56] : memref<16x256xf32, #tpu.memory_space<vmem>>, vector<16x256xf32>
    %99 = vector.broadcast %97 : vector<16x1xf32> to vector<16x256xf32>
    %100 = arith.mulf %99, %98 : vector<16x256xf32>
    %cst_57 = arith.constant dense<0.000000e+00> : vector<256xf32>
    %101 = vector.multi_reduction <add>, %100, %cst_57 [0] : vector<16x256xf32> to vector<256xf32>
    %102 = vector.shape_cast %101 : vector<256xf32> to vector<1x256xf32>
    %c12_58 = arith.constant 12 : index
    %c0_59 = arith.constant 0 : index
    %103 = vector.load %arg2[%c12_58, %c0_59] : memref<21x256xf32, #tpu.memory_space<vmem>>, vector<1x256xf32>
    %c240_i32 = arith.constant 240 : i32
    %104 = tpu.dynamic_rotate %102 by %c240_i32 dim 1 : vector<1x256xf32>, i32 -> vector<1x256xf32>
    %105 = arith.mulf %103, %104 : vector<1x256xf32>
    %106 = arith.addf %96, %105 : vector<1x256xf32>
    %c0_60 = arith.constant 0 : index
    %c6_61 = arith.constant 6 : index
    %107 = vector.load %arg3[%c0_60, %c6_61] : memref<16x49xf32, #tpu.memory_space<vmem>>, vector<16x1xf32>
    %c0_62 = arith.constant 0 : index
    %c0_63 = arith.constant 0 : index
    %108 = vector.load %arg6[%c0_62, %c0_63] : memref<16x256xf32, #tpu.memory_space<vmem>>, vector<16x256xf32>
    %109 = vector.broadcast %107 : vector<16x1xf32> to vector<16x256xf32>
    %110 = arith.mulf %109, %108 : vector<16x256xf32>
    %cst_64 = arith.constant dense<0.000000e+00> : vector<256xf32>
    %111 = vector.multi_reduction <add>, %110, %cst_64 [0] : vector<16x256xf32> to vector<256xf32>
    %112 = vector.shape_cast %111 : vector<256xf32> to vector<1x256xf32>
    %c13 = arith.constant 13 : index
    %c0_65 = arith.constant 0 : index
    %113 = vector.load %arg2[%c13, %c0_65] : memref<21x256xf32, #tpu.memory_space<vmem>>, vector<1x256xf32>
    %c232_i32 = arith.constant 232 : i32
    %114 = tpu.dynamic_rotate %112 by %c232_i32 dim 1 : vector<1x256xf32>, i32 -> vector<1x256xf32>
    %115 = arith.mulf %113, %114 : vector<1x256xf32>
    %116 = arith.addf %106, %115 : vector<1x256xf32>
    %c0_66 = arith.constant 0 : index
    %c0_67 = arith.constant 0 : index
    %117 = vector.load %arg2[%c0_66, %c0_67] : memref<21x256xf32, #tpu.memory_space<vmem>>, vector<1x256xf32>
    %c192_i32 = arith.constant 192 : i32
    %118 = tpu.dynamic_rotate %116 by %c192_i32 dim 1 : vector<1x256xf32>, i32 -> vector<1x256xf32>
    %119 = arith.mulf %117, %118 : vector<1x256xf32>
    %120 = arith.addf %46, %119 : vector<1x256xf32>
    %cst_68 = arith.constant 0.000000e+00 : f32
    %121 = vector.broadcast %cst_68 : f32 to vector<1x256xf32>
    %c0_69 = arith.constant 0 : index
    %c7_70 = arith.constant 7 : index
    %122 = vector.load %arg3[%c0_69, %c7_70] : memref<16x49xf32, #tpu.memory_space<vmem>>, vector<16x1xf32>
    %c0_71 = arith.constant 0 : index
    %c0_72 = arith.constant 0 : index
    %123 = vector.load %arg6[%c0_71, %c0_72] : memref<16x256xf32, #tpu.memory_space<vmem>>, vector<16x256xf32>
    %124 = vector.broadcast %122 : vector<16x1xf32> to vector<16x256xf32>
    %125 = arith.mulf %124, %123 : vector<16x256xf32>
    %cst_73 = arith.constant dense<0.000000e+00> : vector<256xf32>
    %126 = vector.multi_reduction <add>, %125, %cst_73 [0] : vector<16x256xf32> to vector<256xf32>
    %127 = vector.shape_cast %126 : vector<256xf32> to vector<1x256xf32>
    %c7_74 = arith.constant 7 : index
    %c0_75 = arith.constant 0 : index
    %128 = vector.load %arg2[%c7_74, %c0_75] : memref<21x256xf32, #tpu.memory_space<vmem>>, vector<1x256xf32>
    %c24_i32_76 = arith.constant 24 : i32
    %129 = tpu.dynamic_rotate %127 by %c24_i32_76 dim 1 : vector<1x256xf32>, i32 -> vector<1x256xf32>
    %130 = arith.mulf %128, %129 : vector<1x256xf32>
    %131 = arith.addf %121, %130 : vector<1x256xf32>
    %c0_77 = arith.constant 0 : index
    %c8_78 = arith.constant 8 : index
    %132 = vector.load %arg3[%c0_77, %c8_78] : memref<16x49xf32, #tpu.memory_space<vmem>>, vector<16x1xf32>
    %c0_79 = arith.constant 0 : index
    %c0_80 = arith.constant 0 : index
    %133 = vector.load %arg6[%c0_79, %c0_80] : memref<16x256xf32, #tpu.memory_space<vmem>>, vector<16x256xf32>
    %134 = vector.broadcast %132 : vector<16x1xf32> to vector<16x256xf32>
    %135 = arith.mulf %134, %133 : vector<16x256xf32>
    %cst_81 = arith.constant dense<0.000000e+00> : vector<256xf32>
    %136 = vector.multi_reduction <add>, %135, %cst_81 [0] : vector<16x256xf32> to vector<256xf32>
    %137 = vector.shape_cast %136 : vector<256xf32> to vector<1x256xf32>
    %c8_82 = arith.constant 8 : index
    %c0_83 = arith.constant 0 : index
    %138 = vector.load %arg2[%c8_82, %c0_83] : memref<21x256xf32, #tpu.memory_space<vmem>>, vector<1x256xf32>
    %c16_i32_84 = arith.constant 16 : i32
    %139 = tpu.dynamic_rotate %137 by %c16_i32_84 dim 1 : vector<1x256xf32>, i32 -> vector<1x256xf32>
    %140 = arith.mulf %138, %139 : vector<1x256xf32>
    %141 = arith.addf %131, %140 : vector<1x256xf32>
    %c0_85 = arith.constant 0 : index
    %c9_86 = arith.constant 9 : index
    %142 = vector.load %arg3[%c0_85, %c9_86] : memref<16x49xf32, #tpu.memory_space<vmem>>, vector<16x1xf32>
    %c0_87 = arith.constant 0 : index
    %c0_88 = arith.constant 0 : index
    %143 = vector.load %arg6[%c0_87, %c0_88] : memref<16x256xf32, #tpu.memory_space<vmem>>, vector<16x256xf32>
    %144 = vector.broadcast %142 : vector<16x1xf32> to vector<16x256xf32>
    %145 = arith.mulf %144, %143 : vector<16x256xf32>
    %cst_89 = arith.constant dense<0.000000e+00> : vector<256xf32>
    %146 = vector.multi_reduction <add>, %145, %cst_89 [0] : vector<16x256xf32> to vector<256xf32>
    %147 = vector.shape_cast %146 : vector<256xf32> to vector<1x256xf32>
    %c9_90 = arith.constant 9 : index
    %c0_91 = arith.constant 0 : index
    %148 = vector.load %arg2[%c9_90, %c0_91] : memref<21x256xf32, #tpu.memory_space<vmem>>, vector<1x256xf32>
    %c8_i32_92 = arith.constant 8 : i32
    %149 = tpu.dynamic_rotate %147 by %c8_i32_92 dim 1 : vector<1x256xf32>, i32 -> vector<1x256xf32>
    %150 = arith.mulf %148, %149 : vector<1x256xf32>
    %151 = arith.addf %141, %150 : vector<1x256xf32>
    %c0_93 = arith.constant 0 : index
    %c10_94 = arith.constant 10 : index
    %152 = vector.load %arg3[%c0_93, %c10_94] : memref<16x49xf32, #tpu.memory_space<vmem>>, vector<16x1xf32>
    %c0_95 = arith.constant 0 : index
    %c0_96 = arith.constant 0 : index
    %153 = vector.load %arg6[%c0_95, %c0_96] : memref<16x256xf32, #tpu.memory_space<vmem>>, vector<16x256xf32>
    %154 = vector.broadcast %152 : vector<16x1xf32> to vector<16x256xf32>
    %155 = arith.mulf %154, %153 : vector<16x256xf32>
    %cst_97 = arith.constant dense<0.000000e+00> : vector<256xf32>
    %156 = vector.multi_reduction <add>, %155, %cst_97 [0] : vector<16x256xf32> to vector<256xf32>
    %157 = vector.shape_cast %156 : vector<256xf32> to vector<1x256xf32>
    %c10_98 = arith.constant 10 : index
    %c0_99 = arith.constant 0 : index
    %158 = vector.load %arg2[%c10_98, %c0_99] : memref<21x256xf32, #tpu.memory_space<vmem>>, vector<1x256xf32>
    %159 = arith.mulf %158, %157 : vector<1x256xf32>
    %160 = arith.addf %151, %159 : vector<1x256xf32>
    %c0_100 = arith.constant 0 : index
    %c11_101 = arith.constant 11 : index
    %161 = vector.load %arg3[%c0_100, %c11_101] : memref<16x49xf32, #tpu.memory_space<vmem>>, vector<16x1xf32>
    %c0_102 = arith.constant 0 : index
    %c0_103 = arith.constant 0 : index
    %162 = vector.load %arg6[%c0_102, %c0_103] : memref<16x256xf32, #tpu.memory_space<vmem>>, vector<16x256xf32>
    %163 = vector.broadcast %161 : vector<16x1xf32> to vector<16x256xf32>
    %164 = arith.mulf %163, %162 : vector<16x256xf32>
    %cst_104 = arith.constant dense<0.000000e+00> : vector<256xf32>
    %165 = vector.multi_reduction <add>, %164, %cst_104 [0] : vector<16x256xf32> to vector<256xf32>
    %166 = vector.shape_cast %165 : vector<256xf32> to vector<1x256xf32>
    %c11_105 = arith.constant 11 : index
    %c0_106 = arith.constant 0 : index
    %167 = vector.load %arg2[%c11_105, %c0_106] : memref<21x256xf32, #tpu.memory_space<vmem>>, vector<1x256xf32>
    %c248_i32_107 = arith.constant 248 : i32
    %168 = tpu.dynamic_rotate %166 by %c248_i32_107 dim 1 : vector<1x256xf32>, i32 -> vector<1x256xf32>
    %169 = arith.mulf %167, %168 : vector<1x256xf32>
    %170 = arith.addf %160, %169 : vector<1x256xf32>
    %c0_108 = arith.constant 0 : index
    %c12_109 = arith.constant 12 : index
    %171 = vector.load %arg3[%c0_108, %c12_109] : memref<16x49xf32, #tpu.memory_space<vmem>>, vector<16x1xf32>
    %c0_110 = arith.constant 0 : index
    %c0_111 = arith.constant 0 : index
    %172 = vector.load %arg6[%c0_110, %c0_111] : memref<16x256xf32, #tpu.memory_space<vmem>>, vector<16x256xf32>
    %173 = vector.broadcast %171 : vector<16x1xf32> to vector<16x256xf32>
    %174 = arith.mulf %173, %172 : vector<16x256xf32>
    %cst_112 = arith.constant dense<0.000000e+00> : vector<256xf32>
    %175 = vector.multi_reduction <add>, %174, %cst_112 [0] : vector<16x256xf32> to vector<256xf32>
    %176 = vector.shape_cast %175 : vector<256xf32> to vector<1x256xf32>
    %c12_113 = arith.constant 12 : index
    %c0_114 = arith.constant 0 : index
    %177 = vector.load %arg2[%c12_113, %c0_114] : memref<21x256xf32, #tpu.memory_space<vmem>>, vector<1x256xf32>
    %c240_i32_115 = arith.constant 240 : i32
    %178 = tpu.dynamic_rotate %176 by %c240_i32_115 dim 1 : vector<1x256xf32>, i32 -> vector<1x256xf32>
    %179 = arith.mulf %177, %178 : vector<1x256xf32>
    %180 = arith.addf %170, %179 : vector<1x256xf32>
    %c0_116 = arith.constant 0 : index
    %c13_117 = arith.constant 13 : index
    %181 = vector.load %arg3[%c0_116, %c13_117] : memref<16x49xf32, #tpu.memory_space<vmem>>, vector<16x1xf32>
    %c0_118 = arith.constant 0 : index
    %c0_119 = arith.constant 0 : index
    %182 = vector.load %arg6[%c0_118, %c0_119] : memref<16x256xf32, #tpu.memory_space<vmem>>, vector<16x256xf32>
    %183 = vector.broadcast %181 : vector<16x1xf32> to vector<16x256xf32>
    %184 = arith.mulf %183, %182 : vector<16x256xf32>
    %cst_120 = arith.constant dense<0.000000e+00> : vector<256xf32>
    %185 = vector.multi_reduction <add>, %184, %cst_120 [0] : vector<16x256xf32> to vector<256xf32>
    %186 = vector.shape_cast %185 : vector<256xf32> to vector<1x256xf32>
    %c13_121 = arith.constant 13 : index
    %c0_122 = arith.constant 0 : index
    %187 = vector.load %arg2[%c13_121, %c0_122] : memref<21x256xf32, #tpu.memory_space<vmem>>, vector<1x256xf32>
    %c232_i32_123 = arith.constant 232 : i32
    %188 = tpu.dynamic_rotate %186 by %c232_i32_123 dim 1 : vector<1x256xf32>, i32 -> vector<1x256xf32>
    %189 = arith.mulf %187, %188 : vector<1x256xf32>
    %190 = arith.addf %180, %189 : vector<1x256xf32>
    %c1_124 = arith.constant 1 : index
    %c0_125 = arith.constant 0 : index
    %191 = vector.load %arg2[%c1_124, %c0_125] : memref<21x256xf32, #tpu.memory_space<vmem>>, vector<1x256xf32>
    %c128_i32 = arith.constant 128 : i32
    %192 = tpu.dynamic_rotate %190 by %c128_i32 dim 1 : vector<1x256xf32>, i32 -> vector<1x256xf32>
    %193 = arith.mulf %191, %192 : vector<1x256xf32>
    %194 = arith.addf %120, %193 : vector<1x256xf32>
    %cst_126 = arith.constant 0.000000e+00 : f32
    %195 = vector.broadcast %cst_126 : f32 to vector<1x256xf32>
    %c0_127 = arith.constant 0 : index
    %c14_128 = arith.constant 14 : index
    %196 = vector.load %arg3[%c0_127, %c14_128] : memref<16x49xf32, #tpu.memory_space<vmem>>, vector<16x1xf32>
    %c0_129 = arith.constant 0 : index
    %c0_130 = arith.constant 0 : index
    %197 = vector.load %arg6[%c0_129, %c0_130] : memref<16x256xf32, #tpu.memory_space<vmem>>, vector<16x256xf32>
    %198 = vector.broadcast %196 : vector<16x1xf32> to vector<16x256xf32>
    %199 = arith.mulf %198, %197 : vector<16x256xf32>
    %cst_131 = arith.constant dense<0.000000e+00> : vector<256xf32>
    %200 = vector.multi_reduction <add>, %199, %cst_131 [0] : vector<16x256xf32> to vector<256xf32>
    %201 = vector.shape_cast %200 : vector<256xf32> to vector<1x256xf32>
    %c7_132 = arith.constant 7 : index
    %c0_133 = arith.constant 0 : index
    %202 = vector.load %arg2[%c7_132, %c0_133] : memref<21x256xf32, #tpu.memory_space<vmem>>, vector<1x256xf32>
    %c24_i32_134 = arith.constant 24 : i32
    %203 = tpu.dynamic_rotate %201 by %c24_i32_134 dim 1 : vector<1x256xf32>, i32 -> vector<1x256xf32>
    %204 = arith.mulf %202, %203 : vector<1x256xf32>
    %205 = arith.addf %195, %204 : vector<1x256xf32>
    %c0_135 = arith.constant 0 : index
    %c15_136 = arith.constant 15 : index
    %206 = vector.load %arg3[%c0_135, %c15_136] : memref<16x49xf32, #tpu.memory_space<vmem>>, vector<16x1xf32>
    %c0_137 = arith.constant 0 : index
    %c0_138 = arith.constant 0 : index
    %207 = vector.load %arg6[%c0_137, %c0_138] : memref<16x256xf32, #tpu.memory_space<vmem>>, vector<16x256xf32>
    %208 = vector.broadcast %206 : vector<16x1xf32> to vector<16x256xf32>
    %209 = arith.mulf %208, %207 : vector<16x256xf32>
    %cst_139 = arith.constant dense<0.000000e+00> : vector<256xf32>
    %210 = vector.multi_reduction <add>, %209, %cst_139 [0] : vector<16x256xf32> to vector<256xf32>
    %211 = vector.shape_cast %210 : vector<256xf32> to vector<1x256xf32>
    %c8_140 = arith.constant 8 : index
    %c0_141 = arith.constant 0 : index
    %212 = vector.load %arg2[%c8_140, %c0_141] : memref<21x256xf32, #tpu.memory_space<vmem>>, vector<1x256xf32>
    %c16_i32_142 = arith.constant 16 : i32
    %213 = tpu.dynamic_rotate %211 by %c16_i32_142 dim 1 : vector<1x256xf32>, i32 -> vector<1x256xf32>
    %214 = arith.mulf %212, %213 : vector<1x256xf32>
    %215 = arith.addf %205, %214 : vector<1x256xf32>
    %c0_143 = arith.constant 0 : index
    %c16_144 = arith.constant 16 : index
    %216 = vector.load %arg3[%c0_143, %c16_144] : memref<16x49xf32, #tpu.memory_space<vmem>>, vector<16x1xf32>
    %c0_145 = arith.constant 0 : index
    %c0_146 = arith.constant 0 : index
    %217 = vector.load %arg6[%c0_145, %c0_146] : memref<16x256xf32, #tpu.memory_space<vmem>>, vector<16x256xf32>
    %218 = vector.broadcast %216 : vector<16x1xf32> to vector<16x256xf32>
    %219 = arith.mulf %218, %217 : vector<16x256xf32>
    %cst_147 = arith.constant dense<0.000000e+00> : vector<256xf32>
    %220 = vector.multi_reduction <add>, %219, %cst_147 [0] : vector<16x256xf32> to vector<256xf32>
    %221 = vector.shape_cast %220 : vector<256xf32> to vector<1x256xf32>
    %c9_148 = arith.constant 9 : index
    %c0_149 = arith.constant 0 : index
    %222 = vector.load %arg2[%c9_148, %c0_149] : memref<21x256xf32, #tpu.memory_space<vmem>>, vector<1x256xf32>
    %c8_i32_150 = arith.constant 8 : i32
    %223 = tpu.dynamic_rotate %221 by %c8_i32_150 dim 1 : vector<1x256xf32>, i32 -> vector<1x256xf32>
    %224 = arith.mulf %222, %223 : vector<1x256xf32>
    %225 = arith.addf %215, %224 : vector<1x256xf32>
    %c0_151 = arith.constant 0 : index
    %c17_152 = arith.constant 17 : index
    %226 = vector.load %arg3[%c0_151, %c17_152] : memref<16x49xf32, #tpu.memory_space<vmem>>, vector<16x1xf32>
    %c0_153 = arith.constant 0 : index
    %c0_154 = arith.constant 0 : index
    %227 = vector.load %arg6[%c0_153, %c0_154] : memref<16x256xf32, #tpu.memory_space<vmem>>, vector<16x256xf32>
    %228 = vector.broadcast %226 : vector<16x1xf32> to vector<16x256xf32>
    %229 = arith.mulf %228, %227 : vector<16x256xf32>
    %cst_155 = arith.constant dense<0.000000e+00> : vector<256xf32>
    %230 = vector.multi_reduction <add>, %229, %cst_155 [0] : vector<16x256xf32> to vector<256xf32>
    %231 = vector.shape_cast %230 : vector<256xf32> to vector<1x256xf32>
    %c10_156 = arith.constant 10 : index
    %c0_157 = arith.constant 0 : index
    %232 = vector.load %arg2[%c10_156, %c0_157] : memref<21x256xf32, #tpu.memory_space<vmem>>, vector<1x256xf32>
    %233 = arith.mulf %232, %231 : vector<1x256xf32>
    %234 = arith.addf %225, %233 : vector<1x256xf32>
    %c0_158 = arith.constant 0 : index
    %c18_159 = arith.constant 18 : index
    %235 = vector.load %arg3[%c0_158, %c18_159] : memref<16x49xf32, #tpu.memory_space<vmem>>, vector<16x1xf32>
    %c0_160 = arith.constant 0 : index
    %c0_161 = arith.constant 0 : index
    %236 = vector.load %arg6[%c0_160, %c0_161] : memref<16x256xf32, #tpu.memory_space<vmem>>, vector<16x256xf32>
    %237 = vector.broadcast %235 : vector<16x1xf32> to vector<16x256xf32>
    %238 = arith.mulf %237, %236 : vector<16x256xf32>
    %cst_162 = arith.constant dense<0.000000e+00> : vector<256xf32>
    %239 = vector.multi_reduction <add>, %238, %cst_162 [0] : vector<16x256xf32> to vector<256xf32>
    %240 = vector.shape_cast %239 : vector<256xf32> to vector<1x256xf32>
    %c11_163 = arith.constant 11 : index
    %c0_164 = arith.constant 0 : index
    %241 = vector.load %arg2[%c11_163, %c0_164] : memref<21x256xf32, #tpu.memory_space<vmem>>, vector<1x256xf32>
    %c248_i32_165 = arith.constant 248 : i32
    %242 = tpu.dynamic_rotate %240 by %c248_i32_165 dim 1 : vector<1x256xf32>, i32 -> vector<1x256xf32>
    %243 = arith.mulf %241, %242 : vector<1x256xf32>
    %244 = arith.addf %234, %243 : vector<1x256xf32>
    %c0_166 = arith.constant 0 : index
    %c19_167 = arith.constant 19 : index
    %245 = vector.load %arg3[%c0_166, %c19_167] : memref<16x49xf32, #tpu.memory_space<vmem>>, vector<16x1xf32>
    %c0_168 = arith.constant 0 : index
    %c0_169 = arith.constant 0 : index
    %246 = vector.load %arg6[%c0_168, %c0_169] : memref<16x256xf32, #tpu.memory_space<vmem>>, vector<16x256xf32>
    %247 = vector.broadcast %245 : vector<16x1xf32> to vector<16x256xf32>
    %248 = arith.mulf %247, %246 : vector<16x256xf32>
    %cst_170 = arith.constant dense<0.000000e+00> : vector<256xf32>
    %249 = vector.multi_reduction <add>, %248, %cst_170 [0] : vector<16x256xf32> to vector<256xf32>
    %250 = vector.shape_cast %249 : vector<256xf32> to vector<1x256xf32>
    %c12_171 = arith.constant 12 : index
    %c0_172 = arith.constant 0 : index
    %251 = vector.load %arg2[%c12_171, %c0_172] : memref<21x256xf32, #tpu.memory_space<vmem>>, vector<1x256xf32>
    %c240_i32_173 = arith.constant 240 : i32
    %252 = tpu.dynamic_rotate %250 by %c240_i32_173 dim 1 : vector<1x256xf32>, i32 -> vector<1x256xf32>
    %253 = arith.mulf %251, %252 : vector<1x256xf32>
    %254 = arith.addf %244, %253 : vector<1x256xf32>
    %c0_174 = arith.constant 0 : index
    %c20_175 = arith.constant 20 : index
    %255 = vector.load %arg3[%c0_174, %c20_175] : memref<16x49xf32, #tpu.memory_space<vmem>>, vector<16x1xf32>
    %c0_176 = arith.constant 0 : index
    %c0_177 = arith.constant 0 : index
    %256 = vector.load %arg6[%c0_176, %c0_177] : memref<16x256xf32, #tpu.memory_space<vmem>>, vector<16x256xf32>
    %257 = vector.broadcast %255 : vector<16x1xf32> to vector<16x256xf32>
    %258 = arith.mulf %257, %256 : vector<16x256xf32>
    %cst_178 = arith.constant dense<0.000000e+00> : vector<256xf32>
    %259 = vector.multi_reduction <add>, %258, %cst_178 [0] : vector<16x256xf32> to vector<256xf32>
    %260 = vector.shape_cast %259 : vector<256xf32> to vector<1x256xf32>
    %c13_179 = arith.constant 13 : index
    %c0_180 = arith.constant 0 : index
    %261 = vector.load %arg2[%c13_179, %c0_180] : memref<21x256xf32, #tpu.memory_space<vmem>>, vector<1x256xf32>
    %c232_i32_181 = arith.constant 232 : i32
    %262 = tpu.dynamic_rotate %260 by %c232_i32_181 dim 1 : vector<1x256xf32>, i32 -> vector<1x256xf32>
    %263 = arith.mulf %261, %262 : vector<1x256xf32>
    %264 = arith.addf %254, %263 : vector<1x256xf32>
    %c2_182 = arith.constant 2 : index
    %c0_183 = arith.constant 0 : index
    %265 = vector.load %arg2[%c2_182, %c0_183] : memref<21x256xf32, #tpu.memory_space<vmem>>, vector<1x256xf32>
    %c64_i32 = arith.constant 64 : i32
    %266 = tpu.dynamic_rotate %264 by %c64_i32 dim 1 : vector<1x256xf32>, i32 -> vector<1x256xf32>
    %267 = arith.mulf %265, %266 : vector<1x256xf32>
    %268 = arith.addf %194, %267 : vector<1x256xf32>
    %cst_184 = arith.constant 0.000000e+00 : f32
    %269 = vector.broadcast %cst_184 : f32 to vector<1x256xf32>
    %c0_185 = arith.constant 0 : index
    %c21 = arith.constant 21 : index
    %270 = vector.load %arg3[%c0_185, %c21] : memref<16x49xf32, #tpu.memory_space<vmem>>, vector<16x1xf32>
    %c0_186 = arith.constant 0 : index
    %c0_187 = arith.constant 0 : index
    %271 = vector.load %arg6[%c0_186, %c0_187] : memref<16x256xf32, #tpu.memory_space<vmem>>, vector<16x256xf32>
    %272 = vector.broadcast %270 : vector<16x1xf32> to vector<16x256xf32>
    %273 = arith.mulf %272, %271 : vector<16x256xf32>
    %cst_188 = arith.constant dense<0.000000e+00> : vector<256xf32>
    %274 = vector.multi_reduction <add>, %273, %cst_188 [0] : vector<16x256xf32> to vector<256xf32>
    %275 = vector.shape_cast %274 : vector<256xf32> to vector<1x256xf32>
    %c7_189 = arith.constant 7 : index
    %c0_190 = arith.constant 0 : index
    %276 = vector.load %arg2[%c7_189, %c0_190] : memref<21x256xf32, #tpu.memory_space<vmem>>, vector<1x256xf32>
    %c24_i32_191 = arith.constant 24 : i32
    %277 = tpu.dynamic_rotate %275 by %c24_i32_191 dim 1 : vector<1x256xf32>, i32 -> vector<1x256xf32>
    %278 = arith.mulf %276, %277 : vector<1x256xf32>
    %279 = arith.addf %269, %278 : vector<1x256xf32>
    %c0_192 = arith.constant 0 : index
    %c22 = arith.constant 22 : index
    %280 = vector.load %arg3[%c0_192, %c22] : memref<16x49xf32, #tpu.memory_space<vmem>>, vector<16x1xf32>
    %c0_193 = arith.constant 0 : index
    %c0_194 = arith.constant 0 : index
    %281 = vector.load %arg6[%c0_193, %c0_194] : memref<16x256xf32, #tpu.memory_space<vmem>>, vector<16x256xf32>
    %282 = vector.broadcast %280 : vector<16x1xf32> to vector<16x256xf32>
    %283 = arith.mulf %282, %281 : vector<16x256xf32>
    %cst_195 = arith.constant dense<0.000000e+00> : vector<256xf32>
    %284 = vector.multi_reduction <add>, %283, %cst_195 [0] : vector<16x256xf32> to vector<256xf32>
    %285 = vector.shape_cast %284 : vector<256xf32> to vector<1x256xf32>
    %c8_196 = arith.constant 8 : index
    %c0_197 = arith.constant 0 : index
    %286 = vector.load %arg2[%c8_196, %c0_197] : memref<21x256xf32, #tpu.memory_space<vmem>>, vector<1x256xf32>
    %c16_i32_198 = arith.constant 16 : i32
    %287 = tpu.dynamic_rotate %285 by %c16_i32_198 dim 1 : vector<1x256xf32>, i32 -> vector<1x256xf32>
    %288 = arith.mulf %286, %287 : vector<1x256xf32>
    %289 = arith.addf %279, %288 : vector<1x256xf32>
    %c0_199 = arith.constant 0 : index
    %c23 = arith.constant 23 : index
    %290 = vector.load %arg3[%c0_199, %c23] : memref<16x49xf32, #tpu.memory_space<vmem>>, vector<16x1xf32>
    %c0_200 = arith.constant 0 : index
    %c0_201 = arith.constant 0 : index
    %291 = vector.load %arg6[%c0_200, %c0_201] : memref<16x256xf32, #tpu.memory_space<vmem>>, vector<16x256xf32>
    %292 = vector.broadcast %290 : vector<16x1xf32> to vector<16x256xf32>
    %293 = arith.mulf %292, %291 : vector<16x256xf32>
    %cst_202 = arith.constant dense<0.000000e+00> : vector<256xf32>
    %294 = vector.multi_reduction <add>, %293, %cst_202 [0] : vector<16x256xf32> to vector<256xf32>
    %295 = vector.shape_cast %294 : vector<256xf32> to vector<1x256xf32>
    %c9_203 = arith.constant 9 : index
    %c0_204 = arith.constant 0 : index
    %296 = vector.load %arg2[%c9_203, %c0_204] : memref<21x256xf32, #tpu.memory_space<vmem>>, vector<1x256xf32>
    %c8_i32_205 = arith.constant 8 : i32
    %297 = tpu.dynamic_rotate %295 by %c8_i32_205 dim 1 : vector<1x256xf32>, i32 -> vector<1x256xf32>
    %298 = arith.mulf %296, %297 : vector<1x256xf32>
    %299 = arith.addf %289, %298 : vector<1x256xf32>
    %c0_206 = arith.constant 0 : index
    %c24 = arith.constant 24 : index
    %300 = vector.load %arg3[%c0_206, %c24] : memref<16x49xf32, #tpu.memory_space<vmem>>, vector<16x1xf32>
    %c0_207 = arith.constant 0 : index
    %c0_208 = arith.constant 0 : index
    %301 = vector.load %arg6[%c0_207, %c0_208] : memref<16x256xf32, #tpu.memory_space<vmem>>, vector<16x256xf32>
    %302 = vector.broadcast %300 : vector<16x1xf32> to vector<16x256xf32>
    %303 = arith.mulf %302, %301 : vector<16x256xf32>
    %cst_209 = arith.constant dense<0.000000e+00> : vector<256xf32>
    %304 = vector.multi_reduction <add>, %303, %cst_209 [0] : vector<16x256xf32> to vector<256xf32>
    %305 = vector.shape_cast %304 : vector<256xf32> to vector<1x256xf32>
    %c10_210 = arith.constant 10 : index
    %c0_211 = arith.constant 0 : index
    %306 = vector.load %arg2[%c10_210, %c0_211] : memref<21x256xf32, #tpu.memory_space<vmem>>, vector<1x256xf32>
    %307 = arith.mulf %306, %305 : vector<1x256xf32>
    %308 = arith.addf %299, %307 : vector<1x256xf32>
    %c0_212 = arith.constant 0 : index
    %c25 = arith.constant 25 : index
    %309 = vector.load %arg3[%c0_212, %c25] : memref<16x49xf32, #tpu.memory_space<vmem>>, vector<16x1xf32>
    %c0_213 = arith.constant 0 : index
    %c0_214 = arith.constant 0 : index
    %310 = vector.load %arg6[%c0_213, %c0_214] : memref<16x256xf32, #tpu.memory_space<vmem>>, vector<16x256xf32>
    %311 = vector.broadcast %309 : vector<16x1xf32> to vector<16x256xf32>
    %312 = arith.mulf %311, %310 : vector<16x256xf32>
    %cst_215 = arith.constant dense<0.000000e+00> : vector<256xf32>
    %313 = vector.multi_reduction <add>, %312, %cst_215 [0] : vector<16x256xf32> to vector<256xf32>
    %314 = vector.shape_cast %313 : vector<256xf32> to vector<1x256xf32>
    %c11_216 = arith.constant 11 : index
    %c0_217 = arith.constant 0 : index
    %315 = vector.load %arg2[%c11_216, %c0_217] : memref<21x256xf32, #tpu.memory_space<vmem>>, vector<1x256xf32>
    %c248_i32_218 = arith.constant 248 : i32
    %316 = tpu.dynamic_rotate %314 by %c248_i32_218 dim 1 : vector<1x256xf32>, i32 -> vector<1x256xf32>
    %317 = arith.mulf %315, %316 : vector<1x256xf32>
    %318 = arith.addf %308, %317 : vector<1x256xf32>
    %c0_219 = arith.constant 0 : index
    %c26 = arith.constant 26 : index
    %319 = vector.load %arg3[%c0_219, %c26] : memref<16x49xf32, #tpu.memory_space<vmem>>, vector<16x1xf32>
    %c0_220 = arith.constant 0 : index
    %c0_221 = arith.constant 0 : index
    %320 = vector.load %arg6[%c0_220, %c0_221] : memref<16x256xf32, #tpu.memory_space<vmem>>, vector<16x256xf32>
    %321 = vector.broadcast %319 : vector<16x1xf32> to vector<16x256xf32>
    %322 = arith.mulf %321, %320 : vector<16x256xf32>
    %cst_222 = arith.constant dense<0.000000e+00> : vector<256xf32>
    %323 = vector.multi_reduction <add>, %322, %cst_222 [0] : vector<16x256xf32> to vector<256xf32>
    %324 = vector.shape_cast %323 : vector<256xf32> to vector<1x256xf32>
    %c12_223 = arith.constant 12 : index
    %c0_224 = arith.constant 0 : index
    %325 = vector.load %arg2[%c12_223, %c0_224] : memref<21x256xf32, #tpu.memory_space<vmem>>, vector<1x256xf32>
    %c240_i32_225 = arith.constant 240 : i32
    %326 = tpu.dynamic_rotate %324 by %c240_i32_225 dim 1 : vector<1x256xf32>, i32 -> vector<1x256xf32>
    %327 = arith.mulf %325, %326 : vector<1x256xf32>
    %328 = arith.addf %318, %327 : vector<1x256xf32>
    %c0_226 = arith.constant 0 : index
    %c27 = arith.constant 27 : index
    %329 = vector.load %arg3[%c0_226, %c27] : memref<16x49xf32, #tpu.memory_space<vmem>>, vector<16x1xf32>
    %c0_227 = arith.constant 0 : index
    %c0_228 = arith.constant 0 : index
    %330 = vector.load %arg6[%c0_227, %c0_228] : memref<16x256xf32, #tpu.memory_space<vmem>>, vector<16x256xf32>
    %331 = vector.broadcast %329 : vector<16x1xf32> to vector<16x256xf32>
    %332 = arith.mulf %331, %330 : vector<16x256xf32>
    %cst_229 = arith.constant dense<0.000000e+00> : vector<256xf32>
    %333 = vector.multi_reduction <add>, %332, %cst_229 [0] : vector<16x256xf32> to vector<256xf32>
    %334 = vector.shape_cast %333 : vector<256xf32> to vector<1x256xf32>
    %c13_230 = arith.constant 13 : index
    %c0_231 = arith.constant 0 : index
    %335 = vector.load %arg2[%c13_230, %c0_231] : memref<21x256xf32, #tpu.memory_space<vmem>>, vector<1x256xf32>
    %c232_i32_232 = arith.constant 232 : i32
    %336 = tpu.dynamic_rotate %334 by %c232_i32_232 dim 1 : vector<1x256xf32>, i32 -> vector<1x256xf32>
    %337 = arith.mulf %335, %336 : vector<1x256xf32>
    %338 = arith.addf %328, %337 : vector<1x256xf32>
    %c3_233 = arith.constant 3 : index
    %c0_234 = arith.constant 0 : index
    %339 = vector.load %arg2[%c3_233, %c0_234] : memref<21x256xf32, #tpu.memory_space<vmem>>, vector<1x256xf32>
    %340 = arith.mulf %339, %338 : vector<1x256xf32>
    %341 = arith.addf %268, %340 : vector<1x256xf32>
    %cst_235 = arith.constant 0.000000e+00 : f32
    %342 = vector.broadcast %cst_235 : f32 to vector<1x256xf32>
    %c0_236 = arith.constant 0 : index
    %c28 = arith.constant 28 : index
    %343 = vector.load %arg3[%c0_236, %c28] : memref<16x49xf32, #tpu.memory_space<vmem>>, vector<16x1xf32>
    %c0_237 = arith.constant 0 : index
    %c0_238 = arith.constant 0 : index
    %344 = vector.load %arg6[%c0_237, %c0_238] : memref<16x256xf32, #tpu.memory_space<vmem>>, vector<16x256xf32>
    %345 = vector.broadcast %343 : vector<16x1xf32> to vector<16x256xf32>
    %346 = arith.mulf %345, %344 : vector<16x256xf32>
    %cst_239 = arith.constant dense<0.000000e+00> : vector<256xf32>
    %347 = vector.multi_reduction <add>, %346, %cst_239 [0] : vector<16x256xf32> to vector<256xf32>
    %348 = vector.shape_cast %347 : vector<256xf32> to vector<1x256xf32>
    %c7_240 = arith.constant 7 : index
    %c0_241 = arith.constant 0 : index
    %349 = vector.load %arg2[%c7_240, %c0_241] : memref<21x256xf32, #tpu.memory_space<vmem>>, vector<1x256xf32>
    %c24_i32_242 = arith.constant 24 : i32
    %350 = tpu.dynamic_rotate %348 by %c24_i32_242 dim 1 : vector<1x256xf32>, i32 -> vector<1x256xf32>
    %351 = arith.mulf %349, %350 : vector<1x256xf32>
    %352 = arith.addf %342, %351 : vector<1x256xf32>
    %c0_243 = arith.constant 0 : index
    %c29 = arith.constant 29 : index
    %353 = vector.load %arg3[%c0_243, %c29] : memref<16x49xf32, #tpu.memory_space<vmem>>, vector<16x1xf32>
    %c0_244 = arith.constant 0 : index
    %c0_245 = arith.constant 0 : index
    %354 = vector.load %arg6[%c0_244, %c0_245] : memref<16x256xf32, #tpu.memory_space<vmem>>, vector<16x256xf32>
    %355 = vector.broadcast %353 : vector<16x1xf32> to vector<16x256xf32>
    %356 = arith.mulf %355, %354 : vector<16x256xf32>
    %cst_246 = arith.constant dense<0.000000e+00> : vector<256xf32>
    %357 = vector.multi_reduction <add>, %356, %cst_246 [0] : vector<16x256xf32> to vector<256xf32>
    %358 = vector.shape_cast %357 : vector<256xf32> to vector<1x256xf32>
    %c8_247 = arith.constant 8 : index
    %c0_248 = arith.constant 0 : index
    %359 = vector.load %arg2[%c8_247, %c0_248] : memref<21x256xf32, #tpu.memory_space<vmem>>, vector<1x256xf32>
    %c16_i32_249 = arith.constant 16 : i32
    %360 = tpu.dynamic_rotate %358 by %c16_i32_249 dim 1 : vector<1x256xf32>, i32 -> vector<1x256xf32>
    %361 = arith.mulf %359, %360 : vector<1x256xf32>
    %362 = arith.addf %352, %361 : vector<1x256xf32>
    %c0_250 = arith.constant 0 : index
    %c30 = arith.constant 30 : index
    %363 = vector.load %arg3[%c0_250, %c30] : memref<16x49xf32, #tpu.memory_space<vmem>>, vector<16x1xf32>
    %c0_251 = arith.constant 0 : index
    %c0_252 = arith.constant 0 : index
    %364 = vector.load %arg6[%c0_251, %c0_252] : memref<16x256xf32, #tpu.memory_space<vmem>>, vector<16x256xf32>
    %365 = vector.broadcast %363 : vector<16x1xf32> to vector<16x256xf32>
    %366 = arith.mulf %365, %364 : vector<16x256xf32>
    %cst_253 = arith.constant dense<0.000000e+00> : vector<256xf32>
    %367 = vector.multi_reduction <add>, %366, %cst_253 [0] : vector<16x256xf32> to vector<256xf32>
    %368 = vector.shape_cast %367 : vector<256xf32> to vector<1x256xf32>
    %c9_254 = arith.constant 9 : index
    %c0_255 = arith.constant 0 : index
    %369 = vector.load %arg2[%c9_254, %c0_255] : memref<21x256xf32, #tpu.memory_space<vmem>>, vector<1x256xf32>
    %c8_i32_256 = arith.constant 8 : i32
    %370 = tpu.dynamic_rotate %368 by %c8_i32_256 dim 1 : vector<1x256xf32>, i32 -> vector<1x256xf32>
    %371 = arith.mulf %369, %370 : vector<1x256xf32>
    %372 = arith.addf %362, %371 : vector<1x256xf32>
    %c0_257 = arith.constant 0 : index
    %c31 = arith.constant 31 : index
    %373 = vector.load %arg3[%c0_257, %c31] : memref<16x49xf32, #tpu.memory_space<vmem>>, vector<16x1xf32>
    %c0_258 = arith.constant 0 : index
    %c0_259 = arith.constant 0 : index
    %374 = vector.load %arg6[%c0_258, %c0_259] : memref<16x256xf32, #tpu.memory_space<vmem>>, vector<16x256xf32>
    %375 = vector.broadcast %373 : vector<16x1xf32> to vector<16x256xf32>
    %376 = arith.mulf %375, %374 : vector<16x256xf32>
    %cst_260 = arith.constant dense<0.000000e+00> : vector<256xf32>
    %377 = vector.multi_reduction <add>, %376, %cst_260 [0] : vector<16x256xf32> to vector<256xf32>
    %378 = vector.shape_cast %377 : vector<256xf32> to vector<1x256xf32>
    %c10_261 = arith.constant 10 : index
    %c0_262 = arith.constant 0 : index
    %379 = vector.load %arg2[%c10_261, %c0_262] : memref<21x256xf32, #tpu.memory_space<vmem>>, vector<1x256xf32>
    %380 = arith.mulf %379, %378 : vector<1x256xf32>
    %381 = arith.addf %372, %380 : vector<1x256xf32>
    %c0_263 = arith.constant 0 : index
    %c32 = arith.constant 32 : index
    %382 = vector.load %arg3[%c0_263, %c32] : memref<16x49xf32, #tpu.memory_space<vmem>>, vector<16x1xf32>
    %c0_264 = arith.constant 0 : index
    %c0_265 = arith.constant 0 : index
    %383 = vector.load %arg6[%c0_264, %c0_265] : memref<16x256xf32, #tpu.memory_space<vmem>>, vector<16x256xf32>
    %384 = vector.broadcast %382 : vector<16x1xf32> to vector<16x256xf32>
    %385 = arith.mulf %384, %383 : vector<16x256xf32>
    %cst_266 = arith.constant dense<0.000000e+00> : vector<256xf32>
    %386 = vector.multi_reduction <add>, %385, %cst_266 [0] : vector<16x256xf32> to vector<256xf32>
    %387 = vector.shape_cast %386 : vector<256xf32> to vector<1x256xf32>
    %c11_267 = arith.constant 11 : index
    %c0_268 = arith.constant 0 : index
    %388 = vector.load %arg2[%c11_267, %c0_268] : memref<21x256xf32, #tpu.memory_space<vmem>>, vector<1x256xf32>
    %c248_i32_269 = arith.constant 248 : i32
    %389 = tpu.dynamic_rotate %387 by %c248_i32_269 dim 1 : vector<1x256xf32>, i32 -> vector<1x256xf32>
    %390 = arith.mulf %388, %389 : vector<1x256xf32>
    %391 = arith.addf %381, %390 : vector<1x256xf32>
    %c0_270 = arith.constant 0 : index
    %c33 = arith.constant 33 : index
    %392 = vector.load %arg3[%c0_270, %c33] : memref<16x49xf32, #tpu.memory_space<vmem>>, vector<16x1xf32>
    %c0_271 = arith.constant 0 : index
    %c0_272 = arith.constant 0 : index
    %393 = vector.load %arg6[%c0_271, %c0_272] : memref<16x256xf32, #tpu.memory_space<vmem>>, vector<16x256xf32>
    %394 = vector.broadcast %392 : vector<16x1xf32> to vector<16x256xf32>
    %395 = arith.mulf %394, %393 : vector<16x256xf32>
    %cst_273 = arith.constant dense<0.000000e+00> : vector<256xf32>
    %396 = vector.multi_reduction <add>, %395, %cst_273 [0] : vector<16x256xf32> to vector<256xf32>
    %397 = vector.shape_cast %396 : vector<256xf32> to vector<1x256xf32>
    %c12_274 = arith.constant 12 : index
    %c0_275 = arith.constant 0 : index
    %398 = vector.load %arg2[%c12_274, %c0_275] : memref<21x256xf32, #tpu.memory_space<vmem>>, vector<1x256xf32>
    %c240_i32_276 = arith.constant 240 : i32
    %399 = tpu.dynamic_rotate %397 by %c240_i32_276 dim 1 : vector<1x256xf32>, i32 -> vector<1x256xf32>
    %400 = arith.mulf %398, %399 : vector<1x256xf32>
    %401 = arith.addf %391, %400 : vector<1x256xf32>
    %c0_277 = arith.constant 0 : index
    %c34 = arith.constant 34 : index
    %402 = vector.load %arg3[%c0_277, %c34] : memref<16x49xf32, #tpu.memory_space<vmem>>, vector<16x1xf32>
    %c0_278 = arith.constant 0 : index
    %c0_279 = arith.constant 0 : index
    %403 = vector.load %arg6[%c0_278, %c0_279] : memref<16x256xf32, #tpu.memory_space<vmem>>, vector<16x256xf32>
    %404 = vector.broadcast %402 : vector<16x1xf32> to vector<16x256xf32>
    %405 = arith.mulf %404, %403 : vector<16x256xf32>
    %cst_280 = arith.constant dense<0.000000e+00> : vector<256xf32>
    %406 = vector.multi_reduction <add>, %405, %cst_280 [0] : vector<16x256xf32> to vector<256xf32>
    %407 = vector.shape_cast %406 : vector<256xf32> to vector<1x256xf32>
    %c13_281 = arith.constant 13 : index
    %c0_282 = arith.constant 0 : index
    %408 = vector.load %arg2[%c13_281, %c0_282] : memref<21x256xf32, #tpu.memory_space<vmem>>, vector<1x256xf32>
    %c232_i32_283 = arith.constant 232 : i32
    %409 = tpu.dynamic_rotate %407 by %c232_i32_283 dim 1 : vector<1x256xf32>, i32 -> vector<1x256xf32>
    %410 = arith.mulf %408, %409 : vector<1x256xf32>
    %411 = arith.addf %401, %410 : vector<1x256xf32>
    %c4_284 = arith.constant 4 : index
    %c0_285 = arith.constant 0 : index
    %412 = vector.load %arg2[%c4_284, %c0_285] : memref<21x256xf32, #tpu.memory_space<vmem>>, vector<1x256xf32>
    %c192_i32_286 = arith.constant 192 : i32
    %413 = tpu.dynamic_rotate %411 by %c192_i32_286 dim 1 : vector<1x256xf32>, i32 -> vector<1x256xf32>
    %414 = arith.mulf %412, %413 : vector<1x256xf32>
    %415 = arith.addf %341, %414 : vector<1x256xf32>
    %cst_287 = arith.constant 0.000000e+00 : f32
    %416 = vector.broadcast %cst_287 : f32 to vector<1x256xf32>
    %c0_288 = arith.constant 0 : index
    %c35 = arith.constant 35 : index
    %417 = vector.load %arg3[%c0_288, %c35] : memref<16x49xf32, #tpu.memory_space<vmem>>, vector<16x1xf32>
    %c0_289 = arith.constant 0 : index
    %c0_290 = arith.constant 0 : index
    %418 = vector.load %arg6[%c0_289, %c0_290] : memref<16x256xf32, #tpu.memory_space<vmem>>, vector<16x256xf32>
    %419 = vector.broadcast %417 : vector<16x1xf32> to vector<16x256xf32>
    %420 = arith.mulf %419, %418 : vector<16x256xf32>
    %cst_291 = arith.constant dense<0.000000e+00> : vector<256xf32>
    %421 = vector.multi_reduction <add>, %420, %cst_291 [0] : vector<16x256xf32> to vector<256xf32>
    %422 = vector.shape_cast %421 : vector<256xf32> to vector<1x256xf32>
    %c7_292 = arith.constant 7 : index
    %c0_293 = arith.constant 0 : index
    %423 = vector.load %arg2[%c7_292, %c0_293] : memref<21x256xf32, #tpu.memory_space<vmem>>, vector<1x256xf32>
    %c24_i32_294 = arith.constant 24 : i32
    %424 = tpu.dynamic_rotate %422 by %c24_i32_294 dim 1 : vector<1x256xf32>, i32 -> vector<1x256xf32>
    %425 = arith.mulf %423, %424 : vector<1x256xf32>
    %426 = arith.addf %416, %425 : vector<1x256xf32>
    %c0_295 = arith.constant 0 : index
    %c36 = arith.constant 36 : index
    %427 = vector.load %arg3[%c0_295, %c36] : memref<16x49xf32, #tpu.memory_space<vmem>>, vector<16x1xf32>
    %c0_296 = arith.constant 0 : index
    %c0_297 = arith.constant 0 : index
    %428 = vector.load %arg6[%c0_296, %c0_297] : memref<16x256xf32, #tpu.memory_space<vmem>>, vector<16x256xf32>
    %429 = vector.broadcast %427 : vector<16x1xf32> to vector<16x256xf32>
    %430 = arith.mulf %429, %428 : vector<16x256xf32>
    %cst_298 = arith.constant dense<0.000000e+00> : vector<256xf32>
    %431 = vector.multi_reduction <add>, %430, %cst_298 [0] : vector<16x256xf32> to vector<256xf32>
    %432 = vector.shape_cast %431 : vector<256xf32> to vector<1x256xf32>
    %c8_299 = arith.constant 8 : index
    %c0_300 = arith.constant 0 : index
    %433 = vector.load %arg2[%c8_299, %c0_300] : memref<21x256xf32, #tpu.memory_space<vmem>>, vector<1x256xf32>
    %c16_i32_301 = arith.constant 16 : i32
    %434 = tpu.dynamic_rotate %432 by %c16_i32_301 dim 1 : vector<1x256xf32>, i32 -> vector<1x256xf32>
    %435 = arith.mulf %433, %434 : vector<1x256xf32>
    %436 = arith.addf %426, %435 : vector<1x256xf32>
    %c0_302 = arith.constant 0 : index
    %c37 = arith.constant 37 : index
    %437 = vector.load %arg3[%c0_302, %c37] : memref<16x49xf32, #tpu.memory_space<vmem>>, vector<16x1xf32>
    %c0_303 = arith.constant 0 : index
    %c0_304 = arith.constant 0 : index
    %438 = vector.load %arg6[%c0_303, %c0_304] : memref<16x256xf32, #tpu.memory_space<vmem>>, vector<16x256xf32>
    %439 = vector.broadcast %437 : vector<16x1xf32> to vector<16x256xf32>
    %440 = arith.mulf %439, %438 : vector<16x256xf32>
    %cst_305 = arith.constant dense<0.000000e+00> : vector<256xf32>
    %441 = vector.multi_reduction <add>, %440, %cst_305 [0] : vector<16x256xf32> to vector<256xf32>
    %442 = vector.shape_cast %441 : vector<256xf32> to vector<1x256xf32>
    %c9_306 = arith.constant 9 : index
    %c0_307 = arith.constant 0 : index
    %443 = vector.load %arg2[%c9_306, %c0_307] : memref<21x256xf32, #tpu.memory_space<vmem>>, vector<1x256xf32>
    %c8_i32_308 = arith.constant 8 : i32
    %444 = tpu.dynamic_rotate %442 by %c8_i32_308 dim 1 : vector<1x256xf32>, i32 -> vector<1x256xf32>
    %445 = arith.mulf %443, %444 : vector<1x256xf32>
    %446 = arith.addf %436, %445 : vector<1x256xf32>
    %c0_309 = arith.constant 0 : index
    %c38 = arith.constant 38 : index
    %447 = vector.load %arg3[%c0_309, %c38] : memref<16x49xf32, #tpu.memory_space<vmem>>, vector<16x1xf32>
    %c0_310 = arith.constant 0 : index
    %c0_311 = arith.constant 0 : index
    %448 = vector.load %arg6[%c0_310, %c0_311] : memref<16x256xf32, #tpu.memory_space<vmem>>, vector<16x256xf32>
    %449 = vector.broadcast %447 : vector<16x1xf32> to vector<16x256xf32>
    %450 = arith.mulf %449, %448 : vector<16x256xf32>
    %cst_312 = arith.constant dense<0.000000e+00> : vector<256xf32>
    %451 = vector.multi_reduction <add>, %450, %cst_312 [0] : vector<16x256xf32> to vector<256xf32>
    %452 = vector.shape_cast %451 : vector<256xf32> to vector<1x256xf32>
    %c10_313 = arith.constant 10 : index
    %c0_314 = arith.constant 0 : index
    %453 = vector.load %arg2[%c10_313, %c0_314] : memref<21x256xf32, #tpu.memory_space<vmem>>, vector<1x256xf32>
    %454 = arith.mulf %453, %452 : vector<1x256xf32>
    %455 = arith.addf %446, %454 : vector<1x256xf32>
    %c0_315 = arith.constant 0 : index
    %c39 = arith.constant 39 : index
    %456 = vector.load %arg3[%c0_315, %c39] : memref<16x49xf32, #tpu.memory_space<vmem>>, vector<16x1xf32>
    %c0_316 = arith.constant 0 : index
    %c0_317 = arith.constant 0 : index
    %457 = vector.load %arg6[%c0_316, %c0_317] : memref<16x256xf32, #tpu.memory_space<vmem>>, vector<16x256xf32>
    %458 = vector.broadcast %456 : vector<16x1xf32> to vector<16x256xf32>
    %459 = arith.mulf %458, %457 : vector<16x256xf32>
    %cst_318 = arith.constant dense<0.000000e+00> : vector<256xf32>
    %460 = vector.multi_reduction <add>, %459, %cst_318 [0] : vector<16x256xf32> to vector<256xf32>
    %461 = vector.shape_cast %460 : vector<256xf32> to vector<1x256xf32>
    %c11_319 = arith.constant 11 : index
    %c0_320 = arith.constant 0 : index
    %462 = vector.load %arg2[%c11_319, %c0_320] : memref<21x256xf32, #tpu.memory_space<vmem>>, vector<1x256xf32>
    %c248_i32_321 = arith.constant 248 : i32
    %463 = tpu.dynamic_rotate %461 by %c248_i32_321 dim 1 : vector<1x256xf32>, i32 -> vector<1x256xf32>
    %464 = arith.mulf %462, %463 : vector<1x256xf32>
    %465 = arith.addf %455, %464 : vector<1x256xf32>
    %c0_322 = arith.constant 0 : index
    %c40 = arith.constant 40 : index
    %466 = vector.load %arg3[%c0_322, %c40] : memref<16x49xf32, #tpu.memory_space<vmem>>, vector<16x1xf32>
    %c0_323 = arith.constant 0 : index
    %c0_324 = arith.constant 0 : index
    %467 = vector.load %arg6[%c0_323, %c0_324] : memref<16x256xf32, #tpu.memory_space<vmem>>, vector<16x256xf32>
    %468 = vector.broadcast %466 : vector<16x1xf32> to vector<16x256xf32>
    %469 = arith.mulf %468, %467 : vector<16x256xf32>
    %cst_325 = arith.constant dense<0.000000e+00> : vector<256xf32>
    %470 = vector.multi_reduction <add>, %469, %cst_325 [0] : vector<16x256xf32> to vector<256xf32>
    %471 = vector.shape_cast %470 : vector<256xf32> to vector<1x256xf32>
    %c12_326 = arith.constant 12 : index
    %c0_327 = arith.constant 0 : index
    %472 = vector.load %arg2[%c12_326, %c0_327] : memref<21x256xf32, #tpu.memory_space<vmem>>, vector<1x256xf32>
    %c240_i32_328 = arith.constant 240 : i32
    %473 = tpu.dynamic_rotate %471 by %c240_i32_328 dim 1 : vector<1x256xf32>, i32 -> vector<1x256xf32>
    %474 = arith.mulf %472, %473 : vector<1x256xf32>
    %475 = arith.addf %465, %474 : vector<1x256xf32>
    %c0_329 = arith.constant 0 : index
    %c41 = arith.constant 41 : index
    %476 = vector.load %arg3[%c0_329, %c41] : memref<16x49xf32, #tpu.memory_space<vmem>>, vector<16x1xf32>
    %c0_330 = arith.constant 0 : index
    %c0_331 = arith.constant 0 : index
    %477 = vector.load %arg6[%c0_330, %c0_331] : memref<16x256xf32, #tpu.memory_space<vmem>>, vector<16x256xf32>
    %478 = vector.broadcast %476 : vector<16x1xf32> to vector<16x256xf32>
    %479 = arith.mulf %478, %477 : vector<16x256xf32>
    %cst_332 = arith.constant dense<0.000000e+00> : vector<256xf32>
    %480 = vector.multi_reduction <add>, %479, %cst_332 [0] : vector<16x256xf32> to vector<256xf32>
    %481 = vector.shape_cast %480 : vector<256xf32> to vector<1x256xf32>
    %c13_333 = arith.constant 13 : index
    %c0_334 = arith.constant 0 : index
    %482 = vector.load %arg2[%c13_333, %c0_334] : memref<21x256xf32, #tpu.memory_space<vmem>>, vector<1x256xf32>
    %c232_i32_335 = arith.constant 232 : i32
    %483 = tpu.dynamic_rotate %481 by %c232_i32_335 dim 1 : vector<1x256xf32>, i32 -> vector<1x256xf32>
    %484 = arith.mulf %482, %483 : vector<1x256xf32>
    %485 = arith.addf %475, %484 : vector<1x256xf32>
    %c5_336 = arith.constant 5 : index
    %c0_337 = arith.constant 0 : index
    %486 = vector.load %arg2[%c5_336, %c0_337] : memref<21x256xf32, #tpu.memory_space<vmem>>, vector<1x256xf32>
    %c128_i32_338 = arith.constant 128 : i32
    %487 = tpu.dynamic_rotate %485 by %c128_i32_338 dim 1 : vector<1x256xf32>, i32 -> vector<1x256xf32>
    %488 = arith.mulf %486, %487 : vector<1x256xf32>
    %489 = arith.addf %415, %488 : vector<1x256xf32>
    %cst_339 = arith.constant 0.000000e+00 : f32
    %490 = vector.broadcast %cst_339 : f32 to vector<1x256xf32>
    %c0_340 = arith.constant 0 : index
    %c42 = arith.constant 42 : index
    %491 = vector.load %arg3[%c0_340, %c42] : memref<16x49xf32, #tpu.memory_space<vmem>>, vector<16x1xf32>
    %c0_341 = arith.constant 0 : index
    %c0_342 = arith.constant 0 : index
    %492 = vector.load %arg6[%c0_341, %c0_342] : memref<16x256xf32, #tpu.memory_space<vmem>>, vector<16x256xf32>
    %493 = vector.broadcast %491 : vector<16x1xf32> to vector<16x256xf32>
    %494 = arith.mulf %493, %492 : vector<16x256xf32>
    %cst_343 = arith.constant dense<0.000000e+00> : vector<256xf32>
    %495 = vector.multi_reduction <add>, %494, %cst_343 [0] : vector<16x256xf32> to vector<256xf32>
    %496 = vector.shape_cast %495 : vector<256xf32> to vector<1x256xf32>
    %c7_344 = arith.constant 7 : index
    %c0_345 = arith.constant 0 : index
    %497 = vector.load %arg2[%c7_344, %c0_345] : memref<21x256xf32, #tpu.memory_space<vmem>>, vector<1x256xf32>
    %c24_i32_346 = arith.constant 24 : i32
    %498 = tpu.dynamic_rotate %496 by %c24_i32_346 dim 1 : vector<1x256xf32>, i32 -> vector<1x256xf32>
    %499 = arith.mulf %497, %498 : vector<1x256xf32>
    %500 = arith.addf %490, %499 : vector<1x256xf32>
    %c0_347 = arith.constant 0 : index
    %c43 = arith.constant 43 : index
    %501 = vector.load %arg3[%c0_347, %c43] : memref<16x49xf32, #tpu.memory_space<vmem>>, vector<16x1xf32>
    %c0_348 = arith.constant 0 : index
    %c0_349 = arith.constant 0 : index
    %502 = vector.load %arg6[%c0_348, %c0_349] : memref<16x256xf32, #tpu.memory_space<vmem>>, vector<16x256xf32>
    %503 = vector.broadcast %501 : vector<16x1xf32> to vector<16x256xf32>
    %504 = arith.mulf %503, %502 : vector<16x256xf32>
    %cst_350 = arith.constant dense<0.000000e+00> : vector<256xf32>
    %505 = vector.multi_reduction <add>, %504, %cst_350 [0] : vector<16x256xf32> to vector<256xf32>
    %506 = vector.shape_cast %505 : vector<256xf32> to vector<1x256xf32>
    %c8_351 = arith.constant 8 : index
    %c0_352 = arith.constant 0 : index
    %507 = vector.load %arg2[%c8_351, %c0_352] : memref<21x256xf32, #tpu.memory_space<vmem>>, vector<1x256xf32>
    %c16_i32_353 = arith.constant 16 : i32
    %508 = tpu.dynamic_rotate %506 by %c16_i32_353 dim 1 : vector<1x256xf32>, i32 -> vector<1x256xf32>
    %509 = arith.mulf %507, %508 : vector<1x256xf32>
    %510 = arith.addf %500, %509 : vector<1x256xf32>
    %c0_354 = arith.constant 0 : index
    %c44 = arith.constant 44 : index
    %511 = vector.load %arg3[%c0_354, %c44] : memref<16x49xf32, #tpu.memory_space<vmem>>, vector<16x1xf32>
    %c0_355 = arith.constant 0 : index
    %c0_356 = arith.constant 0 : index
    %512 = vector.load %arg6[%c0_355, %c0_356] : memref<16x256xf32, #tpu.memory_space<vmem>>, vector<16x256xf32>
    %513 = vector.broadcast %511 : vector<16x1xf32> to vector<16x256xf32>
    %514 = arith.mulf %513, %512 : vector<16x256xf32>
    %cst_357 = arith.constant dense<0.000000e+00> : vector<256xf32>
    %515 = vector.multi_reduction <add>, %514, %cst_357 [0] : vector<16x256xf32> to vector<256xf32>
    %516 = vector.shape_cast %515 : vector<256xf32> to vector<1x256xf32>
    %c9_358 = arith.constant 9 : index
    %c0_359 = arith.constant 0 : index
    %517 = vector.load %arg2[%c9_358, %c0_359] : memref<21x256xf32, #tpu.memory_space<vmem>>, vector<1x256xf32>
    %c8_i32_360 = arith.constant 8 : i32
    %518 = tpu.dynamic_rotate %516 by %c8_i32_360 dim 1 : vector<1x256xf32>, i32 -> vector<1x256xf32>
    %519 = arith.mulf %517, %518 : vector<1x256xf32>
    %520 = arith.addf %510, %519 : vector<1x256xf32>
    %c0_361 = arith.constant 0 : index
    %c45 = arith.constant 45 : index
    %521 = vector.load %arg3[%c0_361, %c45] : memref<16x49xf32, #tpu.memory_space<vmem>>, vector<16x1xf32>
    %c0_362 = arith.constant 0 : index
    %c0_363 = arith.constant 0 : index
    %522 = vector.load %arg6[%c0_362, %c0_363] : memref<16x256xf32, #tpu.memory_space<vmem>>, vector<16x256xf32>
    %523 = vector.broadcast %521 : vector<16x1xf32> to vector<16x256xf32>
    %524 = arith.mulf %523, %522 : vector<16x256xf32>
    %cst_364 = arith.constant dense<0.000000e+00> : vector<256xf32>
    %525 = vector.multi_reduction <add>, %524, %cst_364 [0] : vector<16x256xf32> to vector<256xf32>
    %526 = vector.shape_cast %525 : vector<256xf32> to vector<1x256xf32>
    %c10_365 = arith.constant 10 : index
    %c0_366 = arith.constant 0 : index
    %527 = vector.load %arg2[%c10_365, %c0_366] : memref<21x256xf32, #tpu.memory_space<vmem>>, vector<1x256xf32>
    %528 = arith.mulf %527, %526 : vector<1x256xf32>
    %529 = arith.addf %520, %528 : vector<1x256xf32>
    %c0_367 = arith.constant 0 : index
    %c46 = arith.constant 46 : index
    %530 = vector.load %arg3[%c0_367, %c46] : memref<16x49xf32, #tpu.memory_space<vmem>>, vector<16x1xf32>
    %c0_368 = arith.constant 0 : index
    %c0_369 = arith.constant 0 : index
    %531 = vector.load %arg6[%c0_368, %c0_369] : memref<16x256xf32, #tpu.memory_space<vmem>>, vector<16x256xf32>
    %532 = vector.broadcast %530 : vector<16x1xf32> to vector<16x256xf32>
    %533 = arith.mulf %532, %531 : vector<16x256xf32>
    %cst_370 = arith.constant dense<0.000000e+00> : vector<256xf32>
    %534 = vector.multi_reduction <add>, %533, %cst_370 [0] : vector<16x256xf32> to vector<256xf32>
    %535 = vector.shape_cast %534 : vector<256xf32> to vector<1x256xf32>
    %c11_371 = arith.constant 11 : index
    %c0_372 = arith.constant 0 : index
    %536 = vector.load %arg2[%c11_371, %c0_372] : memref<21x256xf32, #tpu.memory_space<vmem>>, vector<1x256xf32>
    %c248_i32_373 = arith.constant 248 : i32
    %537 = tpu.dynamic_rotate %535 by %c248_i32_373 dim 1 : vector<1x256xf32>, i32 -> vector<1x256xf32>
    %538 = arith.mulf %536, %537 : vector<1x256xf32>
    %539 = arith.addf %529, %538 : vector<1x256xf32>
    %c0_374 = arith.constant 0 : index
    %c47 = arith.constant 47 : index
    %540 = vector.load %arg3[%c0_374, %c47] : memref<16x49xf32, #tpu.memory_space<vmem>>, vector<16x1xf32>
    %c0_375 = arith.constant 0 : index
    %c0_376 = arith.constant 0 : index
    %541 = vector.load %arg6[%c0_375, %c0_376] : memref<16x256xf32, #tpu.memory_space<vmem>>, vector<16x256xf32>
    %542 = vector.broadcast %540 : vector<16x1xf32> to vector<16x256xf32>
    %543 = arith.mulf %542, %541 : vector<16x256xf32>
    %cst_377 = arith.constant dense<0.000000e+00> : vector<256xf32>
    %544 = vector.multi_reduction <add>, %543, %cst_377 [0] : vector<16x256xf32> to vector<256xf32>
    %545 = vector.shape_cast %544 : vector<256xf32> to vector<1x256xf32>
    %c12_378 = arith.constant 12 : index
    %c0_379 = arith.constant 0 : index
    %546 = vector.load %arg2[%c12_378, %c0_379] : memref<21x256xf32, #tpu.memory_space<vmem>>, vector<1x256xf32>
    %c240_i32_380 = arith.constant 240 : i32
    %547 = tpu.dynamic_rotate %545 by %c240_i32_380 dim 1 : vector<1x256xf32>, i32 -> vector<1x256xf32>
    %548 = arith.mulf %546, %547 : vector<1x256xf32>
    %549 = arith.addf %539, %548 : vector<1x256xf32>
    %c0_381 = arith.constant 0 : index
    %c48 = arith.constant 48 : index
    %550 = vector.load %arg3[%c0_381, %c48] : memref<16x49xf32, #tpu.memory_space<vmem>>, vector<16x1xf32>
    %c0_382 = arith.constant 0 : index
    %c0_383 = arith.constant 0 : index
    %551 = vector.load %arg6[%c0_382, %c0_383] : memref<16x256xf32, #tpu.memory_space<vmem>>, vector<16x256xf32>
    %552 = vector.broadcast %550 : vector<16x1xf32> to vector<16x256xf32>
    %553 = arith.mulf %552, %551 : vector<16x256xf32>
    %cst_384 = arith.constant dense<0.000000e+00> : vector<256xf32>
    %554 = vector.multi_reduction <add>, %553, %cst_384 [0] : vector<16x256xf32> to vector<256xf32>
    %555 = vector.shape_cast %554 : vector<256xf32> to vector<1x256xf32>
    %c13_385 = arith.constant 13 : index
    %c0_386 = arith.constant 0 : index
    %556 = vector.load %arg2[%c13_385, %c0_386] : memref<21x256xf32, #tpu.memory_space<vmem>>, vector<1x256xf32>
    %c232_i32_387 = arith.constant 232 : i32
    %557 = tpu.dynamic_rotate %555 by %c232_i32_387 dim 1 : vector<1x256xf32>, i32 -> vector<1x256xf32>
    %558 = arith.mulf %556, %557 : vector<1x256xf32>
    %559 = arith.addf %549, %558 : vector<1x256xf32>
    %c6_388 = arith.constant 6 : index
    %c0_389 = arith.constant 0 : index
    %560 = vector.load %arg2[%c6_388, %c0_389] : memref<21x256xf32, #tpu.memory_space<vmem>>, vector<1x256xf32>
    %c64_i32_390 = arith.constant 64 : i32
    %561 = tpu.dynamic_rotate %559 by %c64_i32_390 dim 1 : vector<1x256xf32>, i32 -> vector<1x256xf32>
    %562 = arith.mulf %560, %561 : vector<1x256xf32>
    %563 = arith.addf %489, %562 : vector<1x256xf32>
    %cst_391 = arith.constant 0.000000e+00 : f32
    %564 = vector.broadcast %cst_391 : f32 to vector<1x256xf32>
    %565 = arith.subf %564, %563 : vector<1x256xf32>
    %566 = math.exp %565 : vector<1x256xf32>
    %cst_392 = arith.constant 1.000000e+00 : f32
    %567 = vector.broadcast %cst_392 : f32 to vector<1x256xf32>
    %568 = arith.addf %567, %566 : vector<1x256xf32>
    %569 = tpu.reciprocal %568 : vector<1x256xf32> -> vector<1x256xf32>
    %c0_393 = arith.constant 0 : index
    %c0_394 = arith.constant 0 : index
    %c0_395 = arith.constant 0 : index
    %570 = vector.load %arg1[%c0_393, %c0_394, %c0_395] : memref<1x16x256xf32, #tpu.memory_space<vmem>>, vector<1x16x256xf32>
    %571 = vector.shape_cast %570 : vector<1x16x256xf32> to vector<16x256xf32>
    %cst_396 = arith.constant 1.000000e+00 : f32
    %572 = vector.broadcast %cst_396 : f32 to vector<1x256xf32>
    %573 = arith.addf %572, %569 : vector<1x256xf32>
    %574 = vector.broadcast %573 : vector<1x256xf32> to vector<16x256xf32>
    %575 = arith.mulf %571, %574 : vector<16x256xf32>
    %c0_397 = arith.constant 0 : index
    %c0_398 = arith.constant 0 : index
    %c0_399 = arith.constant 0 : index
    %576 = vector.load %arg5[%c0_397, %c0_398, %c0_399] : memref<1x16x256xf32, #tpu.memory_space<vmem>>, vector<1x16x256xf32>
    %577 = vector.shape_cast %576 : vector<1x16x256xf32> to vector<16x256xf32>
    %578 = vector.shape_cast %575 : vector<16x256xf32> to vector<1x16x256xf32>
    tpu.vector_store %arg5[%c0_397, %c0_398, %c0_399], %578 {strides = array<i32>} : memref<1x16x256xf32, #tpu.memory_space<vmem>>, vector<1x16x256xf32>,
    return
  }
  func.func @transform_0(%arg0: i32) -> (i32, i32, i32) {
    %c0_i32 = arith.constant 0 : i32
    %c0_i32_0 = arith.constant 0 : i32
    %c0_i32_1 = arith.constant 0 : i32
    return %arg0, %c0_i32, %c0_i32_0 : i32, i32, i32
  }
  func.func @transform_1(%arg0: i32) -> (i32, i32) {
    %c0_i32 = arith.constant 0 : i32
    %c0_i32_0 = arith.constant 0 : i32
    %c0_i32_1 = arith.constant 0 : i32
    return %c0_i32, %c0_i32_0 : i32, i32
  }
  func.func @transform_2(%arg0: i32) -> (i32, i32) {
    %c0_i32 = arith.constant 0 : i32
    %c0_i32_0 = arith.constant 0 : i32
    %c0_i32_1 = arith.constant 0 : i32
    return %c0_i32, %c0_i32_0 : i32, i32
  }
  func.func @transform_3(%arg0: i32) -> i32 {
    %c0_i32 = arith.constant 0 : i32
    %c0_i32_0 = arith.constant 0 : i32
    return %c0_i32 : i32
  }
  func.func @transform_4(%arg0: i32) -> (i32, i32, i32) {
    %c0_i32 = arith.constant 0 : i32
    %c0_i32_0 = arith.constant 0 : i32
    %c0_i32_1 = arith.constant 0 : i32
    return %arg0, %c0_i32, %c0_i32_0 : i32, i32, i32
  }
}

</mosaic_0001>

<llo_original>
// kernel: csam_spatial_module.1
$region0: #{csam_spatial_module.1}
  #allocation0 [shape = 'u32[]', space=smem, size = 0x4, offset = 0x4, fixed_abs, tag = 'smem constant byte address 0x4 - core index']
  #allocation1 [shape = 'u32[72,128]{1,0:T(1,128)}', space=vmem, size = 0x9000, scoped, tag = 'internal scratch']
  #allocation2 [shape = 'f32[16,256]{1,0:T(8,128)}', space=vmem, size = 0x4000, scoped, tag = 'scratch operand']
  #allocation3 [shape = 'f32[1]{0:T(128)S(6)}', space=smem, size = 0x200, scoped, tag = 'scoped memory for csam_spatial_module.1']
  %s0 = inlined_call_operand.vmem [shape: f32[2,16,256], index: 0, kind: input, shape index: {}]
  %s1 = inlined_call_operand.vmem [shape: f32[21,256], index: 1, kind: input, shape index: {}]
  %s2 = inlined_call_operand.vmem [shape: f32[16,49], index: 2, kind: input, shape index: {}]
  %s3 = inlined_call_operand.<no memory space> [shape: f32[1], index: 3, kind: input, shape index: {}]
  %s4 = inlined_call_operand.vmem [shape: f32[2,16,256], index: 4, kind: output, shape index: {}]
  %s5 = sld [smem:[#allocation0]]
  $region49: #{csam_spatial_module.1} parent=0
    _
  %s7 = ssub.s32 1, %s5
  %s8 = scalar_select 0, %s7, %s5
  %9 = sst [smem:[#allocation3]] %s3
  loop: start=0, step=1, limit=4
  $region2: #{csam_spatial_module.1} parent=0 // loop_pre_header
    _
  $region3: #{csam_spatial_module.1} parent=0 // loop_header
    %s11 = sphi 0, %s15
    %p12 = scmp.ge.s32.totalorder %s11, 4
    %s21 = sphi 0, %s23
    %s24 = sphi 0, %s21
    %s25 = sphi 0, %s24
    %s41 = sphi 0, %s25
    %s45 = sphi 0, %s45
    %s47 = sphi 0, %s45
    %s48 = sphi 0, %s47
    %s62 = sphi 0, %s48
    %s66 = sphi 0, %s66
    %s68 = sphi 0, %s66
    %s69 = sphi 0, %s68
    %s83 = sphi 0, %s69
    %s87 = sphi 0, %s87
    %s89 = sphi 0, %s87
    %s90 = sphi 0, %s89
    %s104 = sphi 0, %s90
    %s110 = sphi 0, %s112
    %s113 = sphi 0, %s110
    %s114 = sphi 0, %s113
    %s130 = sphi 0, %s114
  $region4: #{csam_spatial_module.1} parent=0 // loop_header_branch
    %14 = sbr.rel (%p12) target = $region8
  $region5: #{csam_spatial_module.1} parent=0 // loop_body
    %s16 = ssub.s32 %s11, 1
    %s17 = ssub.s32 %s11, 2
    %s18 = sadd.s32 %s11, 1
    %s19 = ssub.s32 %s11, %s18
    %p20 = scmp.eq.s32.totalorder %s19, 0
    %s22 = sadd.s32 %s21, 1
    %s23 = scalar_select %p20, %s21, %s22
    %p26 = pneg %p20
    %p27 = scmp.eq.s32.totalorder %s11, 1
    %p28 = por %p26, %p27
    %p29 = scmp.ne.s32.totalorder %s21, %s24
    %p30 = scmp.eq.s32.totalorder %s11, 0
    %p31 = por %p29, %p30
    %p32 = scmp.ne.s32.totalorder %s21, %s24
    %p33 = scmp.eq.s32.totalorder %s16, 1
    %p34 = por %p32, %p33
    %p35 = scmp.ne.s32.totalorder %s24, %s25
    %p36 = scmp.eq.s32.totalorder %s16, 0
    %p37 = por %p35, %p36
    %p38 = scmp.ne.s32.totalorder %s24, %s25
    %p39 = scmp.eq.s32.totalorder %s17, 1
    %p40 = por %p38, %p39
    %p42 = scmp.ne.s32.totalorder %s25, %s41
    %p43 = scmp.eq.s32.totalorder %s17, 0
    %p44 = por %p42, %p43
    %s46 = sadd.s32 %s45, 1
    %p49 = scmp.eq.s32.totalorder %s11, 1
    %p50 = scmp.ne.s32.totalorder %s45, %s47
    %p51 = scmp.eq.s32.totalorder %s11, 0
    %p52 = por %p50, %p51
    %p53 = scmp.ne.s32.totalorder %s45, %s47
    %p54 = scmp.eq.s32.totalorder %s16, 1
    %p55 = por %p53, %p54
    %p56 = scmp.ne.s32.totalorder %s47, %s48
    %p57 = scmp.eq.s32.totalorder %s16, 0
    %p58 = por %p56, %p57
    %p59 = scmp.ne.s32.totalorder %s47, %s48
    %p60 = scmp.eq.s32.totalorder %s17, 1
    %p61 = por %p59, %p60
    %p63 = scmp.ne.s32.totalorder %s48, %s62
    %p64 = scmp.eq.s32.totalorder %s17, 0
    %p65 = por %p63, %p64
    %s67 = sadd.s32 %s66, 1
    %p70 = scmp.eq.s32.totalorder %s11, 1
    %p71 = scmp.ne.s32.totalorder %s66, %s68
    %p72 = scmp.eq.s32.totalorder %s11, 0
    %p73 = por %p71, %p72
    %p74 = scmp.ne.s32.totalorder %s66, %s68
    %p75 = scmp.eq.s32.totalorder %s16, 1
    %p76 = por %p74, %p75
    %p77 = scmp.ne.s32.totalorder %s68, %s69
    %p78 = scmp.eq.s32.totalorder %s16, 0
    %p79 = por %p77, %p78
    %p80 = scmp.ne.s32.totalorder %s68, %s69
    %p81 = scmp.eq.s32.totalorder %s17, 1
    %p82 = por %p80, %p81
    %p84 = scmp.ne.s32.totalorder %s69, %s83
    %p85 = scmp.eq.s32.totalorder %s17, 0
    %p86 = por %p84, %p85
    %s88 = sadd.s32 %s87, 1
    %p91 = scmp.eq.s32.totalorder %s11, 1
    %p92 = scmp.ne.s32.totalorder %s87, %s89
    %p93 = scmp.eq.s32.totalorder %s11, 0
    %p94 = por %p92, %p93
    %p95 = scmp.ne.s32.totalorder %s87, %s89
    %p96 = scmp.eq.s32.totalorder %s16, 1
    %p97 = por %p95, %p96
    %p98 = scmp.ne.s32.totalorder %s89, %s90
    %p99 = scmp.eq.s32.totalorder %s16, 0
    %p100 = por %p98, %p99
    %p101 = scmp.ne.s32.totalorder %s89, %s90
    %p102 = scmp.eq.s32.totalorder %s17, 1
    %p103 = por %p101, %p102
    %p105 = scmp.ne.s32.totalorder %s90, %s104
    %p106 = scmp.eq.s32.totalorder %s17, 0
    %p107 = por %p105, %p106
    %s108 = ssub.s32 %s11, %s18
    %p109 = scmp.eq.s32.totalorder %s108, 0
    %s111 = sadd.s32 %s110, 1
    %s112 = scalar_select %p109, %s110, %s111
    %p115 = pneg %p109
    %p116 = scmp.eq.s32.totalorder %s11, 1
    %p117 = por %p115, %p116
    %p118 = scmp.ne.s32.totalorder %s110, %s113
    %p119 = scmp.eq.s32.totalorder %s11, 0
    %p120 = por %p118, %p119
    %p121 = scmp.ne.s32.totalorder %s110, %s113
    %p122 = scmp.eq.s32.totalorder %s16, 1
    %p123 = por %p121, %p122
    %p124 = scmp.ne.s32.totalorder %s113, %s114
    %p125 = scmp.eq.s32.totalorder %s16, 0
    %p126 = por %p124, %p125
    %p127 = scmp.ne.s32.totalorder %s113, %s114
    %p128 = scmp.eq.s32.totalorder %s17, 1
    %p129 = por %p127, %p128
    %p131 = scmp.ne.s32.totalorder %s114, %s130
    %p132 = scmp.eq.s32.totalorder %s17, 0
    %p133 = por %p131, %p132
    %p134 = scmp.le.s32.totalorder 1, %s11
    %p135 = scmp.lt.s32.totalorder %s11, 3
    %p136 = pnand %p134, %p135
    %p137 = pneg %p136
    // Predicated region
    $region9: #{csam_spatial_module.1} parent=5 // pred_check
      _
    $region10: #{csam_spatial_module.1} parent=5 // pred_check_branch
      %139 = sbr.rel (%p136) target = $region12
    $region11: #{csam_spatial_module.1} parent=5 // pred_region
      %s140 = ssub.s32 %s11, 1
      // Predicated region
      $region13: #{csam_spatial_module.1} parent=11 // pred_check
        %p141 = pneg %p58
      $region14: #{csam_spatial_module.1} parent=11 // pred_check_branch
        %143 = sbr.rel (%p141) target = $region16
      $region15: #{csam_spatial_module.1} parent=11 // pred_region
        _
      $region16: #{csam_spatial_module.1} parent=11 // pred_fallthru
        _
      // Predicated region
      $region17: #{csam_spatial_module.1} parent=11 // pred_check
        %p144 = pneg %p79
      $region18: #{csam_spatial_module.1} parent=11 // pred_check_branch
        %146 = sbr.rel (%p144) target = $region20
      $region19: #{csam_spatial_module.1} parent=11 // pred_region
        _
      $region20: #{csam_spatial_module.1} parent=11 // pred_fallthru
        _
      // Predicated region
      $region21: #{csam_spatial_module.1} parent=11 // pred_check
        %p147 = pneg %p100
      $region22: #{csam_spatial_module.1} parent=11 // pred_check_branch
        %149 = sbr.rel (%p147) target = $region24
      $region23: #{csam_spatial_module.1} parent=11 // pred_region
        _
      $region24: #{csam_spatial_module.1} parent=11 // pred_fallthru
        _
    $region12: #{csam_spatial_module.1} parent=5 // pred_fallthru
      _
    %p150 = scmp.lt.s32.totalorder %s11, 2
    // Predicated region
    $region25: #{csam_spatial_module.1} parent=5 // pred_check
      %p151 = pneg %p150
    $region26: #{csam_spatial_module.1} parent=5 // pred_check_branch
      %153 = sbr.rel (%p151) target = $region28
    $region27: #{csam_spatial_module.1} parent=5 // pred_region
      // Predicated region
      $region29: #{csam_spatial_module.1} parent=27 // pred_check
        %p154 = pneg %p31
      $region30: #{csam_spatial_module.1} parent=27 // pred_check_branch
        %156 = sbr.rel (%p154) target = $region32
      $region31: #{csam_spatial_module.1} parent=27 // pred_region
        %p157 = scmp.lt.s32.totalorder %s11, 1
        %s158 = scalar_select %p157, %s11, 1
        %s159 = smul.addr %s158, 4
        %s160 = smul.addr %s159, 8
        %s161 = scalar_lea.vmem %s0, %s160
      $region32: #{csam_spatial_module.1} parent=27 // pred_fallthru
        _
    $region28: #{csam_spatial_module.1} parent=5 // pred_fallthru
      _
    %p162 = scmp.le.s32.totalorder 1, %s11
    %p163 = scmp.lt.s32.totalorder %s11, 3
    %p164 = pnand %p162, %p163
    %p165 = pneg %p164
    // Predicated region
    $region33: #{csam_spatial_module.1} parent=5 // pred_check
      _
    $region34: #{csam_spatial_module.1} parent=5 // pred_check_branch
      %167 = sbr.rel (%p164) target = $region36
    $region35: #{csam_spatial_module.1} parent=5 // pred_region
      %s168 = ssub.s32 %s11, 1
      %p169 = scmp.lt.s32.totalorder %s16, 1
      %s170 = scalar_select %p169, %s16, 1
      %s171 = smul.addr %s170, 4
      %s172 = smul.addr %s171, 8
      %s173 = scalar_lea.vmem %s0, %s172
      %p174 = pneg %p37
      %p175 = pneg %p34
      %p176 = pneg %p58
      %p177 = pneg %p55
      %p178 = pneg %p79
      %p179 = pneg %p76
      %p180 = pneg %p100
      %p181 = pneg %p97
      %p182 = pneg %p126
      %p183 = pneg %p123
      %p184 = scmp.lt.s32.totalorder %s16, 1
      %s185 = scalar_select %p184, %s16, 1
      %s186 = smul.addr %s185, 4
      %s187 = smul.addr %s186, 8
      %s188 = scalar_lea.vmem %s4, %s187
      %p189 = scmp.lt.s32.totalorder %s16, 1
      %s190 = scalar_select %p189, %s16, 1
      %s191 = smul.addr %s190, 4
      %s192 = smul.addr %s191, 8
      %s193 = scalar_lea.vmem %s0, %s192
      %p194 = scmp.lt.s32.totalorder %s16, 1
      %s195 = scalar_select %p194, %s16, 1
      %s196 = smul.addr %s195, 4
      %s197 = smul.addr %s196, 8
      %s198 = scalar_lea.vmem %s4, %s197
      %v199 = vld [vmem:[%s193] sm:$0xff]
      %v200 = vld [vmem:[%s193 + $0x8] sm:$0xff]
      %v201 = vld [vmem:[%s193 + $0x10] sm:$0xff]
      %v202 = vld [vmem:[%s193 + $0x18] sm:$0xff]
      %v203 = vmax.f32 %v199, %v201
      %v204 = vrot.slane %v203, 4
      %v205 = vmax.f32 %v203, %v204
      %v206 = vrot.slane %v205, 2
      %v207 = vmax.f32 %v205, %v206
      %v208 = vrot.slane %v207, 1
      %v209 = vmax.f32 %v207, %v208
      %v210 = vmax.f32 %v200, %v202
      %v211 = vrot.slane %v210, 4
      %v212 = vmax.f32 %v210, %v211
      %v213 = vrot.slane %v212, 2
      %v214 = vmax.f32 %v212, %v213
      %v215 = vrot.slane %v214, 1
      %v216 = vmax.f32 %v214, %v215
      %v217 = vadd.f32 %v199, %v201
      %v218 = vrot.slane %v217, 4
      %v219 = vadd.f32 %v217, %v218
      %v220 = vrot.slane %v219, 2
      %v221 = vadd.f32 %v219, %v220
      %v222 = vrot.slane %v221, 1
      %v223 = vadd.f32 %v221, %v222
      %v224 = vadd.f32 %v200, %v202
      %v225 = vrot.slane %v224, 4
      %v226 = vadd.f32 %v224, %v225
      %v227 = vrot.slane %v226, 2
      %v228 = vadd.f32 %v226, %v227
      %v229 = vrot.slane %v228, 1
      %v230 = vadd.f32 %v228, %v229
      %v231 = vmul.f32 %v223, 0.0625
      %v232 = vmul.f32 %v230, 0.0625
      %vm233 = vcmask 1040384
      %v234 = vsel %vm233, %v209, %v231
      %v235 = vsel %vm233, %v216, %v232
      %s236 = scalar_lea.vmem %s1, 22
      %v237 = vld [vmem:[%s236] ss:$8 sm:$0x3]
      %238 = vrot.lane.b32.xlu0 %v234, 3
      %v239 = vpop.permute.xlu0 %238
      %240 = vrot.lane.b32.xlu0 %v235, 3
      %v241 = vpop.permute.xlu0 %240
      %v242 = vlaneseq
      %v243 = vand.u32 %v242, 127
      %vm244 = vcmp.lt.s32.totalorder %v243, 3
      %v245 = vsel %vm244, %v239, %v241
      %v246 = vsel %vm244, %v241, %v239
      %v248 = vperm.slane %v237, 0
      %v249 = vperm.slane %v237, 1
      %v252 = vmul.f32 %v248, %v246
      %v253 = vmul.f32 %v249, %v245
      %254 = vst [vmem:[#allocation2] sm:$0x3] %v252
      %255 = vst [vmem:[#allocation2 + $0x8] sm:$0x3] %v253
      %s256 = scalar_lea.vmem %s1, 23
      %v257 = vld [vmem:[%s256] ss:$8 sm:$0x3]
      %258 = vrot.lane.b32.xlu0 %v234, 2
      %v259 = vpop.permute.xlu0 %258
      %260 = vrot.lane.b32.xlu0 %v235, 2
      %v261 = vpop.permute.xlu0 %260
      %vm262 = vcmp.lt.s32.totalorder %v243, 2
      %v263 = vsel %vm262, %v259, %v261
      %v264 = vsel %vm262, %v261, %v259
      %v266 = vperm.slane %v257, 0
      %v267 = vperm.slane %v257, 1
      %v270 = vmul.f32 %v266, %v264
      %v271 = vmul.f32 %v267, %v263
      %v274 = vrot.slane %v270, 6
      %v275 = vrot.slane %v271, 6
      %278 = vst [vmem:[#allocation2] sm:$0xc] %v274
      %279 = vst [vmem:[#allocation2 + $0x8] sm:$0xc] %v275
      %s280 = scalar_lea.vmem %s1, 32
      %v281 = vld [vmem:[%s280] ss:$8 sm:$0x3]
      %282 = vrot.lane.b32.xlu0 %v234, 1
      %v283 = vpop.permute.xlu0 %282
      %284 = vrot.lane.b32.xlu0 %v235, 1
      %v285 = vpop.permute.xlu0 %284
      %vm286 = vcmp.lt.s32.totalorder %v243, 1
      %v287 = vsel %vm286, %v283, %v285
      %v288 = vsel %vm286, %v285, %v283
      %v290 = vperm.slane %v281, 0
      %v291 = vperm.slane %v281, 1
      %v294 = vmul.f32 %v290, %v288
      %v295 = vmul.f32 %v291, %v287
      %v298 = vrot.slane %v294, 4
      %v299 = vrot.slane %v295, 4
      %302 = vst [vmem:[#allocation2] sm:$0x30] %v298
      %303 = vst [vmem:[#allocation2 + $0x8] sm:$0x30] %v299
      %s304 = scalar_lea.vmem %s1, 33
      %v305 = vld [vmem:[%s304] ss:$8 sm:$0x3]
      %v307 = vperm.slane %v305, 0
      %v308 = vperm.slane %v305, 1
      %v311 = vmul.f32 %v307, %v234
      %v312 = vmul.f32 %v308, %v235
      %v315 = vrot.slane %v311, 2
      %v316 = vrot.slane %v312, 2
      %319 = vst [vmem:[#allocation2] sm:$0xc0] %v315
      %320 = vst [vmem:[#allocation2 + $0x8] sm:$0xc0] %v316
      %s321 = scalar_lea.vmem %s1, 34
      %v322 = vld [vmem:[%s321] ss:$8 sm:$0x3]
      %323 = vrot.lane.b32.xlu0 %v234, 127
      %v324 = vpop.permute.xlu0 %323
      %325 = vrot.lane.b32.xlu0 %v235, 127
      %v326 = vpop.permute.xlu0 %325
      %vm327 = vcmp.lt.s32.totalorder %v243, 127
      %v328 = vsel %vm327, %v324, %v326
      %v329 = vsel %vm327, %v326, %v324
      %v331 = vperm.slane %v322, 0
      %v332 = vperm.slane %v322, 1
      %v335 = vmul.f32 %v331, %v328
      %v336 = vmul.f32 %v332, %v329
      %337 = vst [vmem:[#allocation2 + $0x10] sm:$0x3] %v335
      %338 = vst [vmem:[#allocation2 + $0x18] sm:$0x3] %v336
      %s339 = scalar_lea.vmem %s1, 35
      %v340 = vld [vmem:[%s339] ss:$8 sm:$0x3]
      %341 = vrot.lane.b32.xlu0 %v234, 126
      %v342 = vpop.permute.xlu0 %341
      %343 = vrot.lane.b32.xlu0 %v235, 126
      %v344 = vpop.permute.xlu0 %343
      %vm345 = vcmp.lt.s32.totalorder %v243, 126
      %v346 = vsel %vm345, %v342, %v344
      %v347 = vsel %vm345, %v344, %v342
      %v349 = vperm.slane %v340, 0
      %v350 = vperm.slane %v340, 1
      %v353 = vmul.f32 %v349, %v346
      %v354 = vmul.f32 %v350, %v347
      %v357 = vrot.slane %v353, 6
      %v358 = vrot.slane %v354, 6
      %361 = vst [vmem:[#allocation2 + $0x10] sm:$0xc] %v357
      %362 = vst [vmem:[#allocation2 + $0x18] sm:$0xc] %v358
      %s363 = scalar_lea.vmem %s1, 36
      %v364 = vld [vmem:[%s363] ss:$8 sm:$0x3]
      %365 = vrot.lane.b32.xlu0 %v234, 125
      %v366 = vpop.permute.xlu0 %365
      %367 = vrot.lane.b32.xlu0 %v235, 125
      %v368 = vpop.permute.xlu0 %367
      %vm369 = vcmp.lt.s32.totalorder %v243, 125
      %v370 = vsel %vm369, %v366, %v368
      %v371 = vsel %vm369, %v368, %v366
      %v373 = vperm.slane %v364, 0
      %v374 = vperm.slane %v364, 1
      %v377 = vmul.f32 %v373, %v370
      %v378 = vmul.f32 %v374, %v371
      %v381 = vrot.slane %v377, 4
      %v382 = vrot.slane %v378, 4
      %385 = vst [vmem:[#allocation2 + $0x10] sm:$0x30] %v381
      %386 = vst [vmem:[#allocation2 + $0x18] sm:$0x30] %v382
      %387 = vst [vmem:[#allocation2 + $0x10] sm:$0xc0] 0.0
      %388 = vst [vmem:[#allocation2 + $0x18] sm:$0xc0] 0.0
      %s389 = sld [smem:[#allocation3]]
      %v390 = vstv %s389
      %v391 = vld [vmem:[%s2] sm:$0xff]
      %v392 = vld [vmem:[%s2 + $0x8] sm:$0xff]
      %v393 = vld [vmem:[#allocation2] sm:$0xff]
      %v394 = vld [vmem:[#allocation2 + $0x8] sm:$0xff]
      %v395 = vld [vmem:[#allocation2 + $0x10] sm:$0xff]
      %v396 = vld [vmem:[#allocation2 + $0x18] sm:$0xff]
      %398 = vset.pattern.permute.xlu0 0
      %399 = vperm.xlu0 %398, %v391
      %v400 = vpop.permute.xlu0 %399
      %403 = vset.pattern.permute.xlu0 0
      %404 = vperm.xlu0 %403, %v392
      %v405 = vpop.permute.xlu0 %404
      %v407 = vmul.f32 %v400, %v393
      %v408 = vmul.f32 %v400, %v394
      %v409 = vmul.f32 %v405, %v395
      %v410 = vmul.f32 %v405, %v396
      %v411 = vadd.f32 %v407, %v409
      %v412 = vrot.slane %v411, 4
      %v413 = vadd.f32 %v411, %v412
      %v414 = vrot.slane %v413, 2
      %v415 = vadd.f32 %v413, %v414
      %v416 = vrot.slane %v415, 1
      %v417 = vadd.f32 %v415, %v416
      %v418 = vadd.f32 %v408, %v410
      %v419 = vrot.slane %v418, 4
      %v420 = vadd.f32 %v418, %v419
      %v421 = vrot.slane %v420, 2
      %v422 = vadd.f32 %v420, %v421
      %v423 = vrot.slane %v422, 1
      %v424 = vadd.f32 %v422, %v423
      %s425 = scalar_lea.vmem %s1, 7
      %v426 = vld [vmem:[%s425] ss:$8 sm:$0x3]
      %427 = vrot.lane.b32.xlu0 %v417, 24
      %v428 = vpop.permute.xlu0 %427
      %429 = vrot.lane.b32.xlu0 %v424, 24
      %v430 = vpop.permute.xlu0 %429
      %vm431 = vcmp.lt.s32.totalorder %v243, 24
      %v432 = vsel %vm431, %v428, %v430
      %v433 = vsel %vm431, %v430, %v428
      %v436 = vrot.slane %v432, 7
      %v437 = vsel %vm233, %v433, %v436
      %v439 = vmul.f32 %v426, %v437
      %v440 = vadd.f32 %v439, 0.0
      %441 = vset.pattern.permute.xlu0 1
      %442 = vperm.xlu0 %441, %v391
      %v443 = vpop.permute.xlu0 %442
      %445 = vset.pattern.permute.xlu0 1
      %446 = vperm.xlu0 %445, %v392
      %v447 = vpop.permute.xlu0 %446
      %v449 = vmul.f32 %v443, %v393
      %v450 = vmul.f32 %v443, %v394
      %v451 = vmul.f32 %v447, %v395
      %v452 = vmul.f32 %v447, %v396
      %v453 = vadd.f32 %v449, %v451
      %v454 = vrot.slane %v453, 4
      %v455 = vadd.f32 %v453, %v454
      %v456 = vrot.slane %v455, 2
      %v457 = vadd.f32 %v455, %v456
      %v458 = vrot.slane %v457, 1
      %v459 = vadd.f32 %v457, %v458
      %v460 = vadd.f32 %v450, %v452
      %v461 = vrot.slane %v460, 4
      %v462 = vadd.f32 %v460, %v461
      %v463 = vrot.slane %v462, 2
      %v464 = vadd.f32 %v462, %v463
      %v465 = vrot.slane %v464, 1
      %v466 = vadd.f32 %v464, %v465
      %s467 = scalar_lea.vmem %s1, 16
      %v468 = vld [vmem:[%s467] ss:$8 sm:$0x3]
      %469 = vrot.lane.b32.xlu0 %v459, 16
      %v470 = vpop.permute.xlu0 %469
      %471 = vrot.lane.b32.xlu0 %v466, 16
      %v472 = vpop.permute.xlu0 %471
      %vm473 = vcmp.lt.s32.totalorder %v243, 16
      %v474 = vsel %vm473, %v470, %v472
      %v475 = vsel %vm473, %v472, %v470
      %v478 = vrot.slane %v474, 7
      %v479 = vsel %vm233, %v475, %v478
      %v481 = vmul.f32 %v468, %v479
      %v482 = vadd.f32 %v440, %v481
      %483 = vset.pattern.permute.xlu0 2
      %484 = vperm.xlu0 %483, %v391
      %v485 = vpop.permute.xlu0 %484
      %487 = vset.pattern.permute.xlu0 2
      %488 = vperm.xlu0 %487, %v392
      %v489 = vpop.permute.xlu0 %488
      %v491 = vmul.f32 %v485, %v393
      %v492 = vmul.f32 %v485, %v394
      %v493 = vmul.f32 %v489, %v395
      %v494 = vmul.f32 %v489, %v396
      %v495 = vadd.f32 %v491, %v493
      %v496 = vrot.slane %v495, 4
      %v497 = vadd.f32 %v495, %v496
      %v498 = vrot.slane %v497, 2
      %v499 = vadd.f32 %v497, %v498
      %v500 = vrot.slane %v499, 1
      %v501 = vadd.f32 %v499, %v500
      %v502 = vadd.f32 %v492, %v494
      %v503 = vrot.slane %v502, 4
      %v504 = vadd.f32 %v502, %v503
      %v505 = vrot.slane %v504, 2
      %v506 = vadd.f32 %v504, %v505
      %v507 = vrot.slane %v506, 1
      %v508 = vadd.f32 %v506, %v507
      %s509 = scalar_lea.vmem %s1, 17
      %v510 = vld [vmem:[%s509] ss:$8 sm:$0x3]
      %511 = vrot.lane.b32.xlu0 %v501, 8
      %v512 = vpop.permute.xlu0 %511
      %513 = vrot.lane.b32.xlu0 %v508, 8
      %v514 = vpop.permute.xlu0 %513
      %vm515 = vcmp.lt.s32.totalorder %v243, 8
      %v516 = vsel %vm515, %v512, %v514
      %v517 = vsel %vm515, %v514, %v512
      %v520 = vrot.slane %v516, 7
      %v521 = vsel %vm233, %v517, %v520
      %v523 = vmul.f32 %v510, %v521
      %v524 = vadd.f32 %v482, %v523
      %525 = vset.pattern.permute.xlu0 3
      %526 = vperm.xlu0 %525, %v391
      %v527 = vpop.permute.xlu0 %526
      %529 = vset.pattern.permute.xlu0 3
      %530 = vperm.xlu0 %529, %v392
      %v531 = vpop.permute.xlu0 %530
      %v533 = vmul.f32 %v527, %v393
      %v534 = vmul.f32 %v527, %v394
      %v535 = vmul.f32 %v531, %v395
      %v536 = vmul.f32 %v531, %v396
      %v537 = vadd.f32 %v533, %v535
      %v538 = vrot.slane %v537, 4
      %v539 = vadd.f32 %v537, %v538
      %v540 = vrot.slane %v539, 2
      %v541 = vadd.f32 %v539, %v540
      %v542 = vrot.slane %v541, 1
      %v543 = vadd.f32 %v541, %v542
      %v544 = vadd.f32 %v534, %v536
      %v545 = vrot.slane %v544, 4
      %v546 = vadd.f32 %v544, %v545
      %v547 = vrot.slane %v546, 2
      %v548 = vadd.f32 %v546, %v547
      %v549 = vrot.slane %v548, 1
      %v550 = vadd.f32 %v548, %v549
      %s551 = scalar_lea.vmem %s1, 18
      %v552 = vld [vmem:[%s551] ss:$8 sm:$0x3]
      %v555 = vrot.slane %v550, 7
      %v556 = vsel %vm233, %v543, %v555
      %v558 = vmul.f32 %v552, %v556
      %v559 = vadd.f32 %v524, %v558
      %560 = vset.pattern.permute.xlu0 4
      %561 = vperm.xlu0 %560, %v391
      %v562 = vpop.permute.xlu0 %561
      %564 = vset.pattern.permute.xlu0 4
      %565 = vperm.xlu0 %564, %v392
      %v566 = vpop.permute.xlu0 %565
      %v568 = vmul.f32 %v562, %v393
      %v569 = vmul.f32 %v562, %v394
      %v570 = vmul.f32 %v566, %v395
      %v571 = vmul.f32 %v566, %v396
      %v572 = vadd.f32 %v568, %v570
      %v573 = vrot.slane %v572, 4
      %v574 = vadd.f32 %v572, %v573
      %v575 = vrot.slane %v574, 2
      %v576 = vadd.f32 %v574, %v575
      %v577 = vrot.slane %v576, 1
      %v578 = vadd.f32 %v576, %v577
      %v579 = vadd.f32 %v569, %v571
      %v580 = vrot.slane %v579, 4
      %v581 = vadd.f32 %v579, %v580
      %v582 = vrot.slane %v581, 2
      %v583 = vadd.f32 %v581, %v582
      %v584 = vrot.slane %v583, 1
      %v585 = vadd.f32 %v583, %v584
      %s586 = scalar_lea.vmem %s1, 19
      %v587 = vld [vmem:[%s586] ss:$8 sm:$0x3]
      %588 = vrot.lane.b32.xlu0 %v578, 120
      %v589 = vpop.permute.xlu0 %588
      %590 = vrot.lane.b32.xlu0 %v585, 120
      %v591 = vpop.permute.xlu0 %590
      %vm592 = vcmp.lt.s32.totalorder %v243, 120
      %v593 = vsel %vm592, %v589, %v591
      %v594 = vsel %vm592, %v591, %v589
      %v597 = vrot.slane %v594, 7
      %v598 = vsel %vm233, %v593, %v597
      %v600 = vmul.f32 %v587, %v598
      %v601 = vadd.f32 %v559, %v600
      %602 = vset.pattern.permute.xlu0 5
      %603 = vperm.xlu0 %602, %v391
      %v604 = vpop.permute.xlu0 %603
      %606 = vset.pattern.permute.xlu0 5
      %607 = vperm.xlu0 %606, %v392
      %v608 = vpop.permute.xlu0 %607
      %v610 = vmul.f32 %v604, %v393
      %v611 = vmul.f32 %v604, %v394
      %v612 = vmul.f32 %v608, %v395
      %v613 = vmul.f32 %v608, %v396
      %v614 = vadd.f32 %v610, %v612
      %v615 = vrot.slane %v614, 4
      %v616 = vadd.f32 %v614, %v615
      %v617 = vrot.slane %v616, 2
      %v618 = vadd.f32 %v616, %v617
      %v619 = vrot.slane %v618, 1
      %v620 = vadd.f32 %v618, %v619
      %v621 = vadd.f32 %v611, %v613
      %v622 = vrot.slane %v621, 4
      %v623 = vadd.f32 %v621, %v622
      %v624 = vrot.slane %v623, 2
      %v625 = vadd.f32 %v623, %v624
      %v626 = vrot.slane %v625, 1
      %v627 = vadd.f32 %v625, %v626
      %s628 = scalar_lea.vmem %s1, 20
      %v629 = vld [vmem:[%s628] ss:$8 sm:$0x3]
      %630 = vrot.lane.b32.xlu0 %v620, 112
      %v631 = vpop.permute.xlu0 %630
      %632 = vrot.lane.b32.xlu0 %v627, 112
      %v633 = vpop.permute.xlu0 %632
      %vm634 = vcmp.lt.s32.totalorder %v243, 112
      %v635 = vsel %vm634, %v631, %v633
      %v636 = vsel %vm634, %v633, %v631
      %v639 = vrot.slane %v636, 7
      %v640 = vsel %vm233, %v635, %v639
      %v642 = vmul.f32 %v629, %v640
      %v643 = vadd.f32 %v601, %v642
      %644 = vset.pattern.permute.xlu0 6
      %645 = vperm.xlu0 %644, %v391
      %v646 = vpop.permute.xlu0 %645
      %648 = vset.pattern.permute.xlu0 6
      %649 = vperm.xlu0 %648, %v392
      %v650 = vpop.permute.xlu0 %649
      %v652 = vmul.f32 %v646, %v393
      %v653 = vmul.f32 %v646, %v394
      %v654 = vmul.f32 %v650, %v395
      %v655 = vmul.f32 %v650, %v396
      %v656 = vadd.f32 %v652, %v654
      %v657 = vrot.slane %v656, 4
      %v658 = vadd.f32 %v656, %v657
      %v659 = vrot.slane %v658, 2
      %v660 = vadd.f32 %v658, %v659
      %v661 = vrot.slane %v660, 1
      %v662 = vadd.f32 %v660, %v661
      %v663 = vadd.f32 %v653, %v655
      %v664 = vrot.slane %v663, 4
      %v665 = vadd.f32 %v663, %v664
      %v666 = vrot.slane %v665, 2
      %v667 = vadd.f32 %v665, %v666
      %v668 = vrot.slane %v667, 1
      %v669 = vadd.f32 %v667, %v668
      %s670 = scalar_lea.vmem %s1, 21
      %v671 = vld [vmem:[%s670] ss:$8 sm:$0x3]
      %672 = vrot.lane.b32.xlu0 %v662, 104
      %v673 = vpop.permute.xlu0 %672
      %674 = vrot.lane.b32.xlu0 %v669, 104
      %v675 = vpop.permute.xlu0 %674
      %vm676 = vcmp.lt.s32.totalorder %v243, 104
      %v677 = vsel %vm676, %v673, %v675
      %v678 = vsel %vm676, %v675, %v673
      %v681 = vrot.slane %v678, 7
      %v682 = vsel %vm233, %v677, %v681
      %v684 = vmul.f32 %v671, %v682
      %v685 = vadd.f32 %v643, %v684
      %v686 = vld [vmem:[%s1] ss:$8 sm:$0x3]
      %v688 = vperm.slane %v685, 0
      %v689 = vperm.slane %v685, 1
      %692 = vrot.lane.b32.xlu0 %v688, 64
      %v693 = vpop.permute.xlu0 %692
      %694 = vrot.lane.b32.xlu0 %v689, 64
      %v695 = vpop.permute.xlu0 %694
      %vm696 = vcmp.lt.s32.totalorder %v243, 64
      %v697 = vsel %vm696, %v693, %v695
      %v698 = vsel %vm696, %v695, %v693
      %v701 = vrot.slane %v698, 7
      %v702 = vsel %vm233, %v697, %v701
      %v704 = vmul.f32 %v686, %v702
      %v705 = vadd.f32 %v390, %v704
      %706 = vset.pattern.permute.xlu0 7
      %707 = vperm.xlu0 %706, %v391
      %v708 = vpop.permute.xlu0 %707
      %710 = vset.pattern.permute.xlu0 7
      %711 = vperm.xlu0 %710, %v392
      %v712 = vpop.permute.xlu0 %711
      %v714 = vmul.f32 %v708, %v393
      %v715 = vmul.f32 %v708, %v394
      %v716 = vmul.f32 %v712, %v395
      %v717 = vmul.f32 %v712, %v396
      %v718 = vadd.f32 %v714, %v716
      %v719 = vrot.slane %v718, 4
      %v720 = vadd.f32 %v718, %v719
      %v721 = vrot.slane %v720, 2
      %v722 = vadd.f32 %v720, %v721
      %v723 = vrot.slane %v722, 1
      %v724 = vadd.f32 %v722, %v723
      %v725 = vadd.f32 %v715, %v717
      %v726 = vrot.slane %v725, 4
      %v727 = vadd.f32 %v725, %v726
      %v728 = vrot.slane %v727, 2
      %v729 = vadd.f32 %v727, %v728
      %v730 = vrot.slane %v729, 1
      %v731 = vadd.f32 %v729, %v730
      %732 = vrot.lane.b32.xlu0 %v724, 24
      %v733 = vpop.permute.xlu0 %732
      %734 = vrot.lane.b32.xlu0 %v731, 24
      %v735 = vpop.permute.xlu0 %734
      %v736 = vsel %vm431, %v733, %v735
      %v737 = vsel %vm431, %v735, %v733
      %v740 = vrot.slane %v736, 7
      %v741 = vsel %vm233, %v737, %v740
      %v743 = vmul.f32 %v426, %v741
      %v744 = vadd.f32 %v743, 0.0
      %745 = vset.pattern.permute.xlu0 8
      %746 = vperm.xlu0 %745, %v391
      %v747 = vpop.permute.xlu0 %746
      %749 = vset.pattern.permute.xlu0 8
      %750 = vperm.xlu0 %749, %v392
      %v751 = vpop.permute.xlu0 %750
      %v753 = vmul.f32 %v747, %v393
      %v754 = vmul.f32 %v747, %v394
      %v755 = vmul.f32 %v751, %v395
      %v756 = vmul.f32 %v751, %v396
      %v757 = vadd.f32 %v753, %v755
      %v758 = vrot.slane %v757, 4
      %v759 = vadd.f32 %v757, %v758
      %v760 = vrot.slane %v759, 2
      %v761 = vadd.f32 %v759, %v760
      %v762 = vrot.slane %v761, 1
      %v763 = vadd.f32 %v761, %v762
      %v764 = vadd.f32 %v754, %v756
      %v765 = vrot.slane %v764, 4
      %v766 = vadd.f32 %v764, %v765
      %v767 = vrot.slane %v766, 2
      %v768 = vadd.f32 %v766, %v767
      %v769 = vrot.slane %v768, 1
      %v770 = vadd.f32 %v768, %v769
      %771 = vrot.lane.b32.xlu0 %v763, 16
      %v772 = vpop.permute.xlu0 %771
      %773 = vrot.lane.b32.xlu0 %v770, 16
      %v774 = vpop.permute.xlu0 %773
      %v775 = vsel %vm473, %v772, %v774
      %v776 = vsel %vm473, %v774, %v772
      %v779 = vrot.slane %v775, 7
      %v780 = vsel %vm233, %v776, %v779
      %v782 = vmul.f32 %v468, %v780
      %v783 = vadd.f32 %v744, %v782
      %784 = vset.pattern.permute.xlu0 9
      %785 = vperm.xlu0 %784, %v391
      %v786 = vpop.permute.xlu0 %785
      %788 = vset.pattern.permute.xlu0 9
      %789 = vperm.xlu0 %788, %v392
      %v790 = vpop.permute.xlu0 %789
      %v792 = vmul.f32 %v786, %v393
      %v793 = vmul.f32 %v786, %v394
      %v794 = vmul.f32 %v790, %v395
      %v795 = vmul.f32 %v790, %v396
      %v796 = vadd.f32 %v792, %v794
      %v797 = vrot.slane %v796, 4
      %v798 = vadd.f32 %v796, %v797
      %v799 = vrot.slane %v798, 2
      %v800 = vadd.f32 %v798, %v799
      %v801 = vrot.slane %v800, 1
      %v802 = vadd.f32 %v800, %v801
      %v803 = vadd.f32 %v793, %v795
      %v804 = vrot.slane %v803, 4
      %v805 = vadd.f32 %v803, %v804
      %v806 = vrot.slane %v805, 2
      %v807 = vadd.f32 %v805, %v806
      %v808 = vrot.slane %v807, 1
      %v809 = vadd.f32 %v807, %v808
      %810 = vrot.lane.b32.xlu0 %v802, 8
      %v811 = vpop.permute.xlu0 %810
      %812 = vrot.lane.b32.xlu0 %v809, 8
      %v813 = vpop.permute.xlu0 %812
      %v814 = vsel %vm515, %v811, %v813
      %v815 = vsel %vm515, %v813, %v811
      %v818 = vrot.slane %v814, 7
      %v819 = vsel %vm233, %v815, %v818
      %v821 = vmul.f32 %v510, %v819
      %v822 = vadd.f32 %v783, %v821
      %823 = vset.pattern.permute.xlu0 10
      %824 = vperm.xlu0 %823, %v391
      %v825 = vpop.permute.xlu0 %824
      %827 = vset.pattern.permute.xlu0 10
      %828 = vperm.xlu0 %827, %v392
      %v829 = vpop.permute.xlu0 %828
      %v831 = vmul.f32 %v825, %v393
      %v832 = vmul.f32 %v825, %v394
      %v833 = vmul.f32 %v829, %v395
      %v834 = vmul.f32 %v829, %v396
      %v835 = vadd.f32 %v831, %v833
      %v836 = vrot.slane %v835, 4
      %v837 = vadd.f32 %v835, %v836
      %v838 = vrot.slane %v837, 2
      %v839 = vadd.f32 %v837, %v838
      %v840 = vrot.slane %v839, 1
      %v841 = vadd.f32 %v839, %v840
      %v842 = vadd.f32 %v832, %v834
      %v843 = vrot.slane %v842, 4
      %v844 = vadd.f32 %v842, %v843
      %v845 = vrot.slane %v844, 2
      %v846 = vadd.f32 %v844, %v845
      %v847 = vrot.slane %v846, 1
      %v848 = vadd.f32 %v846, %v847
      %v851 = vrot.slane %v848, 7
      %v852 = vsel %vm233, %v841, %v851
      %v854 = vmul.f32 %v552, %v852
      %v855 = vadd.f32 %v822, %v854
      %856 = vset.pattern.permute.xlu0 11
      %857 = vperm.xlu0 %856, %v391
      %v858 = vpop.permute.xlu0 %857
      %860 = vset.pattern.permute.xlu0 11
      %861 = vperm.xlu0 %860, %v392
      %v862 = vpop.permute.xlu0 %861
      %v864 = vmul.f32 %v858, %v393
      %v865 = vmul.f32 %v858, %v394
      %v866 = vmul.f32 %v862, %v395
      %v867 = vmul.f32 %v862, %v396
      %v868 = vadd.f32 %v864, %v866
      %v869 = vrot.slane %v868, 4
      %v870 = vadd.f32 %v868, %v869
      %v871 = vrot.slane %v870, 2
      %v872 = vadd.f32 %v870, %v871
      %v873 = vrot.slane %v872, 1
      %v874 = vadd.f32 %v872, %v873
      %v875 = vadd.f32 %v865, %v867
      %v876 = vrot.slane %v875, 4
      %v877 = vadd.f32 %v875, %v876
      %v878 = vrot.slane %v877, 2
      %v879 = vadd.f32 %v877, %v878
      %v880 = vrot.slane %v879, 1
      %v881 = vadd.f32 %v879, %v880
      %882 = vrot.lane.b32.xlu0 %v874, 120
      %v883 = vpop.permute.xlu0 %882
      %884 = vrot.lane.b32.xlu0 %v881, 120
      %v885 = vpop.permute.xlu0 %884
      %v886 = vsel %vm592, %v883, %v885
      %v887 = vsel %vm592, %v885, %v883
      %v890 = vrot.slane %v887, 7
      %v891 = vsel %vm233, %v886, %v890
      %v893 = vmul.f32 %v587, %v891
      %v894 = vadd.f32 %v855, %v893
      %895 = vset.pattern.permute.xlu0 12
      %896 = vperm.xlu0 %895, %v391
      %v897 = vpop.permute.xlu0 %896
      %899 = vset.pattern.permute.xlu0 12
      %900 = vperm.xlu0 %899, %v392
      %v901 = vpop.permute.xlu0 %900
      %v903 = vmul.f32 %v897, %v393
      %v904 = vmul.f32 %v897, %v394
      %v905 = vmul.f32 %v901, %v395
      %v906 = vmul.f32 %v901, %v396
      %v907 = vadd.f32 %v903, %v905
      %v908 = vrot.slane %v907, 4
      %v909 = vadd.f32 %v907, %v908
      %v910 = vrot.slane %v909, 2
      %v911 = vadd.f32 %v909, %v910
      %v912 = vrot.slane %v911, 1
      %v913 = vadd.f32 %v911, %v912
      %v914 = vadd.f32 %v904, %v906
      %v915 = vrot.slane %v914, 4
      %v916 = vadd.f32 %v914, %v915
      %v917 = vrot.slane %v916, 2
      %v918 = vadd.f32 %v916, %v917
      %v919 = vrot.slane %v918, 1
      %v920 = vadd.f32 %v918, %v919
      %921 = vrot.lane.b32.xlu0 %v913, 112
      %v922 = vpop.permute.xlu0 %921
      %923 = vrot.lane.b32.xlu0 %v920, 112
      %v924 = vpop.permute.xlu0 %923
      %v925 = vsel %vm634, %v922, %v924
      %v926 = vsel %vm634, %v924, %v922
      %v929 = vrot.slane %v926, 7
      %v930 = vsel %vm233, %v925, %v929
      %v932 = vmul.f32 %v629, %v930
      %v933 = vadd.f32 %v894, %v932
      %934 = vset.pattern.permute.xlu0 13
      %935 = vperm.xlu0 %934, %v391
      %v936 = vpop.permute.xlu0 %935
      %938 = vset.pattern.permute.xlu0 13
      %939 = vperm.xlu0 %938, %v392
      %v940 = vpop.permute.xlu0 %939
      %v942 = vmul.f32 %v936, %v393
      %v943 = vmul.f32 %v936, %v394
      %v944 = vmul.f32 %v940, %v395
      %v945 = vmul.f32 %v940, %v396
      %v946 = vadd.f32 %v942, %v944
      %v947 = vrot.slane %v946, 4
      %v948 = vadd.f32 %v946, %v947
      %v949 = vrot.slane %v948, 2
      %v950 = vadd.f32 %v948, %v949
      %v951 = vrot.slane %v950, 1
      %v952 = vadd.f32 %v950, %v951
      %v953 = vadd.f32 %v943, %v945
      %v954 = vrot.slane %v953, 4
      %v955 = vadd.f32 %v953, %v954
      %v956 = vrot.slane %v955, 2
      %v957 = vadd.f32 %v955, %v956
      %v958 = vrot.slane %v957, 1
      %v959 = vadd.f32 %v957, %v958
      %960 = vrot.lane.b32.xlu0 %v952, 104
      %v961 = vpop.permute.xlu0 %960
      %962 = vrot.lane.b32.xlu0 %v959, 104
      %v963 = vpop.permute.xlu0 %962
      %v964 = vsel %vm676, %v961, %v963
      %v965 = vsel %vm676, %v963, %v961
      %v968 = vrot.slane %v965, 7
      %v969 = vsel %vm233, %v964, %v968
      %v971 = vmul.f32 %v671, %v969
      %v972 = vadd.f32 %v933, %v971
      %s973 = scalar_lea.vmem %s1, 1
      %v974 = vld [vmem:[%s973] ss:$8 sm:$0x3]
      %v976 = vperm.slane %v972, 0
      %v977 = vperm.slane %v972, 1
      %v978 = vrot.slane %v976, 7
      %v979 = vsel %vm233, %v977, %v978
      %v981 = vmul.f32 %v974, %v979
      %v982 = vadd.f32 %v705, %v981
      %983 = vset.pattern.permute.xlu0 14
      %984 = vperm.xlu0 %983, %v391
      %v985 = vpop.permute.xlu0 %984
      %987 = vset.pattern.permute.xlu0 14
      %988 = vperm.xlu0 %987, %v392
      %v989 = vpop.permute.xlu0 %988
      %v991 = vmul.f32 %v985, %v393
      %v992 = vmul.f32 %v985, %v394
      %v993 = vmul.f32 %v989, %v395
      %v994 = vmul.f32 %v989, %v396
      %v995 = vadd.f32 %v991, %v993
      %v996 = vrot.slane %v995, 4
      %v997 = vadd.f32 %v995, %v996
      %v998 = vrot.slane %v997, 2
      %v999 = vadd.f32 %v997, %v998
      %v1000 = vrot.slane %v999, 1
      %v1001 = vadd.f32 %v999, %v1000
      %v1002 = vadd.f32 %v992, %v994
      %v1003 = vrot.slane %v1002, 4
      %v1004 = vadd.f32 %v1002, %v1003
      %v1005 = vrot.slane %v1004, 2
      %v1006 = vadd.f32 %v1004, %v1005
      %v1007 = vrot.slane %v1006, 1
      %v1008 = vadd.f32 %v1006, %v1007
      %1009 = vrot.lane.b32.xlu0 %v1001, 24
      %v1010 = vpop.permute.xlu0 %1009
      %1011 = vrot.lane.b32.xlu0 %v1008, 24
      %v1012 = vpop.permute.xlu0 %1011
      %v1013 = vsel %vm431, %v1010, %v1012
      %v1014 = vsel %vm431, %v1012, %v1010
      %v1017 = vrot.slane %v1013, 7
      %v1018 = vsel %vm233, %v1014, %v1017
      %v1020 = vmul.f32 %v426, %v1018
      %v1021 = vadd.f32 %v1020, 0.0
      %1022 = vset.pattern.permute.xlu0 15
      %1023 = vperm.xlu0 %1022, %v391
      %v1024 = vpop.permute.xlu0 %1023
      %1026 = vset.pattern.permute.xlu0 15
      %1027 = vperm.xlu0 %1026, %v392
      %v1028 = vpop.permute.xlu0 %1027
      %v1030 = vmul.f32 %v1024, %v393
      %v1031 = vmul.f32 %v1024, %v394
      %v1032 = vmul.f32 %v1028, %v395
      %v1033 = vmul.f32 %v1028, %v396
      %v1034 = vadd.f32 %v1030, %v1032
      %v1035 = vrot.slane %v1034, 4
      %v1036 = vadd.f32 %v1034, %v1035
      %v1037 = vrot.slane %v1036, 2
      %v1038 = vadd.f32 %v1036, %v1037
      %v1039 = vrot.slane %v1038, 1
      %v1040 = vadd.f32 %v1038, %v1039
      %v1041 = vadd.f32 %v1031, %v1033
      %v1042 = vrot.slane %v1041, 4
      %v1043 = vadd.f32 %v1041, %v1042
      %v1044 = vrot.slane %v1043, 2
      %v1045 = vadd.f32 %v1043, %v1044
      %v1046 = vrot.slane %v1045, 1
      %v1047 = vadd.f32 %v1045, %v1046
      %1048 = vrot.lane.b32.xlu0 %v1040, 16
      %v1049 = vpop.permute.xlu0 %1048
      %1050 = vrot.lane.b32.xlu0 %v1047, 16
      %v1051 = vpop.permute.xlu0 %1050
      %v1052 = vsel %vm473, %v1049, %v1051
      %v1053 = vsel %vm473, %v1051, %v1049
      %v1056 = vrot.slane %v1052, 7
      %v1057 = vsel %vm233, %v1053, %v1056
      %v1059 = vmul.f32 %v468, %v1057
      %v1060 = vadd.f32 %v1021, %v1059
      %1061 = vset.pattern.permute.xlu0 16
      %1062 = vperm.xlu0 %1061, %v391
      %v1063 = vpop.permute.xlu0 %1062
      %1065 = vset.pattern.permute.xlu0 16
      %1066 = vperm.xlu0 %1065, %v392
      %v1067 = vpop.permute.xlu0 %1066
      %v1069 = vmul.f32 %v1063, %v393
      %v1070 = vmul.f32 %v1063, %v394
      %v1071 = vmul.f32 %v1067, %v395
      %v1072 = vmul.f32 %v1067, %v396
      %v1073 = vadd.f32 %v1069, %v1071
      %v1074 = vrot.slane %v1073, 4
      %v1075 = vadd.f32 %v1073, %v1074
      %v1076 = vrot.slane %v1075, 2
      %v1077 = vadd.f32 %v1075, %v1076
      %v1078 = vrot.slane %v1077, 1
      %v1079 = vadd.f32 %v1077, %v1078
      %v1080 = vadd.f32 %v1070, %v1072
      %v1081 = vrot.slane %v1080, 4
      %v1082 = vadd.f32 %v1080, %v1081
      %v1083 = vrot.slane %v1082, 2
      %v1084 = vadd.f32 %v1082, %v1083
      %v1085 = vrot.slane %v1084, 1
      %v1086 = vadd.f32 %v1084, %v1085
      %1087 = vrot.lane.b32.xlu0 %v1079, 8
      %v1088 = vpop.permute.xlu0 %1087
      %1089 = vrot.lane.b32.xlu0 %v1086, 8
      %v1090 = vpop.permute.xlu0 %1089
      %v1091 = vsel %vm515, %v1088, %v1090
      %v1092 = vsel %vm515, %v1090, %v1088
      %v1095 = vrot.slane %v1091, 7
      %v1096 = vsel %vm233, %v1092, %v1095
      %v1098 = vmul.f32 %v510, %v1096
      %v1099 = vadd.f32 %v1060, %v1098
      %1100 = vset.pattern.permute.xlu0 17
      %1101 = vperm.xlu0 %1100, %v391
      %v1102 = vpop.permute.xlu0 %1101
      %1104 = vset.pattern.permute.xlu0 17
      %1105 = vperm.xlu0 %1104, %v392
      %v1106 = vpop.permute.xlu0 %1105
      %v1108 = vmul.f32 %v1102, %v393
      %v1109 = vmul.f32 %v1102, %v394
      %v1110 = vmul.f32 %v1106, %v395
      %v1111 = vmul.f32 %v1106, %v396
      %v1112 = vadd.f32 %v1108, %v1110
      %v1113 = vrot.slane %v1112, 4
      %v1114 = vadd.f32 %v1112, %v1113
      %v1115 = vrot.slane %v1114, 2
      %v1116 = vadd.f32 %v1114, %v1115
      %v1117 = vrot.slane %v1116, 1
      %v1118 = vadd.f32 %v1116, %v1117
      %v1119 = vadd.f32 %v1109, %v1111
      %v1120 = vrot.slane %v1119, 4
      %v1121 = vadd.f32 %v1119, %v1120
      %v1122 = vrot.slane %v1121, 2
      %v1123 = vadd.f32 %v1121, %v1122
      %v1124 = vrot.slane %v1123, 1
      %v1125 = vadd.f32 %v1123, %v1124
      %v1128 = vrot.slane %v1125, 7
      %v1129 = vsel %vm233, %v1118, %v1128
      %v1131 = vmul.f32 %v552, %v1129
      %v1132 = vadd.f32 %v1099, %v1131
      %1133 = vset.pattern.permute.xlu0 18
      %1134 = vperm.xlu0 %1133, %v391
      %v1135 = vpop.permute.xlu0 %1134
      %1137 = vset.pattern.permute.xlu0 18
      %1138 = vperm.xlu0 %1137, %v392
      %v1139 = vpop.permute.xlu0 %1138
      %v1141 = vmul.f32 %v1135, %v393
      %v1142 = vmul.f32 %v1135, %v394
      %v1143 = vmul.f32 %v1139, %v395
      %v1144 = vmul.f32 %v1139, %v396
      %v1145 = vadd.f32 %v1141, %v1143
      %v1146 = vrot.slane %v1145, 4
      %v1147 = vadd.f32 %v1145, %v1146
      %v1148 = vrot.slane %v1147, 2
      %v1149 = vadd.f32 %v1147, %v1148
      %v1150 = vrot.slane %v1149, 1
      %v1151 = vadd.f32 %v1149, %v1150
      %v1152 = vadd.f32 %v1142, %v1144
      %v1153 = vrot.slane %v1152, 4
      %v1154 = vadd.f32 %v1152, %v1153
      %v1155 = vrot.slane %v1154, 2
      %v1156 = vadd.f32 %v1154, %v1155
      %v1157 = vrot.slane %v1156, 1
      %v1158 = vadd.f32 %v1156, %v1157
      %1159 = vrot.lane.b32.xlu0 %v1151, 120
      %v1160 = vpop.permute.xlu0 %1159
      %1161 = vrot.lane.b32.xlu0 %v1158, 120
      %v1162 = vpop.permute.xlu0 %1161
      %v1163 = vsel %vm592, %v1160, %v1162
      %v1164 = vsel %vm592, %v1162, %v1160
      %v1167 = vrot.slane %v1164, 7
      %v1168 = vsel %vm233, %v1163, %v1167
      %v1170 = vmul.f32 %v587, %v1168
      %v1171 = vadd.f32 %v1132, %v1170
      %1172 = vset.pattern.permute.xlu0 19
      %1173 = vperm.xlu0 %1172, %v391
      %v1174 = vpop.permute.xlu0 %1173
      %1176 = vset.pattern.permute.xlu0 19
      %1177 = vperm.xlu0 %1176, %v392
      %v1178 = vpop.permute.xlu0 %1177
      %v1180 = vmul.f32 %v1174, %v393
      %v1181 = vmul.f32 %v1174, %v394
      %v1182 = vmul.f32 %v1178, %v395
      %v1183 = vmul.f32 %v1178, %v396
      %v1184 = vadd.f32 %v1180, %v1182
      %v1185 = vrot.slane %v1184, 4
      %v1186 = vadd.f32 %v1184, %v1185
      %v1187 = vrot.slane %v1186, 2
      %v1188 = vadd.f32 %v1186, %v1187
      %v1189 = vrot.slane %v1188, 1
      %v1190 = vadd.f32 %v1188, %v1189
      %v1191 = vadd.f32 %v1181, %v1183
      %v1192 = vrot.slane %v1191, 4
      %v1193 = vadd.f32 %v1191, %v1192
      %v1194 = vrot.slane %v1193, 2
      %v1195 = vadd.f32 %v1193, %v1194
      %v1196 = vrot.slane %v1195, 1
      %v1197 = vadd.f32 %v1195, %v1196
      %1198 = vrot.lane.b32.xlu0 %v1190, 112
      %v1199 = vpop.permute.xlu0 %1198
      %1200 = vrot.lane.b32.xlu0 %v1197, 112
      %v1201 = vpop.permute.xlu0 %1200
      %v1202 = vsel %vm634, %v1199, %v1201
      %v1203 = vsel %vm634, %v1201, %v1199
      %v1206 = vrot.slane %v1203, 7
      %v1207 = vsel %vm233, %v1202, %v1206
      %v1209 = vmul.f32 %v629, %v1207
      %v1210 = vadd.f32 %v1171, %v1209
      %1211 = vset.pattern.permute.xlu0 20
      %1212 = vperm.xlu0 %1211, %v391
      %v1213 = vpop.permute.xlu0 %1212
      %1215 = vset.pattern.permute.xlu0 20
      %1216 = vperm.xlu0 %1215, %v392
      %v1217 = vpop.permute.xlu0 %1216
      %v1219 = vmul.f32 %v1213, %v393
      %v1220 = vmul.f32 %v1213, %v394
      %v1221 = vmul.f32 %v1217, %v395
      %v1222 = vmul.f32 %v1217, %v396
      %v1223 = vadd.f32 %v1219, %v1221
      %v1224 = vrot.slane %v1223, 4
      %v1225 = vadd.f32 %v1223, %v1224
      %v1226 = vrot.slane %v1225, 2
      %v1227 = vadd.f32 %v1225, %v1226
      %v1228 = vrot.slane %v1227, 1
      %v1229 = vadd.f32 %v1227, %v1228
      %v1230 = vadd.f32 %v1220, %v1222
      %v1231 = vrot.slane %v1230, 4
      %v1232 = vadd.f32 %v1230, %v1231
      %v1233 = vrot.slane %v1232, 2
      %v1234 = vadd.f32 %v1232, %v1233
      %v1235 = vrot.slane %v1234, 1
      %v1236 = vadd.f32 %v1234, %v1235
      %1237 = vrot.lane.b32.xlu0 %v1229, 104
      %v1238 = vpop.permute.xlu0 %1237
      %1239 = vrot.lane.b32.xlu0 %v1236, 104
      %v1240 = vpop.permute.xlu0 %1239
      %v1241 = vsel %vm676, %v1238, %v1240
      %v1242 = vsel %vm676, %v1240, %v1238
      %v1245 = vrot.slane %v1242, 7
      %v1246 = vsel %vm233, %v1241, %v1245
      %v1248 = vmul.f32 %v671, %v1246
      %v1249 = vadd.f32 %v1210, %v1248
      %s1250 = scalar_lea.vmem %s1, 2
      %v1251 = vld [vmem:[%s1250] ss:$8 sm:$0x3]
      %v1253 = vperm.slane %v1249, 0
      %v1254 = vperm.slane %v1249, 1
      %1257 = vrot.lane.b32.xlu0 %v1253, 64
      %v1258 = vpop.permute.xlu0 %1257
      %1259 = vrot.lane.b32.xlu0 %v1254, 64
      %v1260 = vpop.permute.xlu0 %1259
      %v1261 = vsel %vm696, %v1258, %v1260
      %v1262 = vsel %vm696, %v1260, %v1258
      %v1265 = vrot.slane %v1261, 7
      %v1266 = vsel %vm233, %v1262, %v1265
      %v1268 = vmul.f32 %v1251, %v1266
      %v1269 = vadd.f32 %v982, %v1268
      %1270 = vset.pattern.permute.xlu0 21
      %1271 = vperm.xlu0 %1270, %v391
      %v1272 = vpop.permute.xlu0 %1271
      %1274 = vset.pattern.permute.xlu0 21
      %1275 = vperm.xlu0 %1274, %v392
      %v1276 = vpop.permute.xlu0 %1275
      %v1278 = vmul.f32 %v1272, %v393
      %v1279 = vmul.f32 %v1272, %v394
      %v1280 = vmul.f32 %v1276, %v395
      %v1281 = vmul.f32 %v1276, %v396
      %v1282 = vadd.f32 %v1278, %v1280
      %v1283 = vrot.slane %v1282, 4
      %v1284 = vadd.f32 %v1282, %v1283
      %v1285 = vrot.slane %v1284, 2
      %v1286 = vadd.f32 %v1284, %v1285
      %v1287 = vrot.slane %v1286, 1
      %v1288 = vadd.f32 %v1286, %v1287
      %v1289 = vadd.f32 %v1279, %v1281
      %v1290 = vrot.slane %v1289, 4
      %v1291 = vadd.f32 %v1289, %v1290
      %v1292 = vrot.slane %v1291, 2
      %v1293 = vadd.f32 %v1291, %v1292
      %v1294 = vrot.slane %v1293, 1
      %v1295 = vadd.f32 %v1293, %v1294
      %1296 = vrot.lane.b32.xlu0 %v1288, 24
      %v1297 = vpop.permute.xlu0 %1296
      %1298 = vrot.lane.b32.xlu0 %v1295, 24
      %v1299 = vpop.permute.xlu0 %1298
      %v1300 = vsel %vm431, %v1297, %v1299
      %v1301 = vsel %vm431, %v1299, %v1297
      %v1304 = vrot.slane %v1300, 7
      %v1305 = vsel %vm233, %v1301, %v1304
      %v1307 = vmul.f32 %v426, %v1305
      %v1308 = vadd.f32 %v1307, 0.0
      %1309 = vset.pattern.permute.xlu0 22
      %1310 = vperm.xlu0 %1309, %v391
      %v1311 = vpop.permute.xlu0 %1310
      %1313 = vset.pattern.permute.xlu0 22
      %1314 = vperm.xlu0 %1313, %v392
      %v1315 = vpop.permute.xlu0 %1314
      %v1317 = vmul.f32 %v1311, %v393
      %v1318 = vmul.f32 %v1311, %v394
      %v1319 = vmul.f32 %v1315, %v395
      %v1320 = vmul.f32 %v1315, %v396
      %v1321 = vadd.f32 %v1317, %v1319
      %v1322 = vrot.slane %v1321, 4
      %v1323 = vadd.f32 %v1321, %v1322
      %v1324 = vrot.slane %v1323, 2
      %v1325 = vadd.f32 %v1323, %v1324
      %v1326 = vrot.slane %v1325, 1
      %v1327 = vadd.f32 %v1325, %v1326
      %v1328 = vadd.f32 %v1318, %v1320
      %v1329 = vrot.slane %v1328, 4
      %v1330 = vadd.f32 %v1328, %v1329
      %v1331 = vrot.slane %v1330, 2
      %v1332 = vadd.f32 %v1330, %v1331
      %v1333 = vrot.slane %v1332, 1
      %v1334 = vadd.f32 %v1332, %v1333
      %1335 = vrot.lane.b32.xlu0 %v1327, 16
      %v1336 = vpop.permute.xlu0 %1335
      %1337 = vrot.lane.b32.xlu0 %v1334, 16
      %v1338 = vpop.permute.xlu0 %1337
      %v1339 = vsel %vm473, %v1336, %v1338
      %v1340 = vsel %vm473, %v1338, %v1336
      %v1343 = vrot.slane %v1339, 7
      %v1344 = vsel %vm233, %v1340, %v1343
      %v1346 = vmul.f32 %v468, %v1344
      %v1347 = vadd.f32 %v1308, %v1346
      %1348 = vset.pattern.permute.xlu0 23
      %1349 = vperm.xlu0 %1348, %v391
      %v1350 = vpop.permute.xlu0 %1349
      %1352 = vset.pattern.permute.xlu0 23
      %1353 = vperm.xlu0 %1352, %v392
      %v1354 = vpop.permute.xlu0 %1353
      %v1356 = vmul.f32 %v1350, %v393
      %v1357 = vmul.f32 %v1350, %v394
      %v1358 = vmul.f32 %v1354, %v395
      %v1359 = vmul.f32 %v1354, %v396
      %v1360 = vadd.f32 %v1356, %v1358
      %v1361 = vrot.slane %v1360, 4
      %v1362 = vadd.f32 %v1360, %v1361
      %v1363 = vrot.slane %v1362, 2
      %v1364 = vadd.f32 %v1362, %v1363
      %v1365 = vrot.slane %v1364, 1
      %v1366 = vadd.f32 %v1364, %v1365
      %v1367 = vadd.f32 %v1357, %v1359
      %v1368 = vrot.slane %v1367, 4
      %v1369 = vadd.f32 %v1367, %v1368
      %v1370 = vrot.slane %v1369, 2
      %v1371 = vadd.f32 %v1369, %v1370
      %v1372 = vrot.slane %v1371, 1
      %v1373 = vadd.f32 %v1371, %v1372
      %1374 = vrot.lane.b32.xlu0 %v1366, 8
      %v1375 = vpop.permute.xlu0 %1374
      %1376 = vrot.lane.b32.xlu0 %v1373, 8
      %v1377 = vpop.permute.xlu0 %1376
      %v1378 = vsel %vm515, %v1375, %v1377
      %v1379 = vsel %vm515, %v1377, %v1375
      %v1382 = vrot.slane %v1378, 7
      %v1383 = vsel %vm233, %v1379, %v1382
      %v1385 = vmul.f32 %v510, %v1383
      %v1386 = vadd.f32 %v1347, %v1385
      %1387 = vset.pattern.permute.xlu0 24
      %1388 = vperm.xlu0 %1387, %v391
      %v1389 = vpop.permute.xlu0 %1388
      %1391 = vset.pattern.permute.xlu0 24
      %1392 = vperm.xlu0 %1391, %v392
      %v1393 = vpop.permute.xlu0 %1392
      %v1395 = vmul.f32 %v1389, %v393
      %v1396 = vmul.f32 %v1389, %v394
      %v1397 = vmul.f32 %v1393, %v395
      %v1398 = vmul.f32 %v1393, %v396
      %v1399 = vadd.f32 %v1395, %v1397
      %v1400 = vrot.slane %v1399, 4
      %v1401 = vadd.f32 %v1399, %v1400
      %v1402 = vrot.slane %v1401, 2
      %v1403 = vadd.f32 %v1401, %v1402
      %v1404 = vrot.slane %v1403, 1
      %v1405 = vadd.f32 %v1403, %v1404
      %v1406 = vadd.f32 %v1396, %v1398
      %v1407 = vrot.slane %v1406, 4
      %v1408 = vadd.f32 %v1406, %v1407
      %v1409 = vrot.slane %v1408, 2
      %v1410 = vadd.f32 %v1408, %v1409
      %v1411 = vrot.slane %v1410, 1
      %v1412 = vadd.f32 %v1410, %v1411
      %v1415 = vrot.slane %v1412, 7
      %v1416 = vsel %vm233, %v1405, %v1415
      %v1418 = vmul.f32 %v552, %v1416
      %v1419 = vadd.f32 %v1386, %v1418
      %1420 = vset.pattern.permute.xlu0 25
      %1421 = vperm.xlu0 %1420, %v391
      %v1422 = vpop.permute.xlu0 %1421
      %1424 = vset.pattern.permute.xlu0 25
      %1425 = vperm.xlu0 %1424, %v392
      %v1426 = vpop.permute.xlu0 %1425
      %v1428 = vmul.f32 %v1422, %v393
      %v1429 = vmul.f32 %v1422, %v394
      %v1430 = vmul.f32 %v1426, %v395
      %v1431 = vmul.f32 %v1426, %v396
      %v1432 = vadd.f32 %v1428, %v1430
      %v1433 = vrot.slane %v1432, 4
      %v1434 = vadd.f32 %v1432, %v1433
      %v1435 = vrot.slane %v1434, 2
      %v1436 = vadd.f32 %v1434, %v1435
      %v1437 = vrot.slane %v1436, 1
      %v1438 = vadd.f32 %v1436, %v1437
      %v1439 = vadd.f32 %v1429, %v1431
      %v1440 = vrot.slane %v1439, 4
      %v1441 = vadd.f32 %v1439, %v1440
      %v1442 = vrot.slane %v1441, 2
      %v1443 = vadd.f32 %v1441, %v1442
      %v1444 = vrot.slane %v1443, 1
      %v1445 = vadd.f32 %v1443, %v1444
      %1446 = vrot.lane.b32.xlu0 %v1438, 120
      %v1447 = vpop.permute.xlu0 %1446
      %1448 = vrot.lane.b32.xlu0 %v1445, 120
      %v1449 = vpop.permute.xlu0 %1448
      %v1450 = vsel %vm592, %v1447, %v1449
      %v1451 = vsel %vm592, %v1449, %v1447
      %v1454 = vrot.slane %v1451, 7
      %v1455 = vsel %vm233, %v1450, %v1454
      %v1457 = vmul.f32 %v587, %v1455
      %v1458 = vadd.f32 %v1419, %v1457
      %1459 = vset.pattern.permute.xlu0 26
      %1460 = vperm.xlu0 %1459, %v391
      %v1461 = vpop.permute.xlu0 %1460
      %1463 = vset.pattern.permute.xlu0 26
      %1464 = vperm.xlu0 %1463, %v392
      %v1465 = vpop.permute.xlu0 %1464
      %v1467 = vmul.f32 %v1461, %v393
      %v1468 = vmul.f32 %v1461, %v394
      %v1469 = vmul.f32 %v1465, %v395
      %v1470 = vmul.f32 %v1465, %v396
      %v1471 = vadd.f32 %v1467, %v1469
      %v1472 = vrot.slane %v1471, 4
      %v1473 = vadd.f32 %v1471, %v1472
      %v1474 = vrot.slane %v1473, 2
      %v1475 = vadd.f32 %v1473, %v1474
      %v1476 = vrot.slane %v1475, 1
      %v1477 = vadd.f32 %v1475, %v1476
      %v1478 = vadd.f32 %v1468, %v1470
      %v1479 = vrot.slane %v1478, 4
      %v1480 = vadd.f32 %v1478, %v1479
      %v1481 = vrot.slane %v1480, 2
      %v1482 = vadd.f32 %v1480, %v1481
      %v1483 = vrot.slane %v1482, 1
      %v1484 = vadd.f32 %v1482, %v1483
      %1485 = vrot.lane.b32.xlu0 %v1477, 112
      %v1486 = vpop.permute.xlu0 %1485
      %1487 = vrot.lane.b32.xlu0 %v1484, 112
      %v1488 = vpop.permute.xlu0 %1487
      %v1489 = vsel %vm634, %v1486, %v1488
      %v1490 = vsel %vm634, %v1488, %v1486
      %v1493 = vrot.slane %v1490, 7
      %v1494 = vsel %vm233, %v1489, %v1493
      %v1496 = vmul.f32 %v629, %v1494
      %v1497 = vadd.f32 %v1458, %v1496
      %1498 = vset.pattern.permute.xlu0 27
      %1499 = vperm.xlu0 %1498, %v391
      %v1500 = vpop.permute.xlu0 %1499
      %1502 = vset.pattern.permute.xlu0 27
      %1503 = vperm.xlu0 %1502, %v392
      %v1504 = vpop.permute.xlu0 %1503
      %v1506 = vmul.f32 %v1500, %v393
      %v1507 = vmul.f32 %v1500, %v394
      %v1508 = vmul.f32 %v1504, %v395
      %v1509 = vmul.f32 %v1504, %v396
      %v1510 = vadd.f32 %v1506, %v1508
      %v1511 = vrot.slane %v1510, 4
      %v1512 = vadd.f32 %v1510, %v1511
      %v1513 = vrot.slane %v1512, 2
      %v1514 = vadd.f32 %v1512, %v1513
      %v1515 = vrot.slane %v1514, 1
      %v1516 = vadd.f32 %v1514, %v1515
      %v1517 = vadd.f32 %v1507, %v1509
      %v1518 = vrot.slane %v1517, 4
      %v1519 = vadd.f32 %v1517, %v1518
      %v1520 = vrot.slane %v1519, 2
      %v1521 = vadd.f32 %v1519, %v1520
      %v1522 = vrot.slane %v1521, 1
      %v1523 = vadd.f32 %v1521, %v1522
      %1524 = vrot.lane.b32.xlu0 %v1516, 104
      %v1525 = vpop.permute.xlu0 %1524
      %1526 = vrot.lane.b32.xlu0 %v1523, 104
      %v1527 = vpop.permute.xlu0 %1526
      %v1528 = vsel %vm676, %v1525, %v1527
      %v1529 = vsel %vm676, %v1527, %v1525
      %v1532 = vrot.slane %v1529, 7
      %v1533 = vsel %vm233, %v1528, %v1532
      %v1535 = vmul.f32 %v671, %v1533
      %v1536 = vadd.f32 %v1497, %v1535
      %s1537 = scalar_lea.vmem %s1, 3
      %v1538 = vld [vmem:[%s1537] ss:$8 sm:$0x3]
      %v1539 = vmul.f32 %v1538, %v1536
      %v1540 = vadd.f32 %v1269, %v1539
      %1541 = vset.pattern.permute.xlu0 28
      %1542 = vperm.xlu0 %1541, %v391
      %v1543 = vpop.permute.xlu0 %1542
      %1545 = vset.pattern.permute.xlu0 28
      %1546 = vperm.xlu0 %1545, %v392
      %v1547 = vpop.permute.xlu0 %1546
      %v1549 = vmul.f32 %v1543, %v393
      %v1550 = vmul.f32 %v1543, %v394
      %v1551 = vmul.f32 %v1547, %v395
      %v1552 = vmul.f32 %v1547, %v396
      %v1553 = vadd.f32 %v1549, %v1551
      %v1554 = vrot.slane %v1553, 4
      %v1555 = vadd.f32 %v1553, %v1554
      %v1556 = vrot.slane %v1555, 2
      %v1557 = vadd.f32 %v1555, %v1556
      %v1558 = vrot.slane %v1557, 1
      %v1559 = vadd.f32 %v1557, %v1558
      %v1560 = vadd.f32 %v1550, %v1552
      %v1561 = vrot.slane %v1560, 4
      %v1562 = vadd.f32 %v1560, %v1561
      %v1563 = vrot.slane %v1562, 2
      %v1564 = vadd.f32 %v1562, %v1563
      %v1565 = vrot.slane %v1564, 1
      %v1566 = vadd.f32 %v1564, %v1565
      %1567 = vrot.lane.b32.xlu0 %v1559, 24
      %v1568 = vpop.permute.xlu0 %1567
      %1569 = vrot.lane.b32.xlu0 %v1566, 24
      %v1570 = vpop.permute.xlu0 %1569
      %v1571 = vsel %vm431, %v1568, %v1570
      %v1572 = vsel %vm431, %v1570, %v1568
      %v1575 = vrot.slane %v1571, 7
      %v1576 = vsel %vm233, %v1572, %v1575
      %v1578 = vmul.f32 %v426, %v1576
      %v1579 = vadd.f32 %v1578, 0.0
      %1580 = vset.pattern.permute.xlu0 29
      %1581 = vperm.xlu0 %1580, %v391
      %v1582 = vpop.permute.xlu0 %1581
      %1584 = vset.pattern.permute.xlu0 29
      %1585 = vperm.xlu0 %1584, %v392
      %v1586 = vpop.permute.xlu0 %1585
      %v1588 = vmul.f32 %v1582, %v393
      %v1589 = vmul.f32 %v1582, %v394
      %v1590 = vmul.f32 %v1586, %v395
      %v1591 = vmul.f32 %v1586, %v396
      %v1592 = vadd.f32 %v1588, %v1590
      %v1593 = vrot.slane %v1592, 4
      %v1594 = vadd.f32 %v1592, %v1593
      %v1595 = vrot.slane %v1594, 2
      %v1596 = vadd.f32 %v1594, %v1595
      %v1597 = vrot.slane %v1596, 1
      %v1598 = vadd.f32 %v1596, %v1597
      %v1599 = vadd.f32 %v1589, %v1591
      %v1600 = vrot.slane %v1599, 4
      %v1601 = vadd.f32 %v1599, %v1600
      %v1602 = vrot.slane %v1601, 2
      %v1603 = vadd.f32 %v1601, %v1602
      %v1604 = vrot.slane %v1603, 1
      %v1605 = vadd.f32 %v1603, %v1604
      %1606 = vrot.lane.b32.xlu0 %v1598, 16
      %v1607 = vpop.permute.xlu0 %1606
      %1608 = vrot.lane.b32.xlu0 %v1605, 16
      %v1609 = vpop.permute.xlu0 %1608
      %v1610 = vsel %vm473, %v1607, %v1609
      %v1611 = vsel %vm473, %v1609, %v1607
      %v1614 = vrot.slane %v1610, 7
      %v1615 = vsel %vm233, %v1611, %v1614
      %v1617 = vmul.f32 %v468, %v1615
      %v1618 = vadd.f32 %v1579, %v1617
      %1619 = vset.pattern.permute.xlu0 30
      %1620 = vperm.xlu0 %1619, %v391
      %v1621 = vpop.permute.xlu0 %1620
      %1623 = vset.pattern.permute.xlu0 30
      %1624 = vperm.xlu0 %1623, %v392
      %v1625 = vpop.permute.xlu0 %1624
      %v1627 = vmul.f32 %v1621, %v393
      %v1628 = vmul.f32 %v1621, %v394
      %v1629 = vmul.f32 %v1625, %v395
      %v1630 = vmul.f32 %v1625, %v396
      %v1631 = vadd.f32 %v1627, %v1629
      %v1632 = vrot.slane %v1631, 4
      %v1633 = vadd.f32 %v1631, %v1632
      %v1634 = vrot.slane %v1633, 2
      %v1635 = vadd.f32 %v1633, %v1634
      %v1636 = vrot.slane %v1635, 1
      %v1637 = vadd.f32 %v1635, %v1636
      %v1638 = vadd.f32 %v1628, %v1630
      %v1639 = vrot.slane %v1638, 4
      %v1640 = vadd.f32 %v1638, %v1639
      %v1641 = vrot.slane %v1640, 2
      %v1642 = vadd.f32 %v1640, %v1641
      %v1643 = vrot.slane %v1642, 1
      %v1644 = vadd.f32 %v1642, %v1643
      %1645 = vrot.lane.b32.xlu0 %v1637, 8
      %v1646 = vpop.permute.xlu0 %1645
      %1647 = vrot.lane.b32.xlu0 %v1644, 8
      %v1648 = vpop.permute.xlu0 %1647
      %v1649 = vsel %vm515, %v1646, %v1648
      %v1650 = vsel %vm515, %v1648, %v1646
      %v1653 = vrot.slane %v1649, 7
      %v1654 = vsel %vm233, %v1650, %v1653
      %v1656 = vmul.f32 %v510, %v1654
      %v1657 = vadd.f32 %v1618, %v1656
      %1658 = vset.pattern.permute.xlu0 31
      %1659 = vperm.xlu0 %1658, %v391
      %v1660 = vpop.permute.xlu0 %1659
      %1662 = vset.pattern.permute.xlu0 31
      %1663 = vperm.xlu0 %1662, %v392
      %v1664 = vpop.permute.xlu0 %1663
      %v1666 = vmul.f32 %v1660, %v393
      %v1667 = vmul.f32 %v1660, %v394
      %v1668 = vmul.f32 %v1664, %v395
      %v1669 = vmul.f32 %v1664, %v396
      %v1670 = vadd.f32 %v1666, %v1668
      %v1671 = vrot.slane %v1670, 4
      %v1672 = vadd.f32 %v1670, %v1671
      %v1673 = vrot.slane %v1672, 2
      %v1674 = vadd.f32 %v1672, %v1673
      %v1675 = vrot.slane %v1674, 1
      %v1676 = vadd.f32 %v1674, %v1675
      %v1677 = vadd.f32 %v1667, %v1669
      %v1678 = vrot.slane %v1677, 4
      %v1679 = vadd.f32 %v1677, %v1678
      %v1680 = vrot.slane %v1679, 2
      %v1681 = vadd.f32 %v1679, %v1680
      %v1682 = vrot.slane %v1681, 1
      %v1683 = vadd.f32 %v1681, %v1682
      %v1686 = vrot.slane %v1683, 7
      %v1687 = vsel %vm233, %v1676, %v1686
      %v1689 = vmul.f32 %v552, %v1687
      %v1690 = vadd.f32 %v1657, %v1689
      %1691 = vset.pattern.permute.xlu0 32
      %1692 = vperm.xlu0 %1691, %v391
      %v1693 = vpop.permute.xlu0 %1692
      %1695 = vset.pattern.permute.xlu0 32
      %1696 = vperm.xlu0 %1695, %v392
      %v1697 = vpop.permute.xlu0 %1696
      %v1699 = vmul.f32 %v1693, %v393
      %v1700 = vmul.f32 %v1693, %v394
      %v1701 = vmul.f32 %v1697, %v395
      %v1702 = vmul.f32 %v1697, %v396
      %v1703 = vadd.f32 %v1699, %v1701
      %v1704 = vrot.slane %v1703, 4
      %v1705 = vadd.f32 %v1703, %v1704
      %v1706 = vrot.slane %v1705, 2
      %v1707 = vadd.f32 %v1705, %v1706
      %v1708 = vrot.slane %v1707, 1
      %v1709 = vadd.f32 %v1707, %v1708
      %v1710 = vadd.f32 %v1700, %v1702
      %v1711 = vrot.slane %v1710, 4
      %v1712 = vadd.f32 %v1710, %v1711
      %v1713 = vrot.slane %v1712, 2
      %v1714 = vadd.f32 %v1712, %v1713
      %v1715 = vrot.slane %v1714, 1
      %v1716 = vadd.f32 %v1714, %v1715
      %1717 = vrot.lane.b32.xlu0 %v1709, 120
      %v1718 = vpop.permute.xlu0 %1717
      %1719 = vrot.lane.b32.xlu0 %v1716, 120
      %v1720 = vpop.permute.xlu0 %1719
      %v1721 = vsel %vm592, %v1718, %v1720
      %v1722 = vsel %vm592, %v1720, %v1718
      %v1725 = vrot.slane %v1722, 7
      %v1726 = vsel %vm233, %v1721, %v1725
      %v1728 = vmul.f32 %v587, %v1726
      %v1729 = vadd.f32 %v1690, %v1728
      %1730 = vset.pattern.permute.xlu0 33
      %1731 = vperm.xlu0 %1730, %v391
      %v1732 = vpop.permute.xlu0 %1731
      %1734 = vset.pattern.permute.xlu0 33
      %1735 = vperm.xlu0 %1734, %v392
      %v1736 = vpop.permute.xlu0 %1735
      %v1738 = vmul.f32 %v1732, %v393
      %v1739 = vmul.f32 %v1732, %v394
      %v1740 = vmul.f32 %v1736, %v395
      %v1741 = vmul.f32 %v1736, %v396
      %v1742 = vadd.f32 %v1738, %v1740
      %v1743 = vrot.slane %v1742, 4
      %v1744 = vadd.f32 %v1742, %v1743
      %v1745 = vrot.slane %v1744, 2
      %v1746 = vadd.f32 %v1744, %v1745
      %v1747 = vrot.slane %v1746, 1
      %v1748 = vadd.f32 %v1746, %v1747
      %v1749 = vadd.f32 %v1739, %v1741
      %v1750 = vrot.slane %v1749, 4
      %v1751 = vadd.f32 %v1749, %v1750
      %v1752 = vrot.slane %v1751, 2
      %v1753 = vadd.f32 %v1751, %v1752
      %v1754 = vrot.slane %v1753, 1
      %v1755 = vadd.f32 %v1753, %v1754
      %1756 = vrot.lane.b32.xlu0 %v1748, 112
      %v1757 = vpop.permute.xlu0 %1756
      %1758 = vrot.lane.b32.xlu0 %v1755, 112
      %v1759 = vpop.permute.xlu0 %1758
      %v1760 = vsel %vm634, %v1757, %v1759
      %v1761 = vsel %vm634, %v1759, %v1757
      %v1764 = vrot.slane %v1761, 7
      %v1765 = vsel %vm233, %v1760, %v1764
      %v1767 = vmul.f32 %v629, %v1765
      %v1768 = vadd.f32 %v1729, %v1767
      %1769 = vset.pattern.permute.xlu0 34
      %1770 = vperm.xlu0 %1769, %v391
      %v1771 = vpop.permute.xlu0 %1770
      %1773 = vset.pattern.permute.xlu0 34
      %1774 = vperm.xlu0 %1773, %v392
      %v1775 = vpop.permute.xlu0 %1774
      %v1777 = vmul.f32 %v1771, %v393
      %v1778 = vmul.f32 %v1771, %v394
      %v1779 = vmul.f32 %v1775, %v395
      %v1780 = vmul.f32 %v1775, %v396
      %v1781 = vadd.f32 %v1777, %v1779
      %v1782 = vrot.slane %v1781, 4
      %v1783 = vadd.f32 %v1781, %v1782
      %v1784 = vrot.slane %v1783, 2
      %v1785 = vadd.f32 %v1783, %v1784
      %v1786 = vrot.slane %v1785, 1
      %v1787 = vadd.f32 %v1785, %v1786
      %v1788 = vadd.f32 %v1778, %v1780
      %v1789 = vrot.slane %v1788, 4
      %v1790 = vadd.f32 %v1788, %v1789
      %v1791 = vrot.slane %v1790, 2
      %v1792 = vadd.f32 %v1790, %v1791
      %v1793 = vrot.slane %v1792, 1
      %v1794 = vadd.f32 %v1792, %v1793
      %1795 = vrot.lane.b32.xlu0 %v1787, 104
      %v1796 = vpop.permute.xlu0 %1795
      %1797 = vrot.lane.b32.xlu0 %v1794, 104
      %v1798 = vpop.permute.xlu0 %1797
      %v1799 = vsel %vm676, %v1796, %v1798
      %v1800 = vsel %vm676, %v1798, %v1796
      %v1803 = vrot.slane %v1800, 7
      %v1804 = vsel %vm233, %v1799, %v1803
      %v1806 = vmul.f32 %v671, %v1804
      %v1807 = vadd.f32 %v1768, %v1806
      %s1808 = scalar_lea.vmem %s1, 4
      %v1809 = vld [vmem:[%s1808] ss:$8 sm:$0x3]
      %v1811 = vperm.slane %v1807, 0
      %v1812 = vperm.slane %v1807, 1
      %1815 = vrot.lane.b32.xlu0 %v1811, 64
      %v1816 = vpop.permute.xlu0 %1815
      %1817 = vrot.lane.b32.xlu0 %v1812, 64
      %v1818 = vpop.permute.xlu0 %1817
      %v1819 = vsel %vm696, %v1816, %v1818
      %v1820 = vsel %vm696, %v1818, %v1816
      %v1823 = vrot.slane %v1820, 7
      %v1824 = vsel %vm233, %v1819, %v1823
      %v1826 = vmul.f32 %v1809, %v1824
      %v1827 = vadd.f32 %v1540, %v1826
      %1828 = vset.pattern.permute.xlu0 35
      %1829 = vperm.xlu0 %1828, %v391
      %v1830 = vpop.permute.xlu0 %1829
      %1832 = vset.pattern.permute.xlu0 35
      %1833 = vperm.xlu0 %1832, %v392
      %v1834 = vpop.permute.xlu0 %1833
      %v1836 = vmul.f32 %v1830, %v393
      %v1837 = vmul.f32 %v1830, %v394
      %v1838 = vmul.f32 %v1834, %v395
      %v1839 = vmul.f32 %v1834, %v396
      %v1840 = vadd.f32 %v1836, %v1838
      %v1841 = vrot.slane %v1840, 4
      %v1842 = vadd.f32 %v1840, %v1841
      %v1843 = vrot.slane %v1842, 2
      %v1844 = vadd.f32 %v1842, %v1843
      %v1845 = vrot.slane %v1844, 1
      %v1846 = vadd.f32 %v1844, %v1845
      %v1847 = vadd.f32 %v1837, %v1839
      %v1848 = vrot.slane %v1847, 4
      %v1849 = vadd.f32 %v1847, %v1848
      %v1850 = vrot.slane %v1849, 2
      %v1851 = vadd.f32 %v1849, %v1850
      %v1852 = vrot.slane %v1851, 1
      %v1853 = vadd.f32 %v1851, %v1852
      %1854 = vrot.lane.b32.xlu0 %v1846, 24
      %v1855 = vpop.permute.xlu0 %1854
      %1856 = vrot.lane.b32.xlu0 %v1853, 24
      %v1857 = vpop.permute.xlu0 %1856
      %v1858 = vsel %vm431, %v1855, %v1857
      %v1859 = vsel %vm431, %v1857, %v1855
      %v1862 = vrot.slane %v1858, 7
      %v1863 = vsel %vm233, %v1859, %v1862
      %v1865 = vmul.f32 %v426, %v1863
      %v1866 = vadd.f32 %v1865, 0.0
      %1867 = vset.pattern.permute.xlu0 36
      %1868 = vperm.xlu0 %1867, %v391
      %v1869 = vpop.permute.xlu0 %1868
      %1871 = vset.pattern.permute.xlu0 36
      %1872 = vperm.xlu0 %1871, %v392
      %v1873 = vpop.permute.xlu0 %1872
      %v1875 = vmul.f32 %v1869, %v393
      %v1876 = vmul.f32 %v1869, %v394
      %v1877 = vmul.f32 %v1873, %v395
      %v1878 = vmul.f32 %v1873, %v396
      %v1879 = vadd.f32 %v1875, %v1877
      %v1880 = vrot.slane %v1879, 4
      %v1881 = vadd.f32 %v1879, %v1880
      %v1882 = vrot.slane %v1881, 2
      %v1883 = vadd.f32 %v1881, %v1882
      %v1884 = vrot.slane %v1883, 1
      %v1885 = vadd.f32 %v1883, %v1884
      %v1886 = vadd.f32 %v1876, %v1878
      %v1887 = vrot.slane %v1886, 4
      %v1888 = vadd.f32 %v1886, %v1887
      %v1889 = vrot.slane %v1888, 2
      %v1890 = vadd.f32 %v1888, %v1889
      %v1891 = vrot.slane %v1890, 1
      %v1892 = vadd.f32 %v1890, %v1891
      %1893 = vrot.lane.b32.xlu0 %v1885, 16
      %v1894 = vpop.permute.xlu0 %1893
      %1895 = vrot.lane.b32.xlu0 %v1892, 16
      %v1896 = vpop.permute.xlu0 %1895
      %v1897 = vsel %vm473, %v1894, %v1896
      %v1898 = vsel %vm473, %v1896, %v1894
      %v1901 = vrot.slane %v1897, 7
      %v1902 = vsel %vm233, %v1898, %v1901
      %v1904 = vmul.f32 %v468, %v1902
      %v1905 = vadd.f32 %v1866, %v1904
      %1906 = vset.pattern.permute.xlu0 37
      %1907 = vperm.xlu0 %1906, %v391
      %v1908 = vpop.permute.xlu0 %1907
      %1910 = vset.pattern.permute.xlu0 37
      %1911 = vperm.xlu0 %1910, %v392
      %v1912 = vpop.permute.xlu0 %1911
      %v1914 = vmul.f32 %v1908, %v393
      %v1915 = vmul.f32 %v1908, %v394
      %v1916 = vmul.f32 %v1912, %v395
      %v1917 = vmul.f32 %v1912, %v396
      %v1918 = vadd.f32 %v1914, %v1916
      %v1919 = vrot.slane %v1918, 4
      %v1920 = vadd.f32 %v1918, %v1919
      %v1921 = vrot.slane %v1920, 2
      %v1922 = vadd.f32 %v1920, %v1921
      %v1923 = vrot.slane %v1922, 1
      %v1924 = vadd.f32 %v1922, %v1923
      %v1925 = vadd.f32 %v1915, %v1917
      %v1926 = vrot.slane %v1925, 4
      %v1927 = vadd.f32 %v1925, %v1926
      %v1928 = vrot.slane %v1927, 2
      %v1929 = vadd.f32 %v1927, %v1928
      %v1930 = vrot.slane %v1929, 1
      %v1931 = vadd.f32 %v1929, %v1930
      %1932 = vrot.lane.b32.xlu0 %v1924, 8
      %v1933 = vpop.permute.xlu0 %1932
      %1934 = vrot.lane.b32.xlu0 %v1931, 8
      %v1935 = vpop.permute.xlu0 %1934
      %v1936 = vsel %vm515, %v1933, %v1935
      %v1937 = vsel %vm515, %v1935, %v1933
      %v1940 = vrot.slane %v1936, 7
      %v1941 = vsel %vm233, %v1937, %v1940
      %v1943 = vmul.f32 %v510, %v1941
      %v1944 = vadd.f32 %v1905, %v1943
      %1945 = vset.pattern.permute.xlu0 38
      %1946 = vperm.xlu0 %1945, %v391
      %v1947 = vpop.permute.xlu0 %1946
      %1949 = vset.pattern.permute.xlu0 38
      %1950 = vperm.xlu0 %1949, %v392
      %v1951 = vpop.permute.xlu0 %1950
      %v1953 = vmul.f32 %v1947, %v393
      %v1954 = vmul.f32 %v1947, %v394
      %v1955 = vmul.f32 %v1951, %v395
      %v1956 = vmul.f32 %v1951, %v396
      %v1957 = vadd.f32 %v1953, %v1955
      %v1958 = vrot.slane %v1957, 4
      %v1959 = vadd.f32 %v1957, %v1958
      %v1960 = vrot.slane %v1959, 2
      %v1961 = vadd.f32 %v1959, %v1960
      %v1962 = vrot.slane %v1961, 1
      %v1963 = vadd.f32 %v1961, %v1962
      %v1964 = vadd.f32 %v1954, %v1956
      %v1965 = vrot.slane %v1964, 4
      %v1966 = vadd.f32 %v1964, %v1965
      %v1967 = vrot.slane %v1966, 2
      %v1968 = vadd.f32 %v1966, %v1967
      %v1969 = vrot.slane %v1968, 1
      %v1970 = vadd.f32 %v1968, %v1969
      %v1973 = vrot.slane %v1970, 7
      %v1974 = vsel %vm233, %v1963, %v1973
      %v1976 = vmul.f32 %v552, %v1974
      %v1977 = vadd.f32 %v1944, %v1976
      %1978 = vset.pattern.permute.xlu0 39
      %1979 = vperm.xlu0 %1978, %v391
      %v1980 = vpop.permute.xlu0 %1979
      %1982 = vset.pattern.permute.xlu0 39
      %1983 = vperm.xlu0 %1982, %v392
      %v1984 = vpop.permute.xlu0 %1983
      %v1986 = vmul.f32 %v1980, %v393
      %v1987 = vmul.f32 %v1980, %v394
      %v1988 = vmul.f32 %v1984, %v395
      %v1989 = vmul.f32 %v1984, %v396
      %v1990 = vadd.f32 %v1986, %v1988
      %v1991 = vrot.slane %v1990, 4
      %v1992 = vadd.f32 %v1990, %v1991
      %v1993 = vrot.slane %v1992, 2
      %v1994 = vadd.f32 %v1992, %v1993
      %v1995 = vrot.slane %v1994, 1
      %v1996 = vadd.f32 %v1994, %v1995
      %v1997 = vadd.f32 %v1987, %v1989
      %v1998 = vrot.slane %v1997, 4
      %v1999 = vadd.f32 %v1997, %v1998
      %v2000 = vrot.slane %v1999, 2
      %v2001 = vadd.f32 %v1999, %v2000
      %v2002 = vrot.slane %v2001, 1
      %v2003 = vadd.f32 %v2001, %v2002
      %2004 = vrot.lane.b32.xlu0 %v1996, 120
      %v2005 = vpop.permute.xlu0 %2004
      %2006 = vrot.lane.b32.xlu0 %v2003, 120
      %v2007 = vpop.permute.xlu0 %2006
      %v2008 = vsel %vm592, %v2005, %v2007
      %v2009 = vsel %vm592, %v2007, %v2005
      %v2012 = vrot.slane %v2009, 7
      %v2013 = vsel %vm233, %v2008, %v2012
      %v2015 = vmul.f32 %v587, %v2013
      %v2016 = vadd.f32 %v1977, %v2015
      %2017 = vset.pattern.permute.xlu0 40
      %2018 = vperm.xlu0 %2017, %v391
      %v2019 = vpop.permute.xlu0 %2018
      %2021 = vset.pattern.permute.xlu0 40
      %2022 = vperm.xlu0 %2021, %v392
      %v2023 = vpop.permute.xlu0 %2022
      %v2025 = vmul.f32 %v2019, %v393
      %v2026 = vmul.f32 %v2019, %v394
      %v2027 = vmul.f32 %v2023, %v395
      %v2028 = vmul.f32 %v2023, %v396
      %v2029 = vadd.f32 %v2025, %v2027
      %v2030 = vrot.slane %v2029, 4
      %v2031 = vadd.f32 %v2029, %v2030
      %v2032 = vrot.slane %v2031, 2
      %v2033 = vadd.f32 %v2031, %v2032
      %v2034 = vrot.slane %v2033, 1
      %v2035 = vadd.f32 %v2033, %v2034
      %v2036 = vadd.f32 %v2026, %v2028
      %v2037 = vrot.slane %v2036, 4
      %v2038 = vadd.f32 %v2036, %v2037
      %v2039 = vrot.slane %v2038, 2
      %v2040 = vadd.f32 %v2038, %v2039
      %v2041 = vrot.slane %v2040, 1
      %v2042 = vadd.f32 %v2040, %v2041
      %2043 = vrot.lane.b32.xlu0 %v2035, 112
      %v2044 = vpop.permute.xlu0 %2043
      %2045 = vrot.lane.b32.xlu0 %v2042, 112
      %v2046 = vpop.permute.xlu0 %2045
      %v2047 = vsel %vm634, %v2044, %v2046
      %v2048 = vsel %vm634, %v2046, %v2044
      %v2051 = vrot.slane %v2048, 7
      %v2052 = vsel %vm233, %v2047, %v2051
      %v2054 = vmul.f32 %v629, %v2052
      %v2055 = vadd.f32 %v2016, %v2054
      %2056 = vset.pattern.permute.xlu0 41
      %2057 = vperm.xlu0 %2056, %v391
      %v2058 = vpop.permute.xlu0 %2057
      %2060 = vset.pattern.permute.xlu0 41
      %2061 = vperm.xlu0 %2060, %v392
      %v2062 = vpop.permute.xlu0 %2061
      %v2064 = vmul.f32 %v2058, %v393
      %v2065 = vmul.f32 %v2058, %v394
      %v2066 = vmul.f32 %v2062, %v395
      %v2067 = vmul.f32 %v2062, %v396
      %v2068 = vadd.f32 %v2064, %v2066
      %v2069 = vrot.slane %v2068, 4
      %v2070 = vadd.f32 %v2068, %v2069
      %v2071 = vrot.slane %v2070, 2
      %v2072 = vadd.f32 %v2070, %v2071
      %v2073 = vrot.slane %v2072, 1
      %v2074 = vadd.f32 %v2072, %v2073
      %v2075 = vadd.f32 %v2065, %v2067
      %v2076 = vrot.slane %v2075, 4
      %v2077 = vadd.f32 %v2075, %v2076
      %v2078 = vrot.slane %v2077, 2
      %v2079 = vadd.f32 %v2077, %v2078
      %v2080 = vrot.slane %v2079, 1
      %v2081 = vadd.f32 %v2079, %v2080
      %2082 = vrot.lane.b32.xlu0 %v2074, 104
      %v2083 = vpop.permute.xlu0 %2082
      %2084 = vrot.lane.b32.xlu0 %v2081, 104
      %v2085 = vpop.permute.xlu0 %2084
      %v2086 = vsel %vm676, %v2083, %v2085
      %v2087 = vsel %vm676, %v2085, %v2083
      %v2090 = vrot.slane %v2087, 7
      %v2091 = vsel %vm233, %v2086, %v2090
      %v2093 = vmul.f32 %v671, %v2091
      %v2094 = vadd.f32 %v2055, %v2093
      %s2095 = scalar_lea.vmem %s1, 5
      %v2096 = vld [vmem:[%s2095] ss:$8 sm:$0x3]
      %v2098 = vperm.slane %v2094, 0
      %v2099 = vperm.slane %v2094, 1
      %v2100 = vrot.slane %v2098, 7
      %v2101 = vsel %vm233, %v2099, %v2100
      %v2103 = vmul.f32 %v2096, %v2101
      %v2104 = vadd.f32 %v1827, %v2103
      %2105 = vset.pattern.permute.xlu0 42
      %2106 = vperm.xlu0 %2105, %v391
      %v2107 = vpop.permute.xlu0 %2106
      %2109 = vset.pattern.permute.xlu0 42
      %2110 = vperm.xlu0 %2109, %v392
      %v2111 = vpop.permute.xlu0 %2110
      %v2113 = vmul.f32 %v2107, %v393
      %v2114 = vmul.f32 %v2107, %v394
      %v2115 = vmul.f32 %v2111, %v395
      %v2116 = vmul.f32 %v2111, %v396
      %v2117 = vadd.f32 %v2113, %v2115
      %v2118 = vrot.slane %v2117, 4
      %v2119 = vadd.f32 %v2117, %v2118
      %v2120 = vrot.slane %v2119, 2
      %v2121 = vadd.f32 %v2119, %v2120
      %v2122 = vrot.slane %v2121, 1
      %v2123 = vadd.f32 %v2121, %v2122
      %v2124 = vadd.f32 %v2114, %v2116
      %v2125 = vrot.slane %v2124, 4
      %v2126 = vadd.f32 %v2124, %v2125
      %v2127 = vrot.slane %v2126, 2
      %v2128 = vadd.f32 %v2126, %v2127
      %v2129 = vrot.slane %v2128, 1
      %v2130 = vadd.f32 %v2128, %v2129
      %2131 = vrot.lane.b32.xlu0 %v2123, 24
      %v2132 = vpop.permute.xlu0 %2131
      %2133 = vrot.lane.b32.xlu0 %v2130, 24
      %v2134 = vpop.permute.xlu0 %2133
      %v2135 = vsel %vm431, %v2132, %v2134
      %v2136 = vsel %vm431, %v2134, %v2132
      %v2139 = vrot.slane %v2135, 7
      %v2140 = vsel %vm233, %v2136, %v2139
      %v2142 = vmul.f32 %v426, %v2140
      %v2143 = vadd.f32 %v2142, 0.0
      %2144 = vset.pattern.permute.xlu0 43
      %2145 = vperm.xlu0 %2144, %v391
      %v2146 = vpop.permute.xlu0 %2145
      %2148 = vset.pattern.permute.xlu0 43
      %2149 = vperm.xlu0 %2148, %v392
      %v2150 = vpop.permute.xlu0 %2149
      %v2152 = vmul.f32 %v2146, %v393
      %v2153 = vmul.f32 %v2146, %v394
      %v2154 = vmul.f32 %v2150, %v395
      %v2155 = vmul.f32 %v2150, %v396
      %v2156 = vadd.f32 %v2152, %v2154
      %v2157 = vrot.slane %v2156, 4
      %v2158 = vadd.f32 %v2156, %v2157
      %v2159 = vrot.slane %v2158, 2
      %v2160 = vadd.f32 %v2158, %v2159
      %v2161 = vrot.slane %v2160, 1
      %v2162 = vadd.f32 %v2160, %v2161
      %v2163 = vadd.f32 %v2153, %v2155
      %v2164 = vrot.slane %v2163, 4
      %v2165 = vadd.f32 %v2163, %v2164
      %v2166 = vrot.slane %v2165, 2
      %v2167 = vadd.f32 %v2165, %v2166
      %v2168 = vrot.slane %v2167, 1
      %v2169 = vadd.f32 %v2167, %v2168
      %2170 = vrot.lane.b32.xlu0 %v2162, 16
      %v2171 = vpop.permute.xlu0 %2170
      %2172 = vrot.lane.b32.xlu0 %v2169, 16
      %v2173 = vpop.permute.xlu0 %2172
      %v2174 = vsel %vm473, %v2171, %v2173
      %v2175 = vsel %vm473, %v2173, %v2171
      %v2178 = vrot.slane %v2174, 7
      %v2179 = vsel %vm233, %v2175, %v2178
      %v2181 = vmul.f32 %v468, %v2179
      %v2182 = vadd.f32 %v2143, %v2181
      %2183 = vset.pattern.permute.xlu0 44
      %2184 = vperm.xlu0 %2183, %v391
      %v2185 = vpop.permute.xlu0 %2184
      %2187 = vset.pattern.permute.xlu0 44
      %2188 = vperm.xlu0 %2187, %v392
      %v2189 = vpop.permute.xlu0 %2188
      %v2191 = vmul.f32 %v2185, %v393
      %v2192 = vmul.f32 %v2185, %v394
      %v2193 = vmul.f32 %v2189, %v395
      %v2194 = vmul.f32 %v2189, %v396
      %v2195 = vadd.f32 %v2191, %v2193
      %v2196 = vrot.slane %v2195, 4
      %v2197 = vadd.f32 %v2195, %v2196
      %v2198 = vrot.slane %v2197, 2
      %v2199 = vadd.f32 %v2197, %v2198
      %v2200 = vrot.slane %v2199, 1
      %v2201 = vadd.f32 %v2199, %v2200
      %v2202 = vadd.f32 %v2192, %v2194
      %v2203 = vrot.slane %v2202, 4
      %v2204 = vadd.f32 %v2202, %v2203
      %v2205 = vrot.slane %v2204, 2
      %v2206 = vadd.f32 %v2204, %v2205
      %v2207 = vrot.slane %v2206, 1
      %v2208 = vadd.f32 %v2206, %v2207
      %2209 = vrot.lane.b32.xlu0 %v2201, 8
      %v2210 = vpop.permute.xlu0 %2209
      %2211 = vrot.lane.b32.xlu0 %v2208, 8
      %v2212 = vpop.permute.xlu0 %2211
      %v2213 = vsel %vm515, %v2210, %v2212
      %v2214 = vsel %vm515, %v2212, %v2210
      %v2217 = vrot.slane %v2213, 7
      %v2218 = vsel %vm233, %v2214, %v2217
      %v2220 = vmul.f32 %v510, %v2218
      %v2221 = vadd.f32 %v2182, %v2220
      %2222 = vset.pattern.permute.xlu0 45
      %2223 = vperm.xlu0 %2222, %v391
      %v2224 = vpop.permute.xlu0 %2223
      %2226 = vset.pattern.permute.xlu0 45
      %2227 = vperm.xlu0 %2226, %v392
      %v2228 = vpop.permute.xlu0 %2227
      %v2230 = vmul.f32 %v2224, %v393
      %v2231 = vmul.f32 %v2224, %v394
      %v2232 = vmul.f32 %v2228, %v395
      %v2233 = vmul.f32 %v2228, %v396
      %v2234 = vadd.f32 %v2230, %v2232
      %v2235 = vrot.slane %v2234, 4
      %v2236 = vadd.f32 %v2234, %v2235
      %v2237 = vrot.slane %v2236, 2
      %v2238 = vadd.f32 %v2236, %v2237
      %v2239 = vrot.slane %v2238, 1
      %v2240 = vadd.f32 %v2238, %v2239
      %v2241 = vadd.f32 %v2231, %v2233
      %v2242 = vrot.slane %v2241, 4
      %v2243 = vadd.f32 %v2241, %v2242
      %v2244 = vrot.slane %v2243, 2
      %v2245 = vadd.f32 %v2243, %v2244
      %v2246 = vrot.slane %v2245, 1
      %v2247 = vadd.f32 %v2245, %v2246
      %v2250 = vrot.slane %v2247, 7
      %v2251 = vsel %vm233, %v2240, %v2250
      %v2253 = vmul.f32 %v552, %v2251
      %v2254 = vadd.f32 %v2221, %v2253
      %2255 = vset.pattern.permute.xlu0 46
      %2256 = vperm.xlu0 %2255, %v391
      %v2257 = vpop.permute.xlu0 %2256
      %2259 = vset.pattern.permute.xlu0 46
      %2260 = vperm.xlu0 %2259, %v392
      %v2261 = vpop.permute.xlu0 %2260
      %v2263 = vmul.f32 %v2257, %v393
      %v2264 = vmul.f32 %v2257, %v394
      %v2265 = vmul.f32 %v2261, %v395
      %v2266 = vmul.f32 %v2261, %v396
      %v2267 = vadd.f32 %v2263, %v2265
      %v2268 = vrot.slane %v2267, 4
      %v2269 = vadd.f32 %v2267, %v2268
      %v2270 = vrot.slane %v2269, 2
      %v2271 = vadd.f32 %v2269, %v2270
      %v2272 = vrot.slane %v2271, 1
      %v2273 = vadd.f32 %v2271, %v2272
      %v2274 = vadd.f32 %v2264, %v2266
      %v2275 = vrot.slane %v2274, 4
      %v2276 = vadd.f32 %v2274, %v2275
      %v2277 = vrot.slane %v2276, 2
      %v2278 = vadd.f32 %v2276, %v2277
      %v2279 = vrot.slane %v2278, 1
      %v2280 = vadd.f32 %v2278, %v2279
      %2281 = vrot.lane.b32.xlu0 %v2273, 120
      %v2282 = vpop.permute.xlu0 %2281
      %2283 = vrot.lane.b32.xlu0 %v2280, 120
      %v2284 = vpop.permute.xlu0 %2283
      %v2285 = vsel %vm592, %v2282, %v2284
      %v2286 = vsel %vm592, %v2284, %v2282
      %v2289 = vrot.slane %v2286, 7
      %v2290 = vsel %vm233, %v2285, %v2289
      %v2292 = vmul.f32 %v587, %v2290
      %v2293 = vadd.f32 %v2254, %v2292
      %2294 = vset.pattern.permute.xlu0 47
      %2295 = vperm.xlu0 %2294, %v391
      %v2296 = vpop.permute.xlu0 %2295
      %2298 = vset.pattern.permute.xlu0 47
      %2299 = vperm.xlu0 %2298, %v392
      %v2300 = vpop.permute.xlu0 %2299
      %v2302 = vmul.f32 %v2296, %v393
      %v2303 = vmul.f32 %v2296, %v394
      %v2304 = vmul.f32 %v2300, %v395
      %v2305 = vmul.f32 %v2300, %v396
      %v2306 = vadd.f32 %v2302, %v2304
      %v2307 = vrot.slane %v2306, 4
      %v2308 = vadd.f32 %v2306, %v2307
      %v2309 = vrot.slane %v2308, 2
      %v2310 = vadd.f32 %v2308, %v2309
      %v2311 = vrot.slane %v2310, 1
      %v2312 = vadd.f32 %v2310, %v2311
      %v2313 = vadd.f32 %v2303, %v2305
      %v2314 = vrot.slane %v2313, 4
      %v2315 = vadd.f32 %v2313, %v2314
      %v2316 = vrot.slane %v2315, 2
      %v2317 = vadd.f32 %v2315, %v2316
      %v2318 = vrot.slane %v2317, 1
      %v2319 = vadd.f32 %v2317, %v2318
      %2320 = vrot.lane.b32.xlu0 %v2312, 112
      %v2321 = vpop.permute.xlu0 %2320
      %2322 = vrot.lane.b32.xlu0 %v2319, 112
      %v2323 = vpop.permute.xlu0 %2322
      %v2324 = vsel %vm634, %v2321, %v2323
      %v2325 = vsel %vm634, %v2323, %v2321
      %v2328 = vrot.slane %v2325, 7
      %v2329 = vsel %vm233, %v2324, %v2328
      %v2331 = vmul.f32 %v629, %v2329
      %v2332 = vadd.f32 %v2293, %v2331
      %2333 = vset.pattern.permute.xlu0 48
      %2334 = vperm.xlu0 %2333, %v391
      %v2335 = vpop.permute.xlu0 %2334
      %2337 = vset.pattern.permute.xlu0 48
      %2338 = vperm.xlu0 %2337, %v392
      %v2339 = vpop.permute.xlu0 %2338
      %v2341 = vmul.f32 %v2335, %v393
      %v2342 = vmul.f32 %v2335, %v394
      %v2343 = vmul.f32 %v2339, %v395
      %v2344 = vmul.f32 %v2339, %v396
      %v2345 = vadd.f32 %v2341, %v2343
      %v2346 = vrot.slane %v2345, 4
      %v2347 = vadd.f32 %v2345, %v2346
      %v2348 = vrot.slane %v2347, 2
      %v2349 = vadd.f32 %v2347, %v2348
      %v2350 = vrot.slane %v2349, 1
      %v2351 = vadd.f32 %v2349, %v2350
      %v2352 = vadd.f32 %v2342, %v2344
      %v2353 = vrot.slane %v2352, 4
      %v2354 = vadd.f32 %v2352, %v2353
      %v2355 = vrot.slane %v2354, 2
      %v2356 = vadd.f32 %v2354, %v2355
      %v2357 = vrot.slane %v2356, 1
      %v2358 = vadd.f32 %v2356, %v2357
      %2359 = vrot.lane.b32.xlu0 %v2351, 104
      %v2360 = vpop.permute.xlu0 %2359
      %2361 = vrot.lane.b32.xlu0 %v2358, 104
      %v2362 = vpop.permute.xlu0 %2361
      %v2363 = vsel %vm676, %v2360, %v2362
      %v2364 = vsel %vm676, %v2362, %v2360
      %v2367 = vrot.slane %v2364, 7
      %v2368 = vsel %vm233, %v2363, %v2367
      %v2370 = vmul.f32 %v671, %v2368
      %v2371 = vadd.f32 %v2332, %v2370
      %s2372 = scalar_lea.vmem %s1, 6
      %v2373 = vld [vmem:[%s2372] ss:$8 sm:$0x3]
      %v2375 = vperm.slane %v2371, 0
      %v2376 = vperm.slane %v2371, 1
      %2379 = vrot.lane.b32.xlu0 %v2375, 64
      %v2380 = vpop.permute.xlu0 %2379
      %2381 = vrot.lane.b32.xlu0 %v2376, 64
      %v2382 = vpop.permute.xlu0 %2381
      %v2383 = vsel %vm696, %v2380, %v2382
      %v2384 = vsel %vm696, %v2382, %v2380
      %v2387 = vrot.slane %v2383, 7
      %v2388 = vsel %vm233, %v2384, %v2387
      %v2390 = vmul.f32 %v2373, %v2388
      %v2391 = vadd.f32 %v2104, %v2390
      %v2392 = vsub.f32 0.0, %v2391
      %v2393 = vmul.f32 %v2392, 1.442695
      %v2394 = vpow.pop %v2393
      %v2395 = vadd.f32 %v2394, 1.0
      %v2396 = vrcp.pop %v2395
      %v2397 = vmul.f32 %v2395, %v2396
      %v2398 = vsub.f32 1.0, %v2397
      %v2399 = vmul.f32 %v2396, %v2398
      %v2400 = vadd.f32 %v2396, %v2399
      %vm2401 = vweird.f32 %v2395
      %vm2402 = vweird.f32 %v2396
      %vm2403 = vmor %vm2401, %vm2402
      %v2404 = vsel %vm2403, %v2396, %v2400
      %v2405 = vand.u32 2147483647, %v2395
      %vm2406 = vcmp.eq.f32.partialorder %v2405, 8.507059e+37
      %v2407 = vand.u32 %v2395, 2147483648
      %v2408 = vor.u32 1.1754944e-38, %v2407
      %v2409 = vsel %vm2406, %v2408, %v2404
      %v2410 = vld [vmem:[%s193] sm:$0xff]
      %v2411 = vld [vmem:[%s193 + $0x8] sm:$0xff]
      %v2412 = vld [vmem:[%s193 + $0x10] sm:$0xff]
      %v2413 = vld [vmem:[%s193 + $0x18] sm:$0xff]
      %v2414 = vadd.f32 %v2409, 1.0
      %v2416 = vperm.slane %v2414, 0
      %v2417 = vperm.slane %v2414, 1
      %v2420 = vmul.f32 %v2410, %v2416
      %v2421 = vmul.f32 %v2411, %v2417
      %v2422 = vmul.f32 %v2412, %v2416
      %v2423 = vmul.f32 %v2413, %v2417
      %2424 = vst [vmem:[%s198] sm:$0xff] %v2420
      %2425 = vst [vmem:[%s198 + $0x8] sm:$0xff] %v2421
      %2426 = vst [vmem:[%s198 + $0x10] sm:$0xff] %v2422
      %2427 = vst [vmem:[%s198 + $0x18] sm:$0xff] %v2423
      %p2428 = scmp.lt.s32.totalorder %s16, 1
      %s2429 = scalar_select %p2428, %s16, 1
      %s2430 = smul.addr %s2429, 4
      %s2431 = smul.addr %s2430, 8
      %s2432 = scalar_lea.vmem %s4, %s2431
      // Predicated region
      $region37: #{csam_spatial_module.1} parent=35 // pred_check
        %p2433 = pneg %p123
      $region38: #{csam_spatial_module.1} parent=35 // pred_check_branch
        %2435 = sbr.rel (%p2433) target = $region40
      $region39: #{csam_spatial_module.1} parent=35 // pred_region
        _
      $region40: #{csam_spatial_module.1} parent=35 // pred_fallthru
        _
    $region36: #{csam_spatial_module.1} parent=5 // pred_fallthru
      _
    %p2436 = scmp.le.s32.totalorder 2, %s11
    // Predicated region
    $region41: #{csam_spatial_module.1} parent=5 // pred_check
      %p2437 = pneg %p2436
    $region42: #{csam_spatial_module.1} parent=5 // pred_check_branch
      %2439 = sbr.rel (%p2437) target = $region44
    $region43: #{csam_spatial_module.1} parent=5 // pred_region
      %s2440 = ssub.s32 %s11, 2
      // Predicated region
      $region45: #{csam_spatial_module.1} parent=43 // pred_check
        %p2441 = pneg %p129
      $region46: #{csam_spatial_module.1} parent=43 // pred_check_branch
        %2443 = sbr.rel (%p2441) target = $region48
      $region47: #{csam_spatial_module.1} parent=43 // pred_region
        %p2444 = scmp.lt.s32.totalorder %s17, 1
        %s2445 = scalar_select %p2444, %s17, 1
        %s2446 = smul.addr %s2445, 4
        %s2447 = smul.addr %s2446, 8
        %s2448 = scalar_lea.vmem %s4, %s2447
      $region48: #{csam_spatial_module.1} parent=43 // pred_fallthru
        _
    $region44: #{csam_spatial_module.1} parent=5 // pred_fallthru
      _
  $region6: #{csam_spatial_module.1} parent=0 // loop_footer
    %s15 = sadd.s32 1, %s11
  $region7: #{csam_spatial_module.1} parent=0 // loop_footer_branch
    %10 = sbr.rel target = $region3
  $region8: #{csam_spatial_module.1} parent=0 // loop_exit
    _

</llo_original>
